<compile_context>
chip_gen: v6e
topology: v6e:2x2x1
jax: 0.10.0
libtpu: 0.0.40
codegen_flags: <defaults>
</compile_context>

<pallas_src>
import functools

import jax
import jax.numpy as jnp
from jax.experimental import pallas as pl
from jax.experimental.pallas import tpu as pltpu

# ---- model config (small synthetic XLM-RoBERTa) -----------------------------
HIDDEN = 32
HEADS = 2
HEAD_DIM = HIDDEN // HEADS
INTER = 64
LAYERS = 2
VOCAB = 100
MAX_POS = 64
NUM_LABELS = 5
CLS_PAD = 128          # lane-dense classifier output width (sliced back to NUM_LABELS)
LN_EPS = 1e-5
PAD_IDX = 1            # RoBERTa position padding_idx


# ---- fused encoder kernel ----------------------------------------------------
def _gelu(x):
    # TODO(synk): HF XLM-RoBERTa uses erf-GELU; tanh approximation is used here
    # (very close numerically, guaranteed to lower on Mosaic).
    return 0.5 * x * (1.0 + jnp.tanh(0.7978845608028654 * (x + 0.044715 * x * x * x)))


def _layernorm(h, g, b):
    mean = jnp.mean(h, axis=-1, keepdims=True)
    c = h - mean
    var = jnp.mean(c * c, axis=-1, keepdims=True)
    return c * jax.lax.rsqrt(var + LN_EPS) * g + b


def _encoder_kernel(emb_ref, bias_ref,
                    eg_ref, eb_ref,
                    wqkv_ref, bqkv_ref, wo_ref, bo_ref,
                    ln1g_ref, ln1b_ref,
                    w1_ref, b1_ref, w2_ref, b2_ref,
                    ln2g_ref, ln2b_ref,
                    clsw_ref, clsb_ref,
                    out_ref, *, B, S):
    """Whole forward pass for all tokens; every operand is resident in VMEM."""
    x = _layernorm(emb_ref[...], eg_ref[...], eb_ref[...])          # [B*S, H]
    bias = bias_ref[...]                                             # [B, S] additive mask
    scale = 1.0 / (HEAD_DIM ** 0.5)

    for l in range(LAYERS):                                          # static unroll (LAYERS=2)
        # --- fused QKV projection: one [M, H] x [H, 3H] matmul ---
        qkv = jnp.dot(x, wqkv_ref[l], preferred_element_type=jnp.float32) + bqkv_ref[l]

        # --- self-attention, head split via static slices (no transposes) ---
        ctx_rows = []
        for b in range(B):
            rows = slice(b * S, (b + 1) * S)
            bias_b = bias[b:b + 1, :]                                # [1, S] -> broadcast over queries
            heads = []
            for h in range(HEADS):
                c0 = h * HEAD_DIM
                q = qkv[rows, c0:c0 + HEAD_DIM]                      # [S, Dh]
                k = qkv[rows, HIDDEN + c0:HIDDEN + c0 + HEAD_DIM]    # [S, Dh]
                v = qkv[rows, 2 * HIDDEN + c0:2 * HIDDEN + c0 + HEAD_DIM]
                s = jnp.dot(q, k.T, preferred_element_type=jnp.float32) * scale + bias_b
                m = jnp.max(s, axis=-1, keepdims=True)
                p = jnp.exp(s - m)
                denom = jnp.sum(p, axis=-1, keepdims=True)
                p = p * pl.reciprocal(denom, approx=True)            # EUP reciprocal
                heads.append(jnp.dot(p, v, preferred_element_type=jnp.float32))
            ctx_rows.append(jnp.concatenate(heads, axis=-1))         # [S, H]
        ctx = jnp.concatenate(ctx_rows, axis=0)                      # [B*S, H]

        # --- attention output projection + residual + LN ---
        attn_out = jnp.dot(ctx, wo_ref[l], preferred_element_type=jnp.float32) + bo_ref[l]
        x = _layernorm(attn_out + x, ln1g_ref[l], ln1b_ref[l])

        # --- feed forward + residual + LN ---
        hmid = _gelu(jnp.dot(x, w1_ref[l], preferred_element_type=jnp.float32) + b1_ref[l])
        ffn = jnp.dot(hmid, w2_ref[l], preferred_element_type=jnp.float32) + b2_ref[l]
        x = _layernorm(ffn + x, ln2g_ref[l], ln2b_ref[l])

    # --- classifier (lane-dense padded to 128 output columns) ---
    # dropout(p=0.1) is the identity in eval mode.
    out_ref[...] = (jnp.dot(x, clsw_ref[...], preferred_element_type=jnp.float32)
                    + clsb_ref[...])


def encoder_forward(emb, mask_bias, params, B, S):
    M = B * S
    in_arrays = [
        emb, mask_bias,
        params["emb_ln_g"], params["emb_ln_b"],
        params["wqkv"], params["bqkv"], params["wo"], params["bo"],
        params["ln1_g"], params["ln1_b"],
        params["w1"], params["b1"], params["w2"], params["b2"],
        params["ln2_g"], params["ln2_b"],
        params["cls_w"], params["cls_b"],
    ]

    def full_spec(a):
        nd = a.ndim
        return pl.BlockSpec(a.shape, lambda i, nd=nd: (0,) * nd)

    return pl.pallas_call(
        functools.partial(_encoder_kernel, B=B, S=S),
        out_shape=jax.ShapeDtypeStruct((M, CLS_PAD), jnp.float32),
        grid=(1,),
        in_specs=[full_spec(a) for a in in_arrays],
        out_specs=pl.BlockSpec((M, CLS_PAD), lambda i: (0, 0)),
        compiler_params=pltpu.CompilerParams(dimension_semantics=("arbitrary",)),
    )(*in_arrays)


# ---- deterministic parameter init (packed for the fused kernel) --------------
def init_params(key):
    def dense(k, fi, fo):
        return jax.random.normal(k, (fi, fo), jnp.float32) * 0.02

    keys = jax.random.split(key, 3 + LAYERS + 1)
    params = {
        "word_emb": jax.random.normal(keys[0], (VOCAB, HIDDEN), jnp.float32) * 0.02,
        "pos_emb": jax.random.normal(keys[1], (MAX_POS, HIDDEN), jnp.float32) * 0.02,
        "type_emb": jax.random.normal(keys[2], (1, HIDDEN), jnp.float32) * 0.02,
        "emb_ln_g": jnp.ones((1, HIDDEN), jnp.float32),
        "emb_ln_b": jnp.zeros((1, HIDDEN), jnp.float32),
    }

    wqkv, wo, w1, w2 = [], [], [], []
    for l in range(LAYERS):
        kq, kk, kv, ko, k1, k2 = jax.random.split(keys[3 + l], 6)
        # fused QKV weight: concat along output dim -> [H, 3H]
        wqkv.append(jnp.concatenate(
            [dense(kq, HIDDEN, HIDDEN), dense(kk, HIDDEN, HIDDEN), dense(kv, HIDDEN, HIDDEN)],
            axis=1))
        wo.append(dense(ko, HIDDEN, HIDDEN))
        w1.append(dense(k1, HIDDEN, INTER))
        w2.append(dense(k2, INTER, HIDDEN))

    params.update({
        "wqkv": jnp.stack(wqkv),                                   # [L, H, 3H]
        "bqkv": jnp.zeros((LAYERS, 1, 3 * HIDDEN), jnp.float32),
        "wo": jnp.stack(wo),                                       # [L, H, H]
        "bo": jnp.zeros((LAYERS, 1, HIDDEN), jnp.float32),
        "ln1_g": jnp.ones((LAYERS, 1, HIDDEN), jnp.float32),
        "ln1_b": jnp.zeros((LAYERS, 1, HIDDEN), jnp.float32),
        "w1": jnp.stack(w1),                                       # [L, H, INTER]
        "b1": jnp.zeros((LAYERS, 1, INTER), jnp.float32),
        "w2": jnp.stack(w2),                                       # [L, INTER, H]
        "b2": jnp.zeros((LAYERS, 1, HIDDEN), jnp.float32),
        "ln2_g": jnp.ones((LAYERS, 1, HIDDEN), jnp.float32),
        "ln2_b": jnp.zeros((LAYERS, 1, HIDDEN), jnp.float32),
    })

    # classifier padded to a lane-dense 128-wide output; only first NUM_LABELS cols real
    cls_w = dense(keys[-1], HIDDEN, NUM_LABELS)
    params["cls_w"] = jnp.zeros((HIDDEN, CLS_PAD), jnp.float32).at[:, :NUM_LABELS].set(cls_w)
    params["cls_b"] = jnp.zeros((1, CLS_PAD), jnp.float32)
    return params


# ---- forward pass ------------------------------------------------------------
@jax.jit
def x_disaster_ie_forward(params, input_ids, attention_mask):
    B, S = input_ids.shape

    # RoBERTa-style position ids: cumsum of the mask, offset by padding_idx.
    position_ids = (jnp.cumsum(attention_mask, axis=1) * attention_mask + PAD_IDX).astype(jnp.int32)

    # Embedding gathers are plain-JAX glue; everything downstream is one Pallas kernel.
    emb = (params["word_emb"][input_ids]
           + params["pos_emb"][position_ids]
           + params["type_emb"][0][None, None, :])                  # [B, S, H]
    emb = emb.reshape(B * S, HIDDEN)

    # Additive key-mask bias (-1e9 on padded positions). Padded *query* rows still
    # produce (uniform-attention) logits; downstream consumers must mask them.
    mask_bias = (1.0 - attention_mask.astype(jnp.float32)) * -1e9   # [B, S]

    logits_padded = encoder_forward(emb, mask_bias, params, B, S)   # [B*S, 128]
    return logits_padded[:, :NUM_LABELS].reshape(B, S, NUM_LABELS)


# ---- main --------------------------------------------------------------------
if __name__ == "__main__":
    key = jax.random.PRNGKey(0)
    kp, kids = jax.random.split(key)
    params = init_params(kp)

    B, S = 2, 8
    input_ids = jax.random.randint(kids, (B, S), 0, VOCAB, dtype=jnp.int32)
    attention_mask = jnp.ones((B, S), jnp.int32).at[1, -2:].set(0)   # pad last 2 tokens of seq 1

    logits = x_disaster_ie_forward(params, input_ids, attention_mask)
    jax.block_until_ready(logits)
    assert logits.shape == (B, S, NUM_LABELS)
    assert bool(jnp.all(jnp.isfinite(logits)))
    print("KERNEL_OK")
</pallas_src>

<mosaic_0001>
module attributes {stable_mosaic.version = 11 : i64} {
  func.func @_encoder_kernel(%arg0: i32, %arg1: memref<16x32xf32, #tpu.memory_space<vmem>>, %arg2: memref<2x8xf32, #tpu.memory_space<vmem>>, %arg3: memref<1x32xf32, #tpu.memory_space<vmem>>, %arg4: memref<1x32xf32, #tpu.memory_space<vmem>>, %arg5: memref<2x32x96xf32, #tpu.memory_space<vmem>>, %arg6: memref<2x1x96xf32, #tpu.memory_space<vmem>>, %arg7: memref<2x32x32xf32, #tpu.memory_space<vmem>>, %arg8: memref<2x1x32xf32, #tpu.memory_space<vmem>>, %arg9: memref<2x1x32xf32, #tpu.memory_space<vmem>>, %arg10: memref<2x1x32xf32, #tpu.memory_space<vmem>>, %arg11: memref<2x32x64xf32, #tpu.memory_space<vmem>>, %arg12: memref<2x1x64xf32, #tpu.memory_space<vmem>>, %arg13: memref<2x64x32xf32, #tpu.memory_space<vmem>>, %arg14: memref<2x1x32xf32, #tpu.memory_space<vmem>>, %arg15: memref<2x1x32xf32, #tpu.memory_space<vmem>>, %arg16: memref<2x1x32xf32, #tpu.memory_space<vmem>>, %arg17: memref<32x128xf32, #tpu.memory_space<vmem>>, %arg18: memref<1x128xf32, #tpu.memory_space<vmem>>, %arg19: memref<16x128xf32, #tpu.memory_space<vmem>>) attributes {dimension_semantics = [#tpu.dimension_semantics<arbitrary>], iteration_bounds = array<i64: 1>, scalar_prefetch = 0 : i64, scratch_operands = 0 : i64, tpu.core_type = #tpu.core_type<tc>, window_params = [{pipeline_mode = #tpu.pipeline_mode<synchronous>, transform_indices = @transform_0, window_bounds = array<i64: 16, 32>}, {pipeline_mode = #tpu.pipeline_mode<synchronous>, transform_indices = @transform_1, window_bounds = array<i64: 2, 8>}, {pipeline_mode = #tpu.pipeline_mode<synchronous>, transform_indices = @transform_2, window_bounds = array<i64: 1, 32>}, {pipeline_mode = #tpu.pipeline_mode<synchronous>, transform_indices = @transform_3, window_bounds = array<i64: 1, 32>}, {pipeline_mode = #tpu.pipeline_mode<synchronous>, transform_indices = @transform_4, window_bounds = array<i64: 2, 32, 96>}, {pipeline_mode = #tpu.pipeline_mode<synchronous>, transform_indices = @transform_5, window_bounds = array<i64: 2, 1, 96>}, {pipeline_mode = #tpu.pipeline_mode<synchronous>, transform_indices = @transform_6, window_bounds = array<i64: 2, 32, 32>}, {pipeline_mode = #tpu.pipeline_mode<synchronous>, transform_indices = @transform_7, window_bounds = array<i64: 2, 1, 32>}, {pipeline_mode = #tpu.pipeline_mode<synchronous>, transform_indices = @transform_8, window_bounds = array<i64: 2, 1, 32>}, {pipeline_mode = #tpu.pipeline_mode<synchronous>, transform_indices = @transform_9, window_bounds = array<i64: 2, 1, 32>}, {pipeline_mode = #tpu.pipeline_mode<synchronous>, transform_indices = @transform_10, window_bounds = array<i64: 2, 32, 64>}, {pipeline_mode = #tpu.pipeline_mode<synchronous>, transform_indices = @transform_11, window_bounds = array<i64: 2, 1, 64>}, {pipeline_mode = #tpu.pipeline_mode<synchronous>, transform_indices = @transform_12, window_bounds = array<i64: 2, 64, 32>}, {pipeline_mode = #tpu.pipeline_mode<synchronous>, transform_indices = @transform_13, window_bounds = array<i64: 2, 1, 32>}, {pipeline_mode = #tpu.pipeline_mode<synchronous>, transform_indices = @transform_14, window_bounds = array<i64: 2, 1, 32>}, {pipeline_mode = #tpu.pipeline_mode<synchronous>, transform_indices = @transform_15, window_bounds = array<i64: 2, 1, 32>}, {pipeline_mode = #tpu.pipeline_mode<synchronous>, transform_indices = @transform_16, window_bounds = array<i64: 32, 128>}, {pipeline_mode = #tpu.pipeline_mode<synchronous>, transform_indices = @transform_17, window_bounds = array<i64: 1, 128>}, {pipeline_mode = #tpu.pipeline_mode<synchronous>, transform_indices = @transform_18, window_bounds = array<i64: 16, 128>}]} {
    %c0 = arith.constant 0 : index
    %c0_0 = arith.constant 0 : index
    %0 = vector.load %arg1[%c0, %c0_0] : memref<16x32xf32, #tpu.memory_space<vmem>>, vector<16x32xf32>
    %c0_1 = arith.constant 0 : index
    %c0_2 = arith.constant 0 : index
    %1 = vector.load %arg3[%c0_1, %c0_2] : memref<1x32xf32, #tpu.memory_space<vmem>>, vector<1x32xf32>
    %c0_3 = arith.constant 0 : index
    %c0_4 = arith.constant 0 : index
    %2 = vector.load %arg4[%c0_3, %c0_4] : memref<1x32xf32, #tpu.memory_space<vmem>>, vector<1x32xf32>
    %cst = arith.constant dense<0.000000e+00> : vector<16xf32>
    %3 = vector.multi_reduction <add>, %0, %cst [1] : vector<16x32xf32> to vector<16xf32>
    %4 = vector.shape_cast %3 : vector<16xf32> to vector<16x1xf32>
    %cst_5 = arith.constant 3.200000e+01 : f32
    %5 = vector.broadcast %cst_5 : f32 to vector<16x1xf32>
    %6 = arith.divf %4, %5 : vector<16x1xf32>
    %7 = vector.broadcast %6 : vector<16x1xf32> to vector<16x32xf32>
    %8 = arith.subf %0, %7 : vector<16x32xf32>
    %9 = arith.mulf %8, %8 : vector<16x32xf32>
    %cst_6 = arith.constant dense<0.000000e+00> : vector<16xf32>
    %10 = vector.multi_reduction <add>, %9, %cst_6 [1] : vector<16x32xf32> to vector<16xf32>
    %11 = vector.shape_cast %10 : vector<16xf32> to vector<16x1xf32>
    %cst_7 = arith.constant 3.200000e+01 : f32
    %12 = vector.broadcast %cst_7 : f32 to vector<16x1xf32>
    %13 = arith.divf %11, %12 : vector<16x1xf32>
    %cst_8 = arith.constant 9.99999974E-6 : f32
    %14 = vector.broadcast %cst_8 : f32 to vector<16x1xf32>
    %15 = arith.addf %13, %14 : vector<16x1xf32>
    %16 = math.rsqrt %15 : vector<16x1xf32>
    %17 = vector.broadcast %16 : vector<16x1xf32> to vector<16x32xf32>
    %18 = arith.mulf %8, %17 : vector<16x32xf32>
    %19 = vector.broadcast %1 : vector<1x32xf32> to vector<16x32xf32>
    %20 = arith.mulf %18, %19 : vector<16x32xf32>
    %21 = vector.broadcast %2 : vector<1x32xf32> to vector<16x32xf32>
    %22 = arith.addf %20, %21 : vector<16x32xf32>
    %c0_9 = arith.constant 0 : index
    %c0_10 = arith.constant 0 : index
    %23 = vector.load %arg2[%c0_9, %c0_10] : memref<2x8xf32, #tpu.memory_space<vmem>>, vector<2x8xf32>
    %c0_11 = arith.constant 0 : index
    %c0_12 = arith.constant 0 : index
    %c0_13 = arith.constant 0 : index
    %24 = vector.load %arg5[%c0_11, %c0_12, %c0_13] : memref<2x32x96xf32, #tpu.memory_space<vmem>>, vector<1x32x96xf32>
    %25 = vector.shape_cast %24 : vector<1x32x96xf32> to vector<32x96xf32>
    %cst_14 = arith.constant dense<0.000000e+00> : vector<16x96xf32>
    %26 = tpu.matmul %22, %25, %cst_14 {dimension_numbers = #tpu.dot_dimension_numbers<[1], [0], [0], [1], [0, 0, 1, 1], [], []>} : vector<16x32xf32>, vector<32x96xf32>, vector<16x96xf32> -> vector<16x96xf32>
    %c0_15 = arith.constant 0 : index
    %c0_16 = arith.constant 0 : index
    %c0_17 = arith.constant 0 : index
    %27 = vector.load %arg6[%c0_15, %c0_16, %c0_17] : memref<2x1x96xf32, #tpu.memory_space<vmem>>, vector<1x1x96xf32>
    %28 = vector.shape_cast %27 : vector<1x1x96xf32> to vector<1x96xf32>
    %29 = vector.broadcast %28 : vector<1x96xf32> to vector<16x96xf32>
    %30 = arith.addf %26, %29 : vector<16x96xf32>
    %31 = vector.extract_strided_slice %23 {offsets = [0, 0], sizes = [1, 8], strides = [1, 1]} : vector<2x8xf32> to vector<1x8xf32>
    %32 = vector.extract_strided_slice %30 {offsets = [0, 0], sizes = [8, 16], strides = [1, 1]} : vector<16x96xf32> to vector<8x16xf32>
    %33 = vector.extract_strided_slice %30 {offsets = [0, 32], sizes = [8, 16], strides = [1, 1]} : vector<16x96xf32> to vector<8x16xf32>
    %34 = vector.extract_strided_slice %30 {offsets = [0, 64], sizes = [8, 16], strides = [1, 1]} : vector<16x96xf32> to vector<8x16xf32>
    %35 = tpu.transpose %33, [1, 0] : vector<8x16xf32> -> vector<16x8xf32>
    %cst_18 = arith.constant dense<0.000000e+00> : vector<8x8xf32>
    %36 = tpu.matmul %32, %35, %cst_18 {dimension_numbers = #tpu.dot_dimension_numbers<[1], [0], [0], [1], [0, 0, 1, 1], [], []>} : vector<8x16xf32>, vector<16x8xf32>, vector<8x8xf32> -> vector<8x8xf32>
    %cst_19 = arith.constant 2.500000e-01 : f32
    %37 = vector.broadcast %cst_19 : f32 to vector<8x8xf32>
    %38 = arith.mulf %36, %37 : vector<8x8xf32>
    %39 = vector.broadcast %31 : vector<1x8xf32> to vector<8x8xf32>
    %40 = arith.addf %38, %39 : vector<8x8xf32>
    %cst_20 = arith.constant dense<0xFF800000> : vector<8xf32>
    %41 = vector.multi_reduction <maximumf>, %40, %cst_20 [1] : vector<8x8xf32> to vector<8xf32>
    %42 = vector.shape_cast %41 : vector<8xf32> to vector<8x1xf32>
    %43 = vector.broadcast %42 : vector<8x1xf32> to vector<8x8xf32>
    %44 = arith.subf %40, %43 : vector<8x8xf32>
    %45 = math.exp %44 : vector<8x8xf32>
    %cst_21 = arith.constant dense<0.000000e+00> : vector<8xf32>
    %46 = vector.multi_reduction <add>, %45, %cst_21 [1] : vector<8x8xf32> to vector<8xf32>
    %47 = vector.shape_cast %46 : vector<8xf32> to vector<8x1xf32>
    %48 = tpu.reciprocal %47 {approx = true} : vector<8x1xf32> -> vector<8x1xf32>
    %49 = vector.broadcast %48 : vector<8x1xf32> to vector<8x8xf32>
    %50 = arith.mulf %45, %49 : vector<8x8xf32>
    %cst_22 = arith.constant dense<0.000000e+00> : vector<8x16xf32>
    %51 = tpu.matmul %50, %34, %cst_22 {dimension_numbers = #tpu.dot_dimension_numbers<[1], [0], [0], [1], [0, 0, 1, 1], [], []>} : vector<8x8xf32>, vector<8x16xf32>, vector<8x16xf32> -> vector<8x16xf32>
    %52 = vector.extract_strided_slice %30 {offsets = [0, 16], sizes = [8, 16], strides = [1, 1]} : vector<16x96xf32> to vector<8x16xf32>
    %53 = vector.extract_strided_slice %30 {offsets = [0, 48], sizes = [8, 16], strides = [1, 1]} : vector<16x96xf32> to vector<8x16xf32>
    %54 = vector.extract_strided_slice %30 {offsets = [0, 80], sizes = [8, 16], strides = [1, 1]} : vector<16x96xf32> to vector<8x16xf32>
    %55 = tpu.transpose %53, [1, 0] : vector<8x16xf32> -> vector<16x8xf32>
    %cst_23 = arith.constant dense<0.000000e+00> : vector<8x8xf32>
    %56 = tpu.matmul %52, %55, %cst_23 {dimension_numbers = #tpu.dot_dimension_numbers<[1], [0], [0], [1], [0, 0, 1, 1], [], []>} : vector<8x16xf32>, vector<16x8xf32>, vector<8x8xf32> -> vector<8x8xf32>
    %cst_24 = arith.constant 2.500000e-01 : f32
    %57 = vector.broadcast %cst_24 : f32 to vector<8x8xf32>
    %58 = arith.mulf %56, %57 : vector<8x8xf32>
    %59 = vector.broadcast %31 : vector<1x8xf32> to vector<8x8xf32>
    %60 = arith.addf %58, %59 : vector<8x8xf32>
    %cst_25 = arith.constant dense<0xFF800000> : vector<8xf32>
    %61 = vector.multi_reduction <maximumf>, %60, %cst_25 [1] : vector<8x8xf32> to vector<8xf32>
    %62 = vector.shape_cast %61 : vector<8xf32> to vector<8x1xf32>
    %63 = vector.broadcast %62 : vector<8x1xf32> to vector<8x8xf32>
    %64 = arith.subf %60, %63 : vector<8x8xf32>
    %65 = math.exp %64 : vector<8x8xf32>
    %cst_26 = arith.constant dense<0.000000e+00> : vector<8xf32>
    %66 = vector.multi_reduction <add>, %65, %cst_26 [1] : vector<8x8xf32> to vector<8xf32>
    %67 = vector.shape_cast %66 : vector<8xf32> to vector<8x1xf32>
    %68 = tpu.reciprocal %67 {approx = true} : vector<8x1xf32> -> vector<8x1xf32>
    %69 = vector.broadcast %68 : vector<8x1xf32> to vector<8x8xf32>
    %70 = arith.mulf %65, %69 : vector<8x8xf32>
    %cst_27 = arith.constant dense<0.000000e+00> : vector<8x16xf32>
    %71 = tpu.matmul %70, %54, %cst_27 {dimension_numbers = #tpu.dot_dimension_numbers<[1], [0], [0], [1], [0, 0, 1, 1], [], []>} : vector<8x8xf32>, vector<8x16xf32>, vector<8x16xf32> -> vector<8x16xf32>
    %72 = tpu.concatenate %51, %71 in 1 : vector<8x16xf32>, vector<8x16xf32> -> vector<8x32xf32>
    %73 = vector.extract_strided_slice %23 {offsets = [1, 0], sizes = [1, 8], strides = [1, 1]} : vector<2x8xf32> to vector<1x8xf32>
    %74 = vector.extract_strided_slice %30 {offsets = [8, 0], sizes = [8, 16], strides = [1, 1]} : vector<16x96xf32> to vector<8x16xf32>
    %75 = vector.extract_strided_slice %30 {offsets = [8, 32], sizes = [8, 16], strides = [1, 1]} : vector<16x96xf32> to vector<8x16xf32>
    %76 = vector.extract_strided_slice %30 {offsets = [8, 64], sizes = [8, 16], strides = [1, 1]} : vector<16x96xf32> to vector<8x16xf32>
    %77 = tpu.transpose %75, [1, 0] : vector<8x16xf32> -> vector<16x8xf32>
    %cst_28 = arith.constant dense<0.000000e+00> : vector<8x8xf32>
    %78 = tpu.matmul %74, %77, %cst_28 {dimension_numbers = #tpu.dot_dimension_numbers<[1], [0], [0], [1], [0, 0, 1, 1], [], []>} : vector<8x16xf32>, vector<16x8xf32>, vector<8x8xf32> -> vector<8x8xf32>
    %cst_29 = arith.constant 2.500000e-01 : f32
    %79 = vector.broadcast %cst_29 : f32 to vector<8x8xf32>
    %80 = arith.mulf %78, %79 : vector<8x8xf32>
    %81 = vector.broadcast %73 : vector<1x8xf32> to vector<8x8xf32>
    %82 = arith.addf %80, %81 : vector<8x8xf32>
    %cst_30 = arith.constant dense<0xFF800000> : vector<8xf32>
    %83 = vector.multi_reduction <maximumf>, %82, %cst_30 [1] : vector<8x8xf32> to vector<8xf32>
    %84 = vector.shape_cast %83 : vector<8xf32> to vector<8x1xf32>
    %85 = vector.broadcast %84 : vector<8x1xf32> to vector<8x8xf32>
    %86 = arith.subf %82, %85 : vector<8x8xf32>
    %87 = math.exp %86 : vector<8x8xf32>
    %cst_31 = arith.constant dense<0.000000e+00> : vector<8xf32>
    %88 = vector.multi_reduction <add>, %87, %cst_31 [1] : vector<8x8xf32> to vector<8xf32>
    %89 = vector.shape_cast %88 : vector<8xf32> to vector<8x1xf32>
    %90 = tpu.reciprocal %89 {approx = true} : vector<8x1xf32> -> vector<8x1xf32>
    %91 = vector.broadcast %90 : vector<8x1xf32> to vector<8x8xf32>
    %92 = arith.mulf %87, %91 : vector<8x8xf32>
    %cst_32 = arith.constant dense<0.000000e+00> : vector<8x16xf32>
    %93 = tpu.matmul %92, %76, %cst_32 {dimension_numbers = #tpu.dot_dimension_numbers<[1], [0], [0], [1], [0, 0, 1, 1], [], []>} : vector<8x8xf32>, vector<8x16xf32>, vector<8x16xf32> -> vector<8x16xf32>
    %94 = vector.extract_strided_slice %30 {offsets = [8, 16], sizes = [8, 16], strides = [1, 1]} : vector<16x96xf32> to vector<8x16xf32>
    %95 = vector.extract_strided_slice %30 {offsets = [8, 48], sizes = [8, 16], strides = [1, 1]} : vector<16x96xf32> to vector<8x16xf32>
    %96 = vector.extract_strided_slice %30 {offsets = [8, 80], sizes = [8, 16], strides = [1, 1]} : vector<16x96xf32> to vector<8x16xf32>
    %97 = tpu.transpose %95, [1, 0] : vector<8x16xf32> -> vector<16x8xf32>
    %cst_33 = arith.constant dense<0.000000e+00> : vector<8x8xf32>
    %98 = tpu.matmul %94, %97, %cst_33 {dimension_numbers = #tpu.dot_dimension_numbers<[1], [0], [0], [1], [0, 0, 1, 1], [], []>} : vector<8x16xf32>, vector<16x8xf32>, vector<8x8xf32> -> vector<8x8xf32>
    %cst_34 = arith.constant 2.500000e-01 : f32
    %99 = vector.broadcast %cst_34 : f32 to vector<8x8xf32>
    %100 = arith.mulf %98, %99 : vector<8x8xf32>
    %101 = vector.broadcast %73 : vector<1x8xf32> to vector<8x8xf32>
    %102 = arith.addf %100, %101 : vector<8x8xf32>
    %cst_35 = arith.constant dense<0xFF800000> : vector<8xf32>
    %103 = vector.multi_reduction <maximumf>, %102, %cst_35 [1] : vector<8x8xf32> to vector<8xf32>
    %104 = vector.shape_cast %103 : vector<8xf32> to vector<8x1xf32>
    %105 = vector.broadcast %104 : vector<8x1xf32> to vector<8x8xf32>
    %106 = arith.subf %102, %105 : vector<8x8xf32>
    %107 = math.exp %106 : vector<8x8xf32>
    %cst_36 = arith.constant dense<0.000000e+00> : vector<8xf32>
    %108 = vector.multi_reduction <add>, %107, %cst_36 [1] : vector<8x8xf32> to vector<8xf32>
    %109 = vector.shape_cast %108 : vector<8xf32> to vector<8x1xf32>
    %110 = tpu.reciprocal %109 {approx = true} : vector<8x1xf32> -> vector<8x1xf32>
    %111 = vector.broadcast %110 : vector<8x1xf32> to vector<8x8xf32>
    %112 = arith.mulf %107, %111 : vector<8x8xf32>
    %cst_37 = arith.constant dense<0.000000e+00> : vector<8x16xf32>
    %113 = tpu.matmul %112, %96, %cst_37 {dimension_numbers = #tpu.dot_dimension_numbers<[1], [0], [0], [1], [0, 0, 1, 1], [], []>} : vector<8x8xf32>, vector<8x16xf32>, vector<8x16xf32> -> vector<8x16xf32>
    %114 = tpu.concatenate %93, %113 in 1 : vector<8x16xf32>, vector<8x16xf32> -> vector<8x32xf32>
    %115 = tpu.concatenate %72, %114 in 0 : vector<8x32xf32>, vector<8x32xf32> -> vector<16x32xf32>
    %c0_38 = arith.constant 0 : index
    %c0_39 = arith.constant 0 : index
    %c0_40 = arith.constant 0 : index
    %116 = vector.load %arg7[%c0_38, %c0_39, %c0_40] : memref<2x32x32xf32, #tpu.memory_space<vmem>>, vector<1x32x32xf32>
    %117 = vector.shape_cast %116 : vector<1x32x32xf32> to vector<32x32xf32>
    %cst_41 = arith.constant dense<0.000000e+00> : vector<16x32xf32>
    %118 = tpu.matmul %115, %117, %cst_41 {dimension_numbers = #tpu.dot_dimension_numbers<[1], [0], [0], [1], [0, 0, 1, 1], [], []>} : vector<16x32xf32>, vector<32x32xf32>, vector<16x32xf32> -> vector<16x32xf32>
    %c0_42 = arith.constant 0 : index
    %c0_43 = arith.constant 0 : index
    %c0_44 = arith.constant 0 : index
    %119 = vector.load %arg8[%c0_42, %c0_43, %c0_44] : memref<2x1x32xf32, #tpu.memory_space<vmem>>, vector<1x1x32xf32>
    %120 = vector.shape_cast %119 : vector<1x1x32xf32> to vector<1x32xf32>
    %121 = vector.broadcast %120 : vector<1x32xf32> to vector<16x32xf32>
    %122 = arith.addf %118, %121 : vector<16x32xf32>
    %123 = arith.addf %122, %22 : vector<16x32xf32>
    %c0_45 = arith.constant 0 : index
    %c0_46 = arith.constant 0 : index
    %c0_47 = arith.constant 0 : index
    %124 = vector.load %arg9[%c0_45, %c0_46, %c0_47] : memref<2x1x32xf32, #tpu.memory_space<vmem>>, vector<1x1x32xf32>
    %125 = vector.shape_cast %124 : vector<1x1x32xf32> to vector<1x32xf32>
    %c0_48 = arith.constant 0 : index
    %c0_49 = arith.constant 0 : index
    %c0_50 = arith.constant 0 : index
    %126 = vector.load %arg10[%c0_48, %c0_49, %c0_50] : memref<2x1x32xf32, #tpu.memory_space<vmem>>, vector<1x1x32xf32>
    %127 = vector.shape_cast %126 : vector<1x1x32xf32> to vector<1x32xf32>
    %cst_51 = arith.constant dense<0.000000e+00> : vector<16xf32>
    %128 = vector.multi_reduction <add>, %123, %cst_51 [1] : vector<16x32xf32> to vector<16xf32>
    %129 = vector.shape_cast %128 : vector<16xf32> to vector<16x1xf32>
    %cst_52 = arith.constant 3.200000e+01 : f32
    %130 = vector.broadcast %cst_52 : f32 to vector<16x1xf32>
    %131 = arith.divf %129, %130 : vector<16x1xf32>
    %132 = vector.broadcast %131 : vector<16x1xf32> to vector<16x32xf32>
    %133 = arith.subf %123, %132 : vector<16x32xf32>
    %134 = arith.mulf %133, %133 : vector<16x32xf32>
    %cst_53 = arith.constant dense<0.000000e+00> : vector<16xf32>
    %135 = vector.multi_reduction <add>, %134, %cst_53 [1] : vector<16x32xf32> to vector<16xf32>
    %136 = vector.shape_cast %135 : vector<16xf32> to vector<16x1xf32>
    %cst_54 = arith.constant 3.200000e+01 : f32
    %137 = vector.broadcast %cst_54 : f32 to vector<16x1xf32>
    %138 = arith.divf %136, %137 : vector<16x1xf32>
    %cst_55 = arith.constant 9.99999974E-6 : f32
    %139 = vector.broadcast %cst_55 : f32 to vector<16x1xf32>
    %140 = arith.addf %138, %139 : vector<16x1xf32>
    %141 = math.rsqrt %140 : vector<16x1xf32>
    %142 = vector.broadcast %141 : vector<16x1xf32> to vector<16x32xf32>
    %143 = arith.mulf %133, %142 : vector<16x32xf32>
    %144 = vector.broadcast %125 : vector<1x32xf32> to vector<16x32xf32>
    %145 = arith.mulf %143, %144 : vector<16x32xf32>
    %146 = vector.broadcast %127 : vector<1x32xf32> to vector<16x32xf32>
    %147 = arith.addf %145, %146 : vector<16x32xf32>
    %c0_56 = arith.constant 0 : index
    %c0_57 = arith.constant 0 : index
    %c0_58 = arith.constant 0 : index
    %148 = vector.load %arg11[%c0_56, %c0_57, %c0_58] : memref<2x32x64xf32, #tpu.memory_space<vmem>>, vector<1x32x64xf32>
    %149 = vector.shape_cast %148 : vector<1x32x64xf32> to vector<32x64xf32>
    %cst_59 = arith.constant dense<0.000000e+00> : vector<16x64xf32>
    %150 = tpu.matmul %147, %149, %cst_59 {dimension_numbers = #tpu.dot_dimension_numbers<[1], [0], [0], [1], [0, 0, 1, 1], [], []>} : vector<16x32xf32>, vector<32x64xf32>, vector<16x64xf32> -> vector<16x64xf32>
    %c0_60 = arith.constant 0 : index
    %c0_61 = arith.constant 0 : index
    %c0_62 = arith.constant 0 : index
    %151 = vector.load %arg12[%c0_60, %c0_61, %c0_62] : memref<2x1x64xf32, #tpu.memory_space<vmem>>, vector<1x1x64xf32>
    %152 = vector.shape_cast %151 : vector<1x1x64xf32> to vector<1x64xf32>
    %153 = vector.broadcast %152 : vector<1x64xf32> to vector<16x64xf32>
    %154 = arith.addf %150, %153 : vector<16x64xf32>
    %cst_63 = arith.constant 5.000000e-01 : f32
    %155 = vector.broadcast %cst_63 : f32 to vector<16x64xf32>
    %156 = arith.mulf %155, %154 : vector<16x64xf32>
    %cst_64 = arith.constant 4.471500e-02 : f32
    %157 = vector.broadcast %cst_64 : f32 to vector<16x64xf32>
    %158 = arith.mulf %157, %154 : vector<16x64xf32>
    %159 = arith.mulf %158, %154 : vector<16x64xf32>
    %160 = arith.mulf %159, %154 : vector<16x64xf32>
    %161 = arith.addf %154, %160 : vector<16x64xf32>
    %cst_65 = arith.constant 0.797884583 : f32
    %162 = vector.broadcast %cst_65 : f32 to vector<16x64xf32>
    %163 = arith.mulf %162, %161 : vector<16x64xf32>
    %164 = math.tanh %163 : vector<16x64xf32>
    %cst_66 = arith.constant 1.000000e+00 : f32
    %165 = vector.broadcast %cst_66 : f32 to vector<16x64xf32>
    %166 = arith.addf %165, %164 : vector<16x64xf32>
    %167 = arith.mulf %156, %166 : vector<16x64xf32>
    %c0_67 = arith.constant 0 : index
    %c0_68 = arith.constant 0 : index
    %c0_69 = arith.constant 0 : index
    %168 = vector.load %arg13[%c0_67, %c0_68, %c0_69] : memref<2x64x32xf32, #tpu.memory_space<vmem>>, vector<1x64x32xf32>
    %169 = vector.shape_cast %168 : vector<1x64x32xf32> to vector<64x32xf32>
    %cst_70 = arith.constant dense<0.000000e+00> : vector<16x32xf32>
    %170 = tpu.matmul %167, %169, %cst_70 {dimension_numbers = #tpu.dot_dimension_numbers<[1], [0], [0], [1], [0, 0, 1, 1], [], []>} : vector<16x64xf32>, vector<64x32xf32>, vector<16x32xf32> -> vector<16x32xf32>
    %c0_71 = arith.constant 0 : index
    %c0_72 = arith.constant 0 : index
    %c0_73 = arith.constant 0 : index
    %171 = vector.load %arg14[%c0_71, %c0_72, %c0_73] : memref<2x1x32xf32, #tpu.memory_space<vmem>>, vector<1x1x32xf32>
    %172 = vector.shape_cast %171 : vector<1x1x32xf32> to vector<1x32xf32>
    %173 = vector.broadcast %172 : vector<1x32xf32> to vector<16x32xf32>
    %174 = arith.addf %170, %173 : vector<16x32xf32>
    %175 = arith.addf %174, %147 : vector<16x32xf32>
    %c0_74 = arith.constant 0 : index
    %c0_75 = arith.constant 0 : index
    %c0_76 = arith.constant 0 : index
    %176 = vector.load %arg15[%c0_74, %c0_75, %c0_76] : memref<2x1x32xf32, #tpu.memory_space<vmem>>, vector<1x1x32xf32>
    %177 = vector.shape_cast %176 : vector<1x1x32xf32> to vector<1x32xf32>
    %c0_77 = arith.constant 0 : index
    %c0_78 = arith.constant 0 : index
    %c0_79 = arith.constant 0 : index
    %178 = vector.load %arg16[%c0_77, %c0_78, %c0_79] : memref<2x1x32xf32, #tpu.memory_space<vmem>>, vector<1x1x32xf32>
    %179 = vector.shape_cast %178 : vector<1x1x32xf32> to vector<1x32xf32>
    %cst_80 = arith.constant dense<0.000000e+00> : vector<16xf32>
    %180 = vector.multi_reduction <add>, %175, %cst_80 [1] : vector<16x32xf32> to vector<16xf32>
    %181 = vector.shape_cast %180 : vector<16xf32> to vector<16x1xf32>
    %cst_81 = arith.constant 3.200000e+01 : f32
    %182 = vector.broadcast %cst_81 : f32 to vector<16x1xf32>
    %183 = arith.divf %181, %182 : vector<16x1xf32>
    %184 = vector.broadcast %183 : vector<16x1xf32> to vector<16x32xf32>
    %185 = arith.subf %175, %184 : vector<16x32xf32>
    %186 = arith.mulf %185, %185 : vector<16x32xf32>
    %cst_82 = arith.constant dense<0.000000e+00> : vector<16xf32>
    %187 = vector.multi_reduction <add>, %186, %cst_82 [1] : vector<16x32xf32> to vector<16xf32>
    %188 = vector.shape_cast %187 : vector<16xf32> to vector<16x1xf32>
    %cst_83 = arith.constant 3.200000e+01 : f32
    %189 = vector.broadcast %cst_83 : f32 to vector<16x1xf32>
    %190 = arith.divf %188, %189 : vector<16x1xf32>
    %cst_84 = arith.constant 9.99999974E-6 : f32
    %191 = vector.broadcast %cst_84 : f32 to vector<16x1xf32>
    %192 = arith.addf %190, %191 : vector<16x1xf32>
    %193 = math.rsqrt %192 : vector<16x1xf32>
    %194 = vector.broadcast %193 : vector<16x1xf32> to vector<16x32xf32>
    %195 = arith.mulf %185, %194 : vector<16x32xf32>
    %196 = vector.broadcast %177 : vector<1x32xf32> to vector<16x32xf32>
    %197 = arith.mulf %195, %196 : vector<16x32xf32>
    %198 = vector.broadcast %179 : vector<1x32xf32> to vector<16x32xf32>
    %199 = arith.addf %197, %198 : vector<16x32xf32>
    %c1 = arith.constant 1 : index
    %c0_85 = arith.constant 0 : index
    %c0_86 = arith.constant 0 : index
    %200 = vector.load %arg5[%c1, %c0_85, %c0_86] : memref<2x32x96xf32, #tpu.memory_space<vmem>>, vector<1x32x96xf32>
    %201 = vector.shape_cast %200 : vector<1x32x96xf32> to vector<32x96xf32>
    %cst_87 = arith.constant dense<0.000000e+00> : vector<16x96xf32>
    %202 = tpu.matmul %199, %201, %cst_87 {dimension_numbers = #tpu.dot_dimension_numbers<[1], [0], [0], [1], [0, 0, 1, 1], [], []>} : vector<16x32xf32>, vector<32x96xf32>, vector<16x96xf32> -> vector<16x96xf32>
    %c1_88 = arith.constant 1 : index
    %c0_89 = arith.constant 0 : index
    %c0_90 = arith.constant 0 : index
    %203 = vector.load %arg6[%c1_88, %c0_89, %c0_90] : memref<2x1x96xf32, #tpu.memory_space<vmem>>, vector<1x1x96xf32>
    %204 = vector.shape_cast %203 : vector<1x1x96xf32> to vector<1x96xf32>
    %205 = vector.broadcast %204 : vector<1x96xf32> to vector<16x96xf32>
    %206 = arith.addf %202, %205 : vector<16x96xf32>
    %207 = vector.extract_strided_slice %23 {offsets = [0, 0], sizes = [1, 8], strides = [1, 1]} : vector<2x8xf32> to vector<1x8xf32>
    %208 = vector.extract_strided_slice %206 {offsets = [0, 0], sizes = [8, 16], strides = [1, 1]} : vector<16x96xf32> to vector<8x16xf32>
    %209 = vector.extract_strided_slice %206 {offsets = [0, 32], sizes = [8, 16], strides = [1, 1]} : vector<16x96xf32> to vector<8x16xf32>
    %210 = vector.extract_strided_slice %206 {offsets = [0, 64], sizes = [8, 16], strides = [1, 1]} : vector<16x96xf32> to vector<8x16xf32>
    %211 = tpu.transpose %209, [1, 0] : vector<8x16xf32> -> vector<16x8xf32>
    %cst_91 = arith.constant dense<0.000000e+00> : vector<8x8xf32>
    %212 = tpu.matmul %208, %211, %cst_91 {dimension_numbers = #tpu.dot_dimension_numbers<[1], [0], [0], [1], [0, 0, 1, 1], [], []>} : vector<8x16xf32>, vector<16x8xf32>, vector<8x8xf32> -> vector<8x8xf32>
    %cst_92 = arith.constant 2.500000e-01 : f32
    %213 = vector.broadcast %cst_92 : f32 to vector<8x8xf32>
    %214 = arith.mulf %212, %213 : vector<8x8xf32>
    %215 = vector.broadcast %207 : vector<1x8xf32> to vector<8x8xf32>
    %216 = arith.addf %214, %215 : vector<8x8xf32>
    %cst_93 = arith.constant dense<0xFF800000> : vector<8xf32>
    %217 = vector.multi_reduction <maximumf>, %216, %cst_93 [1] : vector<8x8xf32> to vector<8xf32>
    %218 = vector.shape_cast %217 : vector<8xf32> to vector<8x1xf32>
    %219 = vector.broadcast %218 : vector<8x1xf32> to vector<8x8xf32>
    %220 = arith.subf %216, %219 : vector<8x8xf32>
    %221 = math.exp %220 : vector<8x8xf32>
    %cst_94 = arith.constant dense<0.000000e+00> : vector<8xf32>
    %222 = vector.multi_reduction <add>, %221, %cst_94 [1] : vector<8x8xf32> to vector<8xf32>
    %223 = vector.shape_cast %222 : vector<8xf32> to vector<8x1xf32>
    %224 = tpu.reciprocal %223 {approx = true} : vector<8x1xf32> -> vector<8x1xf32>
    %225 = vector.broadcast %224 : vector<8x1xf32> to vector<8x8xf32>
    %226 = arith.mulf %221, %225 : vector<8x8xf32>
    %cst_95 = arith.constant dense<0.000000e+00> : vector<8x16xf32>
    %227 = tpu.matmul %226, %210, %cst_95 {dimension_numbers = #tpu.dot_dimension_numbers<[1], [0], [0], [1], [0, 0, 1, 1], [], []>} : vector<8x8xf32>, vector<8x16xf32>, vector<8x16xf32> -> vector<8x16xf32>
    %228 = vector.extract_strided_slice %206 {offsets = [0, 16], sizes = [8, 16], strides = [1, 1]} : vector<16x96xf32> to vector<8x16xf32>
    %229 = vector.extract_strided_slice %206 {offsets = [0, 48], sizes = [8, 16], strides = [1, 1]} : vector<16x96xf32> to vector<8x16xf32>
    %230 = vector.extract_strided_slice %206 {offsets = [0, 80], sizes = [8, 16], strides = [1, 1]} : vector<16x96xf32> to vector<8x16xf32>
    %231 = tpu.transpose %229, [1, 0] : vector<8x16xf32> -> vector<16x8xf32>
    %cst_96 = arith.constant dense<0.000000e+00> : vector<8x8xf32>
    %232 = tpu.matmul %228, %231, %cst_96 {dimension_numbers = #tpu.dot_dimension_numbers<[1], [0], [0], [1], [0, 0, 1, 1], [], []>} : vector<8x16xf32>, vector<16x8xf32>, vector<8x8xf32> -> vector<8x8xf32>
    %cst_97 = arith.constant 2.500000e-01 : f32
    %233 = vector.broadcast %cst_97 : f32 to vector<8x8xf32>
    %234 = arith.mulf %232, %233 : vector<8x8xf32>
    %235 = vector.broadcast %207 : vector<1x8xf32> to vector<8x8xf32>
    %236 = arith.addf %234, %235 : vector<8x8xf32>
    %cst_98 = arith.constant dense<0xFF800000> : vector<8xf32>
    %237 = vector.multi_reduction <maximumf>, %236, %cst_98 [1] : vector<8x8xf32> to vector<8xf32>
    %238 = vector.shape_cast %237 : vector<8xf32> to vector<8x1xf32>
    %239 = vector.broadcast %238 : vector<8x1xf32> to vector<8x8xf32>
    %240 = arith.subf %236, %239 : vector<8x8xf32>
    %241 = math.exp %240 : vector<8x8xf32>
    %cst_99 = arith.constant dense<0.000000e+00> : vector<8xf32>
    %242 = vector.multi_reduction <add>, %241, %cst_99 [1] : vector<8x8xf32> to vector<8xf32>
    %243 = vector.shape_cast %242 : vector<8xf32> to vector<8x1xf32>
    %244 = tpu.reciprocal %243 {approx = true} : vector<8x1xf32> -> vector<8x1xf32>
    %245 = vector.broadcast %244 : vector<8x1xf32> to vector<8x8xf32>
    %246 = arith.mulf %241, %245 : vector<8x8xf32>
    %cst_100 = arith.constant dense<0.000000e+00> : vector<8x16xf32>
    %247 = tpu.matmul %246, %230, %cst_100 {dimension_numbers = #tpu.dot_dimension_numbers<[1], [0], [0], [1], [0, 0, 1, 1], [], []>} : vector<8x8xf32>, vector<8x16xf32>, vector<8x16xf32> -> vector<8x16xf32>
    %248 = tpu.concatenate %227, %247 in 1 : vector<8x16xf32>, vector<8x16xf32> -> vector<8x32xf32>
    %249 = vector.extract_strided_slice %23 {offsets = [1, 0], sizes = [1, 8], strides = [1, 1]} : vector<2x8xf32> to vector<1x8xf32>
    %250 = vector.extract_strided_slice %206 {offsets = [8, 0], sizes = [8, 16], strides = [1, 1]} : vector<16x96xf32> to vector<8x16xf32>
    %251 = vector.extract_strided_slice %206 {offsets = [8, 32], sizes = [8, 16], strides = [1, 1]} : vector<16x96xf32> to vector<8x16xf32>
    %252 = vector.extract_strided_slice %206 {offsets = [8, 64], sizes = [8, 16], strides = [1, 1]} : vector<16x96xf32> to vector<8x16xf32>
    %253 = tpu.transpose %251, [1, 0] : vector<8x16xf32> -> vector<16x8xf32>
    %cst_101 = arith.constant dense<0.000000e+00> : vector<8x8xf32>
    %254 = tpu.matmul %250, %253, %cst_101 {dimension_numbers = #tpu.dot_dimension_numbers<[1], [0], [0], [1], [0, 0, 1, 1], [], []>} : vector<8x16xf32>, vector<16x8xf32>, vector<8x8xf32> -> vector<8x8xf32>
    %cst_102 = arith.constant 2.500000e-01 : f32
    %255 = vector.broadcast %cst_102 : f32 to vector<8x8xf32>
    %256 = arith.mulf %254, %255 : vector<8x8xf32>
    %257 = vector.broadcast %249 : vector<1x8xf32> to vector<8x8xf32>
    %258 = arith.addf %256, %257 : vector<8x8xf32>
    %cst_103 = arith.constant dense<0xFF800000> : vector<8xf32>
    %259 = vector.multi_reduction <maximumf>, %258, %cst_103 [1] : vector<8x8xf32> to vector<8xf32>
    %260 = vector.shape_cast %259 : vector<8xf32> to vector<8x1xf32>
    %261 = vector.broadcast %260 : vector<8x1xf32> to vector<8x8xf32>
    %262 = arith.subf %258, %261 : vector<8x8xf32>
    %263 = math.exp %262 : vector<8x8xf32>
    %cst_104 = arith.constant dense<0.000000e+00> : vector<8xf32>
    %264 = vector.multi_reduction <add>, %263, %cst_104 [1] : vector<8x8xf32> to vector<8xf32>
    %265 = vector.shape_cast %264 : vector<8xf32> to vector<8x1xf32>
    %266 = tpu.reciprocal %265 {approx = true} : vector<8x1xf32> -> vector<8x1xf32>
    %267 = vector.broadcast %266 : vector<8x1xf32> to vector<8x8xf32>
    %268 = arith.mulf %263, %267 : vector<8x8xf32>
    %cst_105 = arith.constant dense<0.000000e+00> : vector<8x16xf32>
    %269 = tpu.matmul %268, %252, %cst_105 {dimension_numbers = #tpu.dot_dimension_numbers<[1], [0], [0], [1], [0, 0, 1, 1], [], []>} : vector<8x8xf32>, vector<8x16xf32>, vector<8x16xf32> -> vector<8x16xf32>
    %270 = vector.extract_strided_slice %206 {offsets = [8, 16], sizes = [8, 16], strides = [1, 1]} : vector<16x96xf32> to vector<8x16xf32>
    %271 = vector.extract_strided_slice %206 {offsets = [8, 48], sizes = [8, 16], strides = [1, 1]} : vector<16x96xf32> to vector<8x16xf32>
    %272 = vector.extract_strided_slice %206 {offsets = [8, 80], sizes = [8, 16], strides = [1, 1]} : vector<16x96xf32> to vector<8x16xf32>
    %273 = tpu.transpose %271, [1, 0] : vector<8x16xf32> -> vector<16x8xf32>
    %cst_106 = arith.constant dense<0.000000e+00> : vector<8x8xf32>
    %274 = tpu.matmul %270, %273, %cst_106 {dimension_numbers = #tpu.dot_dimension_numbers<[1], [0], [0], [1], [0, 0, 1, 1], [], []>} : vector<8x16xf32>, vector<16x8xf32>, vector<8x8xf32> -> vector<8x8xf32>
    %cst_107 = arith.constant 2.500000e-01 : f32
    %275 = vector.broadcast %cst_107 : f32 to vector<8x8xf32>
    %276 = arith.mulf %274, %275 : vector<8x8xf32>
    %277 = vector.broadcast %249 : vector<1x8xf32> to vector<8x8xf32>
    %278 = arith.addf %276, %277 : vector<8x8xf32>
    %cst_108 = arith.constant dense<0xFF800000> : vector<8xf32>
    %279 = vector.multi_reduction <maximumf>, %278, %cst_108 [1] : vector<8x8xf32> to vector<8xf32>
    %280 = vector.shape_cast %279 : vector<8xf32> to vector<8x1xf32>
    %281 = vector.broadcast %280 : vector<8x1xf32> to vector<8x8xf32>
    %282 = arith.subf %278, %281 : vector<8x8xf32>
    %283 = math.exp %282 : vector<8x8xf32>
    %cst_109 = arith.constant dense<0.000000e+00> : vector<8xf32>
    %284 = vector.multi_reduction <add>, %283, %cst_109 [1] : vector<8x8xf32> to vector<8xf32>
    %285 = vector.shape_cast %284 : vector<8xf32> to vector<8x1xf32>
    %286 = tpu.reciprocal %285 {approx = true} : vector<8x1xf32> -> vector<8x1xf32>
    %287 = vector.broadcast %286 : vector<8x1xf32> to vector<8x8xf32>
    %288 = arith.mulf %283, %287 : vector<8x8xf32>
    %cst_110 = arith.constant dense<0.000000e+00> : vector<8x16xf32>
    %289 = tpu.matmul %288, %272, %cst_110 {dimension_numbers = #tpu.dot_dimension_numbers<[1], [0], [0], [1], [0, 0, 1, 1], [], []>} : vector<8x8xf32>, vector<8x16xf32>, vector<8x16xf32> -> vector<8x16xf32>
    %290 = tpu.concatenate %269, %289 in 1 : vector<8x16xf32>, vector<8x16xf32> -> vector<8x32xf32>
    %291 = tpu.concatenate %248, %290 in 0 : vector<8x32xf32>, vector<8x32xf32> -> vector<16x32xf32>
    %c1_111 = arith.constant 1 : index
    %c0_112 = arith.constant 0 : index
    %c0_113 = arith.constant 0 : index
    %292 = vector.load %arg7[%c1_111, %c0_112, %c0_113] : memref<2x32x32xf32, #tpu.memory_space<vmem>>, vector<1x32x32xf32>
    %293 = vector.shape_cast %292 : vector<1x32x32xf32> to vector<32x32xf32>
    %cst_114 = arith.constant dense<0.000000e+00> : vector<16x32xf32>
    %294 = tpu.matmul %291, %293, %cst_114 {dimension_numbers = #tpu.dot_dimension_numbers<[1], [0], [0], [1], [0, 0, 1, 1], [], []>} : vector<16x32xf32>, vector<32x32xf32>, vector<16x32xf32> -> vector<16x32xf32>
    %c1_115 = arith.constant 1 : index
    %c0_116 = arith.constant 0 : index
    %c0_117 = arith.constant 0 : index
    %295 = vector.load %arg8[%c1_115, %c0_116, %c0_117] : memref<2x1x32xf32, #tpu.memory_space<vmem>>, vector<1x1x32xf32>
    %296 = vector.shape_cast %295 : vector<1x1x32xf32> to vector<1x32xf32>
    %297 = vector.broadcast %296 : vector<1x32xf32> to vector<16x32xf32>
    %298 = arith.addf %294, %297 : vector<16x32xf32>
    %299 = arith.addf %298, %199 : vector<16x32xf32>
    %c1_118 = arith.constant 1 : index
    %c0_119 = arith.constant 0 : index
    %c0_120 = arith.constant 0 : index
    %300 = vector.load %arg9[%c1_118, %c0_119, %c0_120] : memref<2x1x32xf32, #tpu.memory_space<vmem>>, vector<1x1x32xf32>
    %301 = vector.shape_cast %300 : vector<1x1x32xf32> to vector<1x32xf32>
    %c1_121 = arith.constant 1 : index
    %c0_122 = arith.constant 0 : index
    %c0_123 = arith.constant 0 : index
    %302 = vector.load %arg10[%c1_121, %c0_122, %c0_123] : memref<2x1x32xf32, #tpu.memory_space<vmem>>, vector<1x1x32xf32>
    %303 = vector.shape_cast %302 : vector<1x1x32xf32> to vector<1x32xf32>
    %cst_124 = arith.constant dense<0.000000e+00> : vector<16xf32>
    %304 = vector.multi_reduction <add>, %299, %cst_124 [1] : vector<16x32xf32> to vector<16xf32>
    %305 = vector.shape_cast %304 : vector<16xf32> to vector<16x1xf32>
    %cst_125 = arith.constant 3.200000e+01 : f32
    %306 = vector.broadcast %cst_125 : f32 to vector<16x1xf32>
    %307 = arith.divf %305, %306 : vector<16x1xf32>
    %308 = vector.broadcast %307 : vector<16x1xf32> to vector<16x32xf32>
    %309 = arith.subf %299, %308 : vector<16x32xf32>
    %310 = arith.mulf %309, %309 : vector<16x32xf32>
    %cst_126 = arith.constant dense<0.000000e+00> : vector<16xf32>
    %311 = vector.multi_reduction <add>, %310, %cst_126 [1] : vector<16x32xf32> to vector<16xf32>
    %312 = vector.shape_cast %311 : vector<16xf32> to vector<16x1xf32>
    %cst_127 = arith.constant 3.200000e+01 : f32
    %313 = vector.broadcast %cst_127 : f32 to vector<16x1xf32>
    %314 = arith.divf %312, %313 : vector<16x1xf32>
    %cst_128 = arith.constant 9.99999974E-6 : f32
    %315 = vector.broadcast %cst_128 : f32 to vector<16x1xf32>
    %316 = arith.addf %314, %315 : vector<16x1xf32>
    %317 = math.rsqrt %316 : vector<16x1xf32>
    %318 = vector.broadcast %317 : vector<16x1xf32> to vector<16x32xf32>
    %319 = arith.mulf %309, %318 : vector<16x32xf32>
    %320 = vector.broadcast %301 : vector<1x32xf32> to vector<16x32xf32>
    %321 = arith.mulf %319, %320 : vector<16x32xf32>
    %322 = vector.broadcast %303 : vector<1x32xf32> to vector<16x32xf32>
    %323 = arith.addf %321, %322 : vector<16x32xf32>
    %c1_129 = arith.constant 1 : index
    %c0_130 = arith.constant 0 : index
    %c0_131 = arith.constant 0 : index
    %324 = vector.load %arg11[%c1_129, %c0_130, %c0_131] : memref<2x32x64xf32, #tpu.memory_space<vmem>>, vector<1x32x64xf32>
    %325 = vector.shape_cast %324 : vector<1x32x64xf32> to vector<32x64xf32>
    %cst_132 = arith.constant dense<0.000000e+00> : vector<16x64xf32>
    %326 = tpu.matmul %323, %325, %cst_132 {dimension_numbers = #tpu.dot_dimension_numbers<[1], [0], [0], [1], [0, 0, 1, 1], [], []>} : vector<16x32xf32>, vector<32x64xf32>, vector<16x64xf32> -> vector<16x64xf32>
    %c1_133 = arith.constant 1 : index
    %c0_134 = arith.constant 0 : index
    %c0_135 = arith.constant 0 : index
    %327 = vector.load %arg12[%c1_133, %c0_134, %c0_135] : memref<2x1x64xf32, #tpu.memory_space<vmem>>, vector<1x1x64xf32>
    %328 = vector.shape_cast %327 : vector<1x1x64xf32> to vector<1x64xf32>
    %329 = vector.broadcast %328 : vector<1x64xf32> to vector<16x64xf32>
    %330 = arith.addf %326, %329 : vector<16x64xf32>
    %cst_136 = arith.constant 5.000000e-01 : f32
    %331 = vector.broadcast %cst_136 : f32 to vector<16x64xf32>
    %332 = arith.mulf %331, %330 : vector<16x64xf32>
    %cst_137 = arith.constant 4.471500e-02 : f32
    %333 = vector.broadcast %cst_137 : f32 to vector<16x64xf32>
    %334 = arith.mulf %333, %330 : vector<16x64xf32>
    %335 = arith.mulf %334, %330 : vector<16x64xf32>
    %336 = arith.mulf %335, %330 : vector<16x64xf32>
    %337 = arith.addf %330, %336 : vector<16x64xf32>
    %cst_138 = arith.constant 0.797884583 : f32
    %338 = vector.broadcast %cst_138 : f32 to vector<16x64xf32>
    %339 = arith.mulf %338, %337 : vector<16x64xf32>
    %340 = math.tanh %339 : vector<16x64xf32>
    %cst_139 = arith.constant 1.000000e+00 : f32
    %341 = vector.broadcast %cst_139 : f32 to vector<16x64xf32>
    %342 = arith.addf %341, %340 : vector<16x64xf32>
    %343 = arith.mulf %332, %342 : vector<16x64xf32>
    %c1_140 = arith.constant 1 : index
    %c0_141 = arith.constant 0 : index
    %c0_142 = arith.constant 0 : index
    %344 = vector.load %arg13[%c1_140, %c0_141, %c0_142] : memref<2x64x32xf32, #tpu.memory_space<vmem>>, vector<1x64x32xf32>
    %345 = vector.shape_cast %344 : vector<1x64x32xf32> to vector<64x32xf32>
    %cst_143 = arith.constant dense<0.000000e+00> : vector<16x32xf32>
    %346 = tpu.matmul %343, %345, %cst_143 {dimension_numbers = #tpu.dot_dimension_numbers<[1], [0], [0], [1], [0, 0, 1, 1], [], []>} : vector<16x64xf32>, vector<64x32xf32>, vector<16x32xf32> -> vector<16x32xf32>
    %c1_144 = arith.constant 1 : index
    %c0_145 = arith.constant 0 : index
    %c0_146 = arith.constant 0 : index
    %347 = vector.load %arg14[%c1_144, %c0_145, %c0_146] : memref<2x1x32xf32, #tpu.memory_space<vmem>>, vector<1x1x32xf32>
    %348 = vector.shape_cast %347 : vector<1x1x32xf32> to vector<1x32xf32>
    %349 = vector.broadcast %348 : vector<1x32xf32> to vector<16x32xf32>
    %350 = arith.addf %346, %349 : vector<16x32xf32>
    %351 = arith.addf %350, %323 : vector<16x32xf32>
    %c1_147 = arith.constant 1 : index
    %c0_148 = arith.constant 0 : index
    %c0_149 = arith.constant 0 : index
    %352 = vector.load %arg15[%c1_147, %c0_148, %c0_149] : memref<2x1x32xf32, #tpu.memory_space<vmem>>, vector<1x1x32xf32>
    %353 = vector.shape_cast %352 : vector<1x1x32xf32> to vector<1x32xf32>
    %c1_150 = arith.constant 1 : index
    %c0_151 = arith.constant 0 : index
    %c0_152 = arith.constant 0 : index
    %354 = vector.load %arg16[%c1_150, %c0_151, %c0_152] : memref<2x1x32xf32, #tpu.memory_space<vmem>>, vector<1x1x32xf32>
    %355 = vector.shape_cast %354 : vector<1x1x32xf32> to vector<1x32xf32>
    %cst_153 = arith.constant dense<0.000000e+00> : vector<16xf32>
    %356 = vector.multi_reduction <add>, %351, %cst_153 [1] : vector<16x32xf32> to vector<16xf32>
    %357 = vector.shape_cast %356 : vector<16xf32> to vector<16x1xf32>
    %cst_154 = arith.constant 3.200000e+01 : f32
    %358 = vector.broadcast %cst_154 : f32 to vector<16x1xf32>
    %359 = arith.divf %357, %358 : vector<16x1xf32>
    %360 = vector.broadcast %359 : vector<16x1xf32> to vector<16x32xf32>
    %361 = arith.subf %351, %360 : vector<16x32xf32>
    %362 = arith.mulf %361, %361 : vector<16x32xf32>
    %cst_155 = arith.constant dense<0.000000e+00> : vector<16xf32>
    %363 = vector.multi_reduction <add>, %362, %cst_155 [1] : vector<16x32xf32> to vector<16xf32>
    %364 = vector.shape_cast %363 : vector<16xf32> to vector<16x1xf32>
    %cst_156 = arith.constant 3.200000e+01 : f32
    %365 = vector.broadcast %cst_156 : f32 to vector<16x1xf32>
    %366 = arith.divf %364, %365 : vector<16x1xf32>
    %cst_157 = arith.constant 9.99999974E-6 : f32
    %367 = vector.broadcast %cst_157 : f32 to vector<16x1xf32>
    %368 = arith.addf %366, %367 : vector<16x1xf32>
    %369 = math.rsqrt %368 : vector<16x1xf32>
    %370 = vector.broadcast %369 : vector<16x1xf32> to vector<16x32xf32>
    %371 = arith.mulf %361, %370 : vector<16x32xf32>
    %372 = vector.broadcast %353 : vector<1x32xf32> to vector<16x32xf32>
    %373 = arith.mulf %371, %372 : vector<16x32xf32>
    %374 = vector.broadcast %355 : vector<1x32xf32> to vector<16x32xf32>
    %375 = arith.addf %373, %374 : vector<16x32xf32>
    %c0_158 = arith.constant 0 : index
    %c0_159 = arith.constant 0 : index
    %376 = vector.load %arg17[%c0_158, %c0_159] : memref<32x128xf32, #tpu.memory_space<vmem>>, vector<32x128xf32>
    %cst_160 = arith.constant dense<0.000000e+00> : vector<16x128xf32>
    %377 = tpu.matmul %375, %376, %cst_160 {dimension_numbers = #tpu.dot_dimension_numbers<[1], [0], [0], [1], [0, 0, 1, 1], [], []>} : vector<16x32xf32>, vector<32x128xf32>, vector<16x128xf32> -> vector<16x128xf32>
    %c0_161 = arith.constant 0 : index
    %c0_162 = arith.constant 0 : index
    %378 = vector.load %arg18[%c0_161, %c0_162] : memref<1x128xf32, #tpu.memory_space<vmem>>, vector<1x128xf32>
    %379 = vector.broadcast %378 : vector<1x128xf32> to vector<16x128xf32>
    %380 = arith.addf %377, %379 : vector<16x128xf32>
    %c0_163 = arith.constant 0 : index
    %c0_164 = arith.constant 0 : index
    %381 = vector.load %arg19[%c0_163, %c0_164] : memref<16x128xf32, #tpu.memory_space<vmem>>, vector<16x128xf32>
    tpu.vector_store %arg19[%c0_163, %c0_164], %380 {strides = array<i32>} : memref<16x128xf32, #tpu.memory_space<vmem>>, vector<16x128xf32>,
    return
  }
  func.func @transform_0(%arg0: i32) -> (i32, i32) {
    %c0_i32 = arith.constant 0 : i32
    %c0_i32_0 = arith.constant 0 : i32
    %c0_i32_1 = arith.constant 0 : i32
    return %c0_i32, %c0_i32_0 : i32, i32
  }
  func.func @transform_1(%arg0: i32) -> (i32, i32) {
    %c0_i32 = arith.constant 0 : i32
    %c0_i32_0 = arith.constant 0 : i32
    %c0_i32_1 = arith.constant 0 : i32
    return %c0_i32, %c0_i32_0 : i32, i32
  }
  func.func @transform_2(%arg0: i32) -> (i32, i32) {
    %c0_i32 = arith.constant 0 : i32
    %c0_i32_0 = arith.constant 0 : i32
    %c0_i32_1 = arith.constant 0 : i32
    return %c0_i32, %c0_i32_0 : i32, i32
  }
  func.func @transform_3(%arg0: i32) -> (i32, i32) {
    %c0_i32 = arith.constant 0 : i32
    %c0_i32_0 = arith.constant 0 : i32
    %c0_i32_1 = arith.constant 0 : i32
    return %c0_i32, %c0_i32_0 : i32, i32
  }
  func.func @transform_4(%arg0: i32) -> (i32, i32, i32) {
    %c0_i32 = arith.constant 0 : i32
    %c0_i32_0 = arith.constant 0 : i32
    %c0_i32_1 = arith.constant 0 : i32
    %c0_i32_2 = arith.constant 0 : i32
    return %c0_i32, %c0_i32_0, %c0_i32_1 : i32, i32, i32
  }
  func.func @transform_5(%arg0: i32) -> (i32, i32, i32) {
    %c0_i32 = arith.constant 0 : i32
    %c0_i32_0 = arith.constant 0 : i32
    %c0_i32_1 = arith.constant 0 : i32
    %c0_i32_2 = arith.constant 0 : i32
    return %c0_i32, %c0_i32_0, %c0_i32_1 : i32, i32, i32
  }
  func.func @transform_6(%arg0: i32) -> (i32, i32, i32) {
    %c0_i32 = arith.constant 0 : i32
    %c0_i32_0 = arith.constant 0 : i32
    %c0_i32_1 = arith.constant 0 : i32
    %c0_i32_2 = arith.constant 0 : i32
    return %c0_i32, %c0_i32_0, %c0_i32_1 : i32, i32, i32
  }
  func.func @transform_7(%arg0: i32) -> (i32, i32, i32) {
    %c0_i32 = arith.constant 0 : i32
    %c0_i32_0 = arith.constant 0 : i32
    %c0_i32_1 = arith.constant 0 : i32
    %c0_i32_2 = arith.constant 0 : i32
    return %c0_i32, %c0_i32_0, %c0_i32_1 : i32, i32, i32
  }
  func.func @transform_8(%arg0: i32) -> (i32, i32, i32) {
    %c0_i32 = arith.constant 0 : i32
    %c0_i32_0 = arith.constant 0 : i32
    %c0_i32_1 = arith.constant 0 : i32
    %c0_i32_2 = arith.constant 0 : i32
    return %c0_i32, %c0_i32_0, %c0_i32_1 : i32, i32, i32
  }
  func.func @transform_9(%arg0: i32) -> (i32, i32, i32) {
    %c0_i32 = arith.constant 0 : i32
    %c0_i32_0 = arith.constant 0 : i32
    %c0_i32_1 = arith.constant 0 : i32
    %c0_i32_2 = arith.constant 0 : i32
    return %c0_i32, %c0_i32_0, %c0_i32_1 : i32, i32, i32
  }
  func.func @transform_10(%arg0: i32) -> (i32, i32, i32) {
    %c0_i32 = arith.constant 0 : i32
    %c0_i32_0 = arith.constant 0 : i32
    %c0_i32_1 = arith.constant 0 : i32
    %c0_i32_2 = arith.constant 0 : i32
    return %c0_i32, %c0_i32_0, %c0_i32_1 : i32, i32, i32
  }
  func.func @transform_11(%arg0: i32) -> (i32, i32, i32) {
    %c0_i32 = arith.constant 0 : i32
    %c0_i32_0 = arith.constant 0 : i32
    %c0_i32_1 = arith.constant 0 : i32
    %c0_i32_2 = arith.constant 0 : i32
    return %c0_i32, %c0_i32_0, %c0_i32_1 : i32, i32, i32
  }
  func.func @transform_12(%arg0: i32) -> (i32, i32, i32) {
    %c0_i32 = arith.constant 0 : i32
    %c0_i32_0 = arith.constant 0 : i32
    %c0_i32_1 = arith.constant 0 : i32
    %c0_i32_2 = arith.constant 0 : i32
    return %c0_i32, %c0_i32_0, %c0_i32_1 : i32, i32, i32
  }
  func.func @transform_13(%arg0: i32) -> (i32, i32, i32) {
    %c0_i32 = arith.constant 0 : i32
    %c0_i32_0 = arith.constant 0 : i32
    %c0_i32_1 = arith.constant 0 : i32
    %c0_i32_2 = arith.constant 0 : i32
    return %c0_i32, %c0_i32_0, %c0_i32_1 : i32, i32, i32
  }
  func.func @transform_14(%arg0: i32) -> (i32, i32, i32) {
    %c0_i32 = arith.constant 0 : i32
    %c0_i32_0 = arith.constant 0 : i32
    %c0_i32_1 = arith.constant 0 : i32
    %c0_i32_2 = arith.constant 0 : i32
    return %c0_i32, %c0_i32_0, %c0_i32_1 : i32, i32, i32
  }
  func.func @transform_15(%arg0: i32) -> (i32, i32, i32) {
    %c0_i32 = arith.constant 0 : i32
    %c0_i32_0 = arith.constant 0 : i32
    %c0_i32_1 = arith.constant 0 : i32
    %c0_i32_2 = arith.constant 0 : i32
    return %c0_i32, %c0_i32_0, %c0_i32_1 : i32, i32, i32
  }
  func.func @transform_16(%arg0: i32) -> (i32, i32) {
    %c0_i32 = arith.constant 0 : i32
    %c0_i32_0 = arith.constant 0 : i32
    %c0_i32_1 = arith.constant 0 : i32
    return %c0_i32, %c0_i32_0 : i32, i32
  }
  func.func @transform_17(%arg0: i32) -> (i32, i32) {
    %c0_i32 = arith.constant 0 : i32
    %c0_i32_0 = arith.constant 0 : i32
    %c0_i32_1 = arith.constant 0 : i32
    return %c0_i32, %c0_i32_0 : i32, i32
  }
  func.func @transform_18(%arg0: i32) -> (i32, i32) {
    %c0_i32 = arith.constant 0 : i32
    %c0_i32_0 = arith.constant 0 : i32
    %c0_i32_1 = arith.constant 0 : i32
    return %c0_i32, %c0_i32_0 : i32, i32
  }
}

</mosaic_0001>

<llo_original>
// kernel: x_disaster_ie_forward.1
$region0: #{x_disaster_ie_forward.1}
  #allocation0 [shape = 'u32[]', space=smem, size = 0x4, offset = 0x4, fixed_abs, tag = 'smem constant byte address 0x4 - core index']
  #allocation1 [shape = 'u32[144,128]{1,0:T(1,128)}', space=vmem, size = 0x12000, scoped, tag = 'internal scratch']
  %s0 = inlined_call_operand.vmem [shape: f32[16,32], index: 0, kind: input, shape index: {}]
  %s1 = inlined_call_operand.vmem [shape: f32[2,8], index: 1, kind: input, shape index: {}]
  %s2 = inlined_call_operand.vmem [shape: f32[1,32], index: 2, kind: input, shape index: {}]
  %s3 = inlined_call_operand.vmem [shape: f32[1,32], index: 3, kind: input, shape index: {}]
  %s4 = inlined_call_operand.vmem [shape: f32[2,32,96], index: 4, kind: input, shape index: {}]
  %s5 = inlined_call_operand.vmem [shape: f32[2,1,96], index: 5, kind: input, shape index: {}]
  %s6 = inlined_call_operand.vmem [shape: f32[2,32,32], index: 6, kind: input, shape index: {}]
  %s7 = inlined_call_operand.vmem [shape: f32[2,1,32], index: 7, kind: input, shape index: {}]
  %s8 = inlined_call_operand.vmem [shape: f32[2,1,32], index: 8, kind: input, shape index: {}]
  %s9 = inlined_call_operand.vmem [shape: f32[2,1,32], index: 9, kind: input, shape index: {}]
  %s10 = inlined_call_operand.vmem [shape: f32[2,32,64], index: 10, kind: input, shape index: {}]
  %s11 = inlined_call_operand.vmem [shape: f32[2,1,64], index: 11, kind: input, shape index: {}]
  %s12 = inlined_call_operand.vmem [shape: f32[2,64,32], index: 12, kind: input, shape index: {}]
  %s13 = inlined_call_operand.vmem [shape: f32[2,1,32], index: 13, kind: input, shape index: {}]
  %s14 = inlined_call_operand.vmem [shape: f32[2,1,32], index: 14, kind: input, shape index: {}]
  %s15 = inlined_call_operand.vmem [shape: f32[2,1,32], index: 15, kind: input, shape index: {}]
  %s16 = inlined_call_operand.vmem [shape: f32[32,128], index: 16, kind: input, shape index: {}]
  %s17 = inlined_call_operand.vmem [shape: f32[1,128], index: 17, kind: input, shape index: {}]
  %s18 = inlined_call_operand.vmem [shape: f32[16,128], index: 18, kind: output, shape index: {}]
  %s19 = sld [smem:[#allocation0]]
  $region82: #{x_disaster_ie_forward.1} parent=0
    _
  %s21 = ssub.s32 1, %s19
  %s22 = scalar_select 0, %s21, %s19
  // Predicated region
  $region2: #{x_disaster_ie_forward.1} parent=0 // pred_check
    _
  $region3: #{x_disaster_ie_forward.1} parent=0 // pred_check_branch
    %24 = sbr.rel (0) target = $region5
  $region4: #{x_disaster_ie_forward.1} parent=0 // pred_region
    _
  $region5: #{x_disaster_ie_forward.1} parent=0 // pred_fallthru
    _
  // Predicated region
  $region6: #{x_disaster_ie_forward.1} parent=0 // pred_check
    _
  $region7: #{x_disaster_ie_forward.1} parent=0 // pred_check_branch
    %26 = sbr.rel (0) target = $region9
  $region8: #{x_disaster_ie_forward.1} parent=0 // pred_region
    _
  $region9: #{x_disaster_ie_forward.1} parent=0 // pred_fallthru
    _
  // Predicated region
  $region10: #{x_disaster_ie_forward.1} parent=0 // pred_check
    _
  $region11: #{x_disaster_ie_forward.1} parent=0 // pred_check_branch
    %28 = sbr.rel (0) target = $region13
  $region12: #{x_disaster_ie_forward.1} parent=0 // pred_region
    _
  $region13: #{x_disaster_ie_forward.1} parent=0 // pred_fallthru
    _
  // Predicated region
  $region14: #{x_disaster_ie_forward.1} parent=0 // pred_check
    _
  $region15: #{x_disaster_ie_forward.1} parent=0 // pred_check_branch
    %30 = sbr.rel (0) target = $region17
  $region16: #{x_disaster_ie_forward.1} parent=0 // pred_region
    _
  $region17: #{x_disaster_ie_forward.1} parent=0 // pred_fallthru
    _
  // Predicated region
  $region18: #{x_disaster_ie_forward.1} parent=0 // pred_check
    _
  $region19: #{x_disaster_ie_forward.1} parent=0 // pred_check_branch
    %32 = sbr.rel (0) target = $region21
  $region20: #{x_disaster_ie_forward.1} parent=0 // pred_region
    _
  $region21: #{x_disaster_ie_forward.1} parent=0 // pred_fallthru
    _
  // Predicated region
  $region22: #{x_disaster_ie_forward.1} parent=0 // pred_check
    _
  $region23: #{x_disaster_ie_forward.1} parent=0 // pred_check_branch
    %34 = sbr.rel (0) target = $region25
  $region24: #{x_disaster_ie_forward.1} parent=0 // pred_region
    _
  $region25: #{x_disaster_ie_forward.1} parent=0 // pred_fallthru
    _
  // Predicated region
  $region26: #{x_disaster_ie_forward.1} parent=0 // pred_check
    _
  $region27: #{x_disaster_ie_forward.1} parent=0 // pred_check_branch
    %36 = sbr.rel (0) target = $region29
  $region28: #{x_disaster_ie_forward.1} parent=0 // pred_region
    _
  $region29: #{x_disaster_ie_forward.1} parent=0 // pred_fallthru
    _
  // Predicated region
  $region30: #{x_disaster_ie_forward.1} parent=0 // pred_check
    _
  $region31: #{x_disaster_ie_forward.1} parent=0 // pred_check_branch
    %38 = sbr.rel (0) target = $region33
  $region32: #{x_disaster_ie_forward.1} parent=0 // pred_region
    _
  $region33: #{x_disaster_ie_forward.1} parent=0 // pred_fallthru
    _
  // Predicated region
  $region34: #{x_disaster_ie_forward.1} parent=0 // pred_check
    _
  $region35: #{x_disaster_ie_forward.1} parent=0 // pred_check_branch
    %40 = sbr.rel (0) target = $region37
  $region36: #{x_disaster_ie_forward.1} parent=0 // pred_region
    _
  $region37: #{x_disaster_ie_forward.1} parent=0 // pred_fallthru
    _
  // Predicated region
  $region38: #{x_disaster_ie_forward.1} parent=0 // pred_check
    _
  $region39: #{x_disaster_ie_forward.1} parent=0 // pred_check_branch
    %42 = sbr.rel (0) target = $region41
  $region40: #{x_disaster_ie_forward.1} parent=0 // pred_region
    _
  $region41: #{x_disaster_ie_forward.1} parent=0 // pred_fallthru
    _
  // Predicated region
  $region42: #{x_disaster_ie_forward.1} parent=0 // pred_check
    _
  $region43: #{x_disaster_ie_forward.1} parent=0 // pred_check_branch
    %44 = sbr.rel (0) target = $region45
  $region44: #{x_disaster_ie_forward.1} parent=0 // pred_region
    _
  $region45: #{x_disaster_ie_forward.1} parent=0 // pred_fallthru
    _
  // Predicated region
  $region46: #{x_disaster_ie_forward.1} parent=0 // pred_check
    _
  $region47: #{x_disaster_ie_forward.1} parent=0 // pred_check_branch
    %46 = sbr.rel (0) target = $region49
  $region48: #{x_disaster_ie_forward.1} parent=0 // pred_region
    _
  $region49: #{x_disaster_ie_forward.1} parent=0 // pred_fallthru
    _
  // Predicated region
  $region50: #{x_disaster_ie_forward.1} parent=0 // pred_check
    _
  $region51: #{x_disaster_ie_forward.1} parent=0 // pred_check_branch
    %48 = sbr.rel (0) target = $region53
  $region52: #{x_disaster_ie_forward.1} parent=0 // pred_region
    _
  $region53: #{x_disaster_ie_forward.1} parent=0 // pred_fallthru
    _
  // Predicated region
  $region54: #{x_disaster_ie_forward.1} parent=0 // pred_check
    _
  $region55: #{x_disaster_ie_forward.1} parent=0 // pred_check_branch
    %50 = sbr.rel (0) target = $region57
  $region56: #{x_disaster_ie_forward.1} parent=0 // pred_region
    _
  $region57: #{x_disaster_ie_forward.1} parent=0 // pred_fallthru
    _
  // Predicated region
  $region58: #{x_disaster_ie_forward.1} parent=0 // pred_check
    _
  $region59: #{x_disaster_ie_forward.1} parent=0 // pred_check_branch
    %52 = sbr.rel (0) target = $region61
  $region60: #{x_disaster_ie_forward.1} parent=0 // pred_region
    _
  $region61: #{x_disaster_ie_forward.1} parent=0 // pred_fallthru
    _
  // Predicated region
  $region62: #{x_disaster_ie_forward.1} parent=0 // pred_check
    _
  $region63: #{x_disaster_ie_forward.1} parent=0 // pred_check_branch
    %54 = sbr.rel (0) target = $region65
  $region64: #{x_disaster_ie_forward.1} parent=0 // pred_region
    _
  $region65: #{x_disaster_ie_forward.1} parent=0 // pred_fallthru
    _
  // Predicated region
  $region66: #{x_disaster_ie_forward.1} parent=0 // pred_check
    _
  $region67: #{x_disaster_ie_forward.1} parent=0 // pred_check_branch
    %56 = sbr.rel (0) target = $region69
  $region68: #{x_disaster_ie_forward.1} parent=0 // pred_region
    _
  $region69: #{x_disaster_ie_forward.1} parent=0 // pred_fallthru
    _
  // Predicated region
  $region70: #{x_disaster_ie_forward.1} parent=0 // pred_check
    _
  $region71: #{x_disaster_ie_forward.1} parent=0 // pred_check_branch
    %58 = sbr.rel (0) target = $region73
  $region72: #{x_disaster_ie_forward.1} parent=0 // pred_region
    _
  $region73: #{x_disaster_ie_forward.1} parent=0 // pred_fallthru
    _
  %v59 = vld [vmem:[%s0] sm:$0xff]
  %v60 = vld [vmem:[%s0 + $0x8] sm:$0xff]
  %v61 = vld [vmem:[%s2] sm:$0x1]
  %v62 = vld [vmem:[%s3] sm:$0x1]
  %vm63 = vcmask 261120
  %v64 = vsel %vm63, %v59, 0.0
  %65 = vadd.xlane.f32.xlu0 %v64
  %v66 = vpop.xlane.xlu0 %65
  %v67 = vsel %vm63, %v60, 0.0
  %68 = vadd.xlane.f32.xlu0 %v67
  %v69 = vpop.xlane.xlu0 %68
  %v70 = vrcp.pop 32.0
  %v71 = vmul.f32 %v66, %v70
  %v72 = vmul.f32 %v69, %v70
  %v73 = vsub.f32 %v59, %v71
  %v74 = vsub.f32 %v60, %v72
  %v75 = vmul.f32 %v73, %v73
  %v76 = vmul.f32 %v74, %v74
  %v77 = vsel %vm63, %v75, 0.0
  %78 = vadd.xlane.f32.xlu0 %v77
  %v79 = vpop.xlane.xlu0 %78
  %v80 = vsel %vm63, %v76, 0.0
  %81 = vadd.xlane.f32.xlu0 %v80
  %v82 = vpop.xlane.xlu0 %81
  %v83 = vmul.f32 %v79, %v70
  %v84 = vmul.f32 %v82, %v70
  %v85 = vadd.f32 %v83, 1e-05
  %v86 = vadd.f32 %v84, 1e-05
  %v87 = vrsqrt.pop %v85
  %v88 = vrsqrt.pop %v86
  %v89 = vmul.f32 %v73, %v87
  %v90 = vmul.f32 %v74, %v88
  %v92 = vlaneseq
  %v93 = vshrl.u32 %v92, 7
  %v94 = vsub.s32 0, %v93
  %v95 = vrot.slane %v61, %v94
  %v97 = vmul.f32 %v89, %v95
  %v98 = vmul.f32 %v90, %v95
  %v100 = vlaneseq
  %v101 = vshrl.u32 %v100, 7
  %v102 = vsub.s32 0, %v101
  %v103 = vrot.slane %v62, %v102
  %v105 = vadd.f32 %v97, %v103
  %v106 = vadd.f32 %v98, %v103
  %v107 = vld [vmem:[%s1] sm:$0x3]
  %v108 = vld [vmem:[%s4] sm:$0xff]
  %v109 = vld [vmem:[%s4 + $0x8] sm:$0xff]
  %v110 = vld [vmem:[%s4 + $0x10] sm:$0xff]
  %v111 = vld [vmem:[%s4 + $0x18] sm:$0xff]
  %v112 = vld [vmem:[%s5] sm:$0x1]
  %v114 = vlaneseq
  %v115 = vshrl.u32 %v114, 7
  %v116 = vsub.s32 0, %v115
  %v117 = vrot.slane %v112, %v116
  %v120 = vsel %vm63, %v105, 0
  %v123 = vsel %vm63, %v106, 0
  %125 = vmatprep.subr.mxu0 0.0
  %126 = vmatpush1.msra.mxu0 0.0
  %127 = vmatprep.subr.mxu0 0.0
  %128 = vmatpush1.msra.mxu0 0.0
  %129 = vmatprep.subr.mxu0 0.0
  %130 = vmatpush1.msra.mxu0 0.0
  %131 = vmatprep.subr.mxu0 0.0
  %132 = vmatpush1.msra.mxu0 0.0
  %133 = vmatprep.subr.mxu0 0.0
  %134 = vmatpush1.msra.mxu0 0.0
  %135 = vmatprep.subr.mxu0 0.0
  %136 = vmatpush1.msra.mxu0 0.0
  %137 = vmatprep.subr.mxu0 0.0
  %138 = vmatpush1.msra.mxu0 0.0
  %139 = vmatprep.subr.mxu0 0.0
  %140 = vmatpush1.msra.mxu0 0.0
  %141 = vmatprep.subr.mxu0 0.0
  %142 = vmatpush1.msra.mxu0 0.0
  %143 = vmatprep.subr.mxu0 0.0
  %144 = vmatpush1.msra.mxu0 0.0
  %145 = vmatprep.subr.mxu0 0.0
  %146 = vmatpush1.msra.mxu0 0.0
  %147 = vmatprep.subr.mxu0 0.0
  %148 = vmatpush1.msra.mxu0 0.0
  %149 = vmatprep.subr.mxu0 0.0
  %150 = vmatpush1.msra.mxu0 %v111
  %151 = vmatprep.subr.mxu0 0.0
  %152 = vmatpush1.msra.mxu0 %v110
  %153 = vmatprep.subr.mxu0 0.0
  %154 = vmatpush1.msra.mxu0 %v109
  %155 = vmatprep.subr.mxu0 0.0
  %156 = vmatpush1.msra.mxu0 %v108
  %157 = vmatprep.subr.mxu0 0.0
  %158 = vmatpush2.msra.mxu0 0.0
  %159 = vmatprep.subr.mxu0 0.0
  %160 = vmatpush2.msra.mxu0 0.0
  %161 = vmatprep.subr.mxu0 0.0
  %162 = vmatpush2.msra.mxu0 0.0
  %163 = vmatprep.subr.mxu0 0.0
  %164 = vmatpush2.msra.mxu0 0.0
  %165 = vmatprep.subr.mxu0 0.0
  %166 = vmatpush2.msra.mxu0 0.0
  %167 = vmatprep.subr.mxu0 0.0
  %168 = vmatpush2.msra.mxu0 0.0
  %169 = vmatprep.subr.mxu0 0.0
  %170 = vmatpush2.msra.mxu0 0.0
  %171 = vmatprep.subr.mxu0 0.0
  %172 = vmatpush2.msra.mxu0 0.0
  %173 = vmatprep.subr.mxu0 0.0
  %174 = vmatpush2.msra.mxu0 0.0
  %175 = vmatprep.subr.mxu0 0.0
  %176 = vmatpush2.msra.mxu0 0.0
  %177 = vmatprep.subr.mxu0 0.0
  %178 = vmatpush2.msra.mxu0 0.0
  %179 = vmatprep.subr.mxu0 0.0
  %180 = vmatpush2.msra.mxu0 0.0
  %181 = vmatprep.subr.mxu0 0.0
  %182 = vmatpush2.msra.mxu0 0.0
  %183 = vmatprep.subr.mxu0 0.0
  %184 = vmatpush2.msra.mxu0 0.0
  %185 = vmatprep.subr.mxu0 0.0
  %186 = vmatpush2.msra.mxu0 0.0
  %187 = vmatprep.subr.mxu0 0.0
  %188 = vmatpush2.msra.mxu0 0.0
  %189 = vmatprep.mubr.f32.mxu0 0.0
  %190 = vmatmul.mubr.f32.gmra.mxu0 %v120
  %v191 = vpop.f32.mrf.mxu0
  %v192 = vadd.f32 %v117, %v191
  %v193 = vpop.f32.mrf.mxu0
  %194 = vmatprep.mubr.f32.mxu0 0.0
  %195 = vmatmul.mubr.f32.gmra.mxu0 %v123
  %v196 = vpop.f32.mrf.mxu0
  %v197 = vadd.f32 %v117, %v196
  %v198 = vpop.f32.mrf.mxu0
  %199 = vdwg.mxu0
  %201 = vrot.lane.b32.xlu0 %v192, 96
  %v202 = vpop.permute.xlu0 %201
  %vm203 = vcmask 130048
  %v204 = vsel %vm203, %v192, 0
  %v206 = vsel %vm203, %v202, 0
  %208 = vmatprep.subr.mxu0 0.0
  %209 = vmatpush1.xpose.msra.mxu0 0.0
  %210 = vmatprep.subr.mxu0 0.0
  %211 = vmatpush1.xpose.msra.mxu0 0.0
  %212 = vmatprep.subr.mxu0 0.0
  %213 = vmatpush1.xpose.msra.mxu0 0.0
  %214 = vmatprep.subr.mxu0 0.0
  %215 = vmatpush1.xpose.msra.mxu0 0.0
  %216 = vmatprep.subr.mxu0 0.0
  %217 = vmatpush1.xpose.msra.mxu0 0.0
  %218 = vmatprep.subr.mxu0 0.0
  %219 = vmatpush1.xpose.msra.mxu0 0.0
  %220 = vmatprep.subr.mxu0 0.0
  %221 = vmatpush1.xpose.msra.mxu0 0.0
  %222 = vmatprep.subr.mxu0 0.0
  %223 = vmatpush1.xpose.msra.mxu0 0.0
  %224 = vmatprep.subr.mxu0 0.0
  %225 = vmatpush1.xpose.msra.mxu0 0.0
  %226 = vmatprep.subr.mxu0 0.0
  %227 = vmatpush1.xpose.msra.mxu0 0.0
  %228 = vmatprep.subr.mxu0 0.0
  %229 = vmatpush1.xpose.msra.mxu0 0.0
  %230 = vmatprep.subr.mxu0 0.0
  %231 = vmatpush1.xpose.msra.mxu0 0.0
  %232 = vmatprep.subr.mxu0 0.0
  %233 = vmatpush1.xpose.msra.mxu0 0.0
  %234 = vmatprep.subr.mxu0 0.0
  %235 = vmatpush1.xpose.msra.mxu0 0.0
  %236 = vmatprep.subr.mxu0 0.0
  %237 = vmatpush1.xpose.msra.mxu0 0.0
  %238 = vmatprep.subr.mxu0 0.0
  %239 = vmatpush1.xpose.msra.mxu0 %v206
  %240 = vmatprep.subr.mxu0 0.0
  %241 = vmatpush2.xpose.msra.mxu0 0.0
  %242 = vmatprep.subr.mxu0 0.0
  %243 = vmatpush2.xpose.msra.mxu0 0.0
  %244 = vmatprep.subr.mxu0 0.0
  %245 = vmatpush2.xpose.msra.mxu0 0.0
  %246 = vmatprep.subr.mxu0 0.0
  %247 = vmatpush2.xpose.msra.mxu0 0.0
  %248 = vmatprep.subr.mxu0 0.0
  %249 = vmatpush2.xpose.msra.mxu0 0.0
  %250 = vmatprep.subr.mxu0 0.0
  %251 = vmatpush2.xpose.msra.mxu0 0.0
  %252 = vmatprep.subr.mxu0 0.0
  %253 = vmatpush2.xpose.msra.mxu0 0.0
  %254 = vmatprep.subr.mxu0 0.0
  %255 = vmatpush2.xpose.msra.mxu0 0.0
  %256 = vmatprep.subr.mxu0 0.0
  %257 = vmatpush2.xpose.msra.mxu0 0.0
  %258 = vmatprep.subr.mxu0 0.0
  %259 = vmatpush2.xpose.msra.mxu0 0.0
  %260 = vmatprep.subr.mxu0 0.0
  %261 = vmatpush2.xpose.msra.mxu0 0.0
  %262 = vmatprep.subr.mxu0 0.0
  %263 = vmatpush2.xpose.msra.mxu0 0.0
  %264 = vmatprep.subr.mxu0 0.0
  %265 = vmatpush2.xpose.msra.mxu0 0.0
  %266 = vmatprep.subr.mxu0 0.0
  %267 = vmatpush2.xpose.msra.mxu0 0.0
  %268 = vmatprep.subr.mxu0 0.0
  %269 = vmatpush2.xpose.msra.mxu0 0.0
  %270 = vmatprep.subr.mxu0 0.0
  %271 = vmatpush2.xpose.msra.mxu0 0.0
  %272 = vmatprep.mubr.f32.mxu0 0.0
  %273 = vmatmul.mubr.f32.gmra.mxu0 %v204
  %v274 = vpop.f32.mrf.mxu0
  %v275 = vadd.f32 0.0, %v274
  %v276 = vpop.f32.mrf.mxu0
  %277 = vdwg.mxu0
  %v278 = vmul.f32 %v275, 0.25
  %v279 = vlaneseq
  %v280 = vshrl.u32 %v279, 7
  %v281 = vsub.s32 0, %v280
  %v282 = vrot.slane %v107, %v281
  %v283 = vadd.f32 %v278, %v282
  %vm284 = vcmask 64512
  %v285 = vsel %vm284, %v283, -inf
  %286 = vmax.xlane.f32.xlu0 %v285
  %v287 = vpop.xlane.xlu0 %286
  %v288 = vsub.f32 %v283, %v287
  %v289 = vmul.f32 %v288, 1.442695
  %v290 = vpow.pop %v289
  %v291 = vsel %vm284, %v290, 0.0
  %292 = vadd.xlane.f32.xlu0 %v291
  %v293 = vpop.xlane.xlu0 %292
  %v294 = vrcp.pop %v293
  %v295 = vmul.f32 %v290, %v294
  %296 = vrot.lane.b32.xlu0 %v192, 64
  %v297 = vpop.permute.xlu0 %296
  %v300 = vsel %vm284, %v295, 0
  %302 = vmatprep.subr.mxu0 0.0
  %303 = vmatpush1.msra.mxu0 0.0
  %304 = vmatprep.subr.mxu0 0.0
  %305 = vmatpush1.msra.mxu0 0.0
  %306 = vmatprep.subr.mxu0 0.0
  %307 = vmatpush1.msra.mxu0 0.0
  %308 = vmatprep.subr.mxu0 0.0
  %309 = vmatpush1.msra.mxu0 0.0
  %310 = vmatprep.subr.mxu0 0.0
  %311 = vmatpush1.msra.mxu0 0.0
  %312 = vmatprep.subr.mxu0 0.0
  %313 = vmatpush1.msra.mxu0 0.0
  %314 = vmatprep.subr.mxu0 0.0
  %315 = vmatpush1.msra.mxu0 0.0
  %316 = vmatprep.subr.mxu0 0.0
  %317 = vmatpush1.msra.mxu0 0.0
  %318 = vmatprep.subr.mxu0 0.0
  %319 = vmatpush1.msra.mxu0 0.0
  %320 = vmatprep.subr.mxu0 0.0
  %321 = vmatpush1.msra.mxu0 0.0
  %322 = vmatprep.subr.mxu0 0.0
  %323 = vmatpush1.msra.mxu0 0.0
  %324 = vmatprep.subr.mxu0 0.0
  %325 = vmatpush1.msra.mxu0 0.0
  %326 = vmatprep.subr.mxu0 0.0
  %327 = vmatpush1.msra.mxu0 0.0
  %328 = vmatprep.subr.mxu0 0.0
  %329 = vmatpush1.msra.mxu0 0.0
  %330 = vmatprep.subr.mxu0 0.0
  %331 = vmatpush1.msra.mxu0 0.0
  %332 = vmatprep.subr.mxu0 0.0
  %333 = vmatpush1.msra.mxu0 %v297
  %334 = vmatprep.subr.mxu0 0.0
  %335 = vmatpush2.msra.mxu0 0.0
  %336 = vmatprep.subr.mxu0 0.0
  %337 = vmatpush2.msra.mxu0 0.0
  %338 = vmatprep.subr.mxu0 0.0
  %339 = vmatpush2.msra.mxu0 0.0
  %340 = vmatprep.subr.mxu0 0.0
  %341 = vmatpush2.msra.mxu0 0.0
  %342 = vmatprep.subr.mxu0 0.0
  %343 = vmatpush2.msra.mxu0 0.0
  %344 = vmatprep.subr.mxu0 0.0
  %345 = vmatpush2.msra.mxu0 0.0
  %346 = vmatprep.subr.mxu0 0.0
  %347 = vmatpush2.msra.mxu0 0.0
  %348 = vmatprep.subr.mxu0 0.0
  %349 = vmatpush2.msra.mxu0 0.0
  %350 = vmatprep.subr.mxu0 0.0
  %351 = vmatpush2.msra.mxu0 0.0
  %352 = vmatprep.subr.mxu0 0.0
  %353 = vmatpush2.msra.mxu0 0.0
  %354 = vmatprep.subr.mxu0 0.0
  %355 = vmatpush2.msra.mxu0 0.0
  %356 = vmatprep.subr.mxu0 0.0
  %357 = vmatpush2.msra.mxu0 0.0
  %358 = vmatprep.subr.mxu0 0.0
  %359 = vmatpush2.msra.mxu0 0.0
  %360 = vmatprep.subr.mxu0 0.0
  %361 = vmatpush2.msra.mxu0 0.0
  %362 = vmatprep.subr.mxu0 0.0
  %363 = vmatpush2.msra.mxu0 0.0
  %364 = vmatprep.subr.mxu0 0.0
  %365 = vmatpush2.msra.mxu0 0.0
  %366 = vmatprep.mubr.f32.mxu0 0.0
  %367 = vmatmul.mubr.f32.gmra.mxu0 %v300
  %v368 = vpop.f32.mrf.mxu0
  %v369 = vadd.f32 0.0, %v368
  %v370 = vpop.f32.mrf.mxu0
  %371 = vdwg.mxu0
  %372 = vrot.lane.b32.xlu0 %v192, 112
  %v373 = vpop.permute.xlu0 %372
  %374 = vrot.lane.b32.xlu0 %v192, 80
  %v375 = vpop.permute.xlu0 %374
  %v376 = vsel %vm203, %v373, 0
  %v378 = vsel %vm203, %v375, 0
  %380 = vmatprep.subr.mxu0 0.0
  %381 = vmatpush1.xpose.msra.mxu0 0.0
  %382 = vmatprep.subr.mxu0 0.0
  %383 = vmatpush1.xpose.msra.mxu0 0.0
  %384 = vmatprep.subr.mxu0 0.0
  %385 = vmatpush1.xpose.msra.mxu0 0.0
  %386 = vmatprep.subr.mxu0 0.0
  %387 = vmatpush1.xpose.msra.mxu0 0.0
  %388 = vmatprep.subr.mxu0 0.0
  %389 = vmatpush1.xpose.msra.mxu0 0.0
  %390 = vmatprep.subr.mxu0 0.0
  %391 = vmatpush1.xpose.msra.mxu0 0.0
  %392 = vmatprep.subr.mxu0 0.0
  %393 = vmatpush1.xpose.msra.mxu0 0.0
  %394 = vmatprep.subr.mxu0 0.0
  %395 = vmatpush1.xpose.msra.mxu0 0.0
  %396 = vmatprep.subr.mxu0 0.0
  %397 = vmatpush1.xpose.msra.mxu0 0.0
  %398 = vmatprep.subr.mxu0 0.0
  %399 = vmatpush1.xpose.msra.mxu0 0.0
  %400 = vmatprep.subr.mxu0 0.0
  %401 = vmatpush1.xpose.msra.mxu0 0.0
  %402 = vmatprep.subr.mxu0 0.0
  %403 = vmatpush1.xpose.msra.mxu0 0.0
  %404 = vmatprep.subr.mxu0 0.0
  %405 = vmatpush1.xpose.msra.mxu0 0.0
  %406 = vmatprep.subr.mxu0 0.0
  %407 = vmatpush1.xpose.msra.mxu0 0.0
  %408 = vmatprep.subr.mxu0 0.0
  %409 = vmatpush1.xpose.msra.mxu0 0.0
  %410 = vmatprep.subr.mxu0 0.0
  %411 = vmatpush1.xpose.msra.mxu0 %v378
  %412 = vmatprep.subr.mxu0 0.0
  %413 = vmatpush2.xpose.msra.mxu0 0.0
  %414 = vmatprep.subr.mxu0 0.0
  %415 = vmatpush2.xpose.msra.mxu0 0.0
  %416 = vmatprep.subr.mxu0 0.0
  %417 = vmatpush2.xpose.msra.mxu0 0.0
  %418 = vmatprep.subr.mxu0 0.0
  %419 = vmatpush2.xpose.msra.mxu0 0.0
  %420 = vmatprep.subr.mxu0 0.0
  %421 = vmatpush2.xpose.msra.mxu0 0.0
  %422 = vmatprep.subr.mxu0 0.0
  %423 = vmatpush2.xpose.msra.mxu0 0.0
  %424 = vmatprep.subr.mxu0 0.0
  %425 = vmatpush2.xpose.msra.mxu0 0.0
  %426 = vmatprep.subr.mxu0 0.0
  %427 = vmatpush2.xpose.msra.mxu0 0.0
  %428 = vmatprep.subr.mxu0 0.0
  %429 = vmatpush2.xpose.msra.mxu0 0.0
  %430 = vmatprep.subr.mxu0 0.0
  %431 = vmatpush2.xpose.msra.mxu0 0.0
  %432 = vmatprep.subr.mxu0 0.0
  %433 = vmatpush2.xpose.msra.mxu0 0.0
  %434 = vmatprep.subr.mxu0 0.0
  %435 = vmatpush2.xpose.msra.mxu0 0.0
  %436 = vmatprep.subr.mxu0 0.0
  %437 = vmatpush2.xpose.msra.mxu0 0.0
  %438 = vmatprep.subr.mxu0 0.0
  %439 = vmatpush2.xpose.msra.mxu0 0.0
  %440 = vmatprep.subr.mxu0 0.0
  %441 = vmatpush2.xpose.msra.mxu0 0.0
  %442 = vmatprep.subr.mxu0 0.0
  %443 = vmatpush2.xpose.msra.mxu0 0.0
  %444 = vmatprep.mubr.f32.mxu0 0.0
  %445 = vmatmul.mubr.f32.gmra.mxu0 %v376
  %v446 = vpop.f32.mrf.mxu0
  %v447 = vadd.f32 0.0, %v446
  %v448 = vpop.f32.mrf.mxu0
  %449 = vdwg.mxu0
  %v450 = vmul.f32 %v447, 0.25
  %v451 = vadd.f32 %v450, %v282
  %v452 = vsel %vm284, %v451, -inf
  %453 = vmax.xlane.f32.xlu0 %v452
  %v454 = vpop.xlane.xlu0 %453
  %v455 = vsub.f32 %v451, %v454
  %v456 = vmul.f32 %v455, 1.442695
  %v457 = vpow.pop %v456
  %v458 = vsel %vm284, %v457, 0.0
  %459 = vadd.xlane.f32.xlu0 %v458
  %v460 = vpop.xlane.xlu0 %459
  %v461 = vrcp.pop %v460
  %v462 = vmul.f32 %v457, %v461
  %463 = vrot.lane.b32.xlu0 %v192, 48
  %v464 = vpop.permute.xlu0 %463
  %v467 = vsel %vm284, %v462, 0
  %469 = vmatprep.subr.mxu0 0.0
  %470 = vmatpush1.msra.mxu0 0.0
  %471 = vmatprep.subr.mxu0 0.0
  %472 = vmatpush1.msra.mxu0 0.0
  %473 = vmatprep.subr.mxu0 0.0
  %474 = vmatpush1.msra.mxu0 0.0
  %475 = vmatprep.subr.mxu0 0.0
  %476 = vmatpush1.msra.mxu0 0.0
  %477 = vmatprep.subr.mxu0 0.0
  %478 = vmatpush1.msra.mxu0 0.0
  %479 = vmatprep.subr.mxu0 0.0
  %480 = vmatpush1.msra.mxu0 0.0
  %481 = vmatprep.subr.mxu0 0.0
  %482 = vmatpush1.msra.mxu0 0.0
  %483 = vmatprep.subr.mxu0 0.0
  %484 = vmatpush1.msra.mxu0 0.0
  %485 = vmatprep.subr.mxu0 0.0
  %486 = vmatpush1.msra.mxu0 0.0
  %487 = vmatprep.subr.mxu0 0.0
  %488 = vmatpush1.msra.mxu0 0.0
  %489 = vmatprep.subr.mxu0 0.0
  %490 = vmatpush1.msra.mxu0 0.0
  %491 = vmatprep.subr.mxu0 0.0
  %492 = vmatpush1.msra.mxu0 0.0
  %493 = vmatprep.subr.mxu0 0.0
  %494 = vmatpush1.msra.mxu0 0.0
  %495 = vmatprep.subr.mxu0 0.0
  %496 = vmatpush1.msra.mxu0 0.0
  %497 = vmatprep.subr.mxu0 0.0
  %498 = vmatpush1.msra.mxu0 0.0
  %499 = vmatprep.subr.mxu0 0.0
  %500 = vmatpush1.msra.mxu0 %v464
  %501 = vmatprep.subr.mxu0 0.0
  %502 = vmatpush2.msra.mxu0 0.0
  %503 = vmatprep.subr.mxu0 0.0
  %504 = vmatpush2.msra.mxu0 0.0
  %505 = vmatprep.subr.mxu0 0.0
  %506 = vmatpush2.msra.mxu0 0.0
  %507 = vmatprep.subr.mxu0 0.0
  %508 = vmatpush2.msra.mxu0 0.0
  %509 = vmatprep.subr.mxu0 0.0
  %510 = vmatpush2.msra.mxu0 0.0
  %511 = vmatprep.subr.mxu0 0.0
  %512 = vmatpush2.msra.mxu0 0.0
  %513 = vmatprep.subr.mxu0 0.0
  %514 = vmatpush2.msra.mxu0 0.0
  %515 = vmatprep.subr.mxu0 0.0
  %516 = vmatpush2.msra.mxu0 0.0
  %517 = vmatprep.subr.mxu0 0.0
  %518 = vmatpush2.msra.mxu0 0.0
  %519 = vmatprep.subr.mxu0 0.0
  %520 = vmatpush2.msra.mxu0 0.0
  %521 = vmatprep.subr.mxu0 0.0
  %522 = vmatpush2.msra.mxu0 0.0
  %523 = vmatprep.subr.mxu0 0.0
  %524 = vmatpush2.msra.mxu0 0.0
  %525 = vmatprep.subr.mxu0 0.0
  %526 = vmatpush2.msra.mxu0 0.0
  %527 = vmatprep.subr.mxu0 0.0
  %528 = vmatpush2.msra.mxu0 0.0
  %529 = vmatprep.subr.mxu0 0.0
  %530 = vmatpush2.msra.mxu0 0.0
  %531 = vmatprep.subr.mxu0 0.0
  %532 = vmatpush2.msra.mxu0 0.0
  %533 = vmatprep.mubr.f32.mxu0 0.0
  %534 = vmatmul.mubr.f32.gmra.mxu0 %v467
  %v535 = vpop.f32.mrf.mxu0
  %v536 = vadd.f32 0.0, %v535
  %v537 = vpop.f32.mrf.mxu0
  %538 = vdwg.mxu0
  %540 = vrot.lane.b32.xlu0 %v536, 16
  %v541 = vpop.permute.xlu0 %540
  %v543 = vsel %vm203, %v369, %v541
  %545 = vrot.lane.b32.xlu0 %v197, 96
  %v546 = vpop.permute.xlu0 %545
  %v547 = vsel %vm203, %v197, 0
  %v549 = vsel %vm203, %v546, 0
  %551 = vmatprep.subr.mxu0 0.0
  %552 = vmatpush1.xpose.msra.mxu0 0.0
  %553 = vmatprep.subr.mxu0 0.0
  %554 = vmatpush1.xpose.msra.mxu0 0.0
  %555 = vmatprep.subr.mxu0 0.0
  %556 = vmatpush1.xpose.msra.mxu0 0.0
  %557 = vmatprep.subr.mxu0 0.0
  %558 = vmatpush1.xpose.msra.mxu0 0.0
  %559 = vmatprep.subr.mxu0 0.0
  %560 = vmatpush1.xpose.msra.mxu0 0.0
  %561 = vmatprep.subr.mxu0 0.0
  %562 = vmatpush1.xpose.msra.mxu0 0.0
  %563 = vmatprep.subr.mxu0 0.0
  %564 = vmatpush1.xpose.msra.mxu0 0.0
  %565 = vmatprep.subr.mxu0 0.0
  %566 = vmatpush1.xpose.msra.mxu0 0.0
  %567 = vmatprep.subr.mxu0 0.0
  %568 = vmatpush1.xpose.msra.mxu0 0.0
  %569 = vmatprep.subr.mxu0 0.0
  %570 = vmatpush1.xpose.msra.mxu0 0.0
  %571 = vmatprep.subr.mxu0 0.0
  %572 = vmatpush1.xpose.msra.mxu0 0.0
  %573 = vmatprep.subr.mxu0 0.0
  %574 = vmatpush1.xpose.msra.mxu0 0.0
  %575 = vmatprep.subr.mxu0 0.0
  %576 = vmatpush1.xpose.msra.mxu0 0.0
  %577 = vmatprep.subr.mxu0 0.0
  %578 = vmatpush1.xpose.msra.mxu0 0.0
  %579 = vmatprep.subr.mxu0 0.0
  %580 = vmatpush1.xpose.msra.mxu0 0.0
  %581 = vmatprep.subr.mxu0 0.0
  %582 = vmatpush1.xpose.msra.mxu0 %v549
  %583 = vmatprep.subr.mxu0 0.0
  %584 = vmatpush2.xpose.msra.mxu0 0.0
  %585 = vmatprep.subr.mxu0 0.0
  %586 = vmatpush2.xpose.msra.mxu0 0.0
  %587 = vmatprep.subr.mxu0 0.0
  %588 = vmatpush2.xpose.msra.mxu0 0.0
  %589 = vmatprep.subr.mxu0 0.0
  %590 = vmatpush2.xpose.msra.mxu0 0.0
  %591 = vmatprep.subr.mxu0 0.0
  %592 = vmatpush2.xpose.msra.mxu0 0.0
  %593 = vmatprep.subr.mxu0 0.0
  %594 = vmatpush2.xpose.msra.mxu0 0.0
  %595 = vmatprep.subr.mxu0 0.0
  %596 = vmatpush2.xpose.msra.mxu0 0.0
  %597 = vmatprep.subr.mxu0 0.0
  %598 = vmatpush2.xpose.msra.mxu0 0.0
  %599 = vmatprep.subr.mxu0 0.0
  %600 = vmatpush2.xpose.msra.mxu0 0.0
  %601 = vmatprep.subr.mxu0 0.0
  %602 = vmatpush2.xpose.msra.mxu0 0.0
  %603 = vmatprep.subr.mxu0 0.0
  %604 = vmatpush2.xpose.msra.mxu0 0.0
  %605 = vmatprep.subr.mxu0 0.0
  %606 = vmatpush2.xpose.msra.mxu0 0.0
  %607 = vmatprep.subr.mxu0 0.0
  %608 = vmatpush2.xpose.msra.mxu0 0.0
  %609 = vmatprep.subr.mxu0 0.0
  %610 = vmatpush2.xpose.msra.mxu0 0.0
  %611 = vmatprep.subr.mxu0 0.0
  %612 = vmatpush2.xpose.msra.mxu0 0.0
  %613 = vmatprep.subr.mxu0 0.0
  %614 = vmatpush2.xpose.msra.mxu0 0.0
  %615 = vmatprep.mubr.f32.mxu0 0.0
  %616 = vmatmul.mubr.f32.gmra.mxu0 %v547
  %v617 = vpop.f32.mrf.mxu0
  %v618 = vadd.f32 0.0, %v617
  %v619 = vpop.f32.mrf.mxu0
  %620 = vdwg.mxu0
  %v621 = vmul.f32 %v618, 0.25
  %v622 = vlaneseq
  %v623 = vshrl.u32 %v622, 7
  %v624 = vsub.s32 1, %v623
  %v625 = vrot.slane %v107, %v624
  %v626 = vadd.f32 %v621, %v625
  %v627 = vsel %vm284, %v626, -inf
  %628 = vmax.xlane.f32.xlu0 %v627
  %v629 = vpop.xlane.xlu0 %628
  %v630 = vsub.f32 %v626, %v629
  %v631 = vmul.f32 %v630, 1.442695
  %v632 = vpow.pop %v631
  %v633 = vsel %vm284, %v632, 0.0
  %634 = vadd.xlane.f32.xlu0 %v633
  %v635 = vpop.xlane.xlu0 %634
  %v636 = vrcp.pop %v635
  %v637 = vmul.f32 %v632, %v636
  %638 = vrot.lane.b32.xlu0 %v197, 64
  %v639 = vpop.permute.xlu0 %638
  %v642 = vsel %vm284, %v637, 0
  %644 = vmatprep.subr.mxu0 0.0
  %645 = vmatpush1.msra.mxu0 0.0
  %646 = vmatprep.subr.mxu0 0.0
  %647 = vmatpush1.msra.mxu0 0.0
  %648 = vmatprep.subr.mxu0 0.0
  %649 = vmatpush1.msra.mxu0 0.0
  %650 = vmatprep.subr.mxu0 0.0
  %651 = vmatpush1.msra.mxu0 0.0
  %652 = vmatprep.subr.mxu0 0.0
  %653 = vmatpush1.msra.mxu0 0.0
  %654 = vmatprep.subr.mxu0 0.0
  %655 = vmatpush1.msra.mxu0 0.0
  %656 = vmatprep.subr.mxu0 0.0
  %657 = vmatpush1.msra.mxu0 0.0
  %658 = vmatprep.subr.mxu0 0.0
  %659 = vmatpush1.msra.mxu0 0.0
  %660 = vmatprep.subr.mxu0 0.0
  %661 = vmatpush1.msra.mxu0 0.0
  %662 = vmatprep.subr.mxu0 0.0
  %663 = vmatpush1.msra.mxu0 0.0
  %664 = vmatprep.subr.mxu0 0.0
  %665 = vmatpush1.msra.mxu0 0.0
  %666 = vmatprep.subr.mxu0 0.0
  %667 = vmatpush1.msra.mxu0 0.0
  %668 = vmatprep.subr.mxu0 0.0
  %669 = vmatpush1.msra.mxu0 0.0
  %670 = vmatprep.subr.mxu0 0.0
  %671 = vmatpush1.msra.mxu0 0.0
  %672 = vmatprep.subr.mxu0 0.0
  %673 = vmatpush1.msra.mxu0 0.0
  %674 = vmatprep.subr.mxu0 0.0
  %675 = vmatpush1.msra.mxu0 %v639
  %676 = vmatprep.subr.mxu0 0.0
  %677 = vmatpush2.msra.mxu0 0.0
  %678 = vmatprep.subr.mxu0 0.0
  %679 = vmatpush2.msra.mxu0 0.0
  %680 = vmatprep.subr.mxu0 0.0
  %681 = vmatpush2.msra.mxu0 0.0
  %682 = vmatprep.subr.mxu0 0.0
  %683 = vmatpush2.msra.mxu0 0.0
  %684 = vmatprep.subr.mxu0 0.0
  %685 = vmatpush2.msra.mxu0 0.0
  %686 = vmatprep.subr.mxu0 0.0
  %687 = vmatpush2.msra.mxu0 0.0
  %688 = vmatprep.subr.mxu0 0.0
  %689 = vmatpush2.msra.mxu0 0.0
  %690 = vmatprep.subr.mxu0 0.0
  %691 = vmatpush2.msra.mxu0 0.0
  %692 = vmatprep.subr.mxu0 0.0
  %693 = vmatpush2.msra.mxu0 0.0
  %694 = vmatprep.subr.mxu0 0.0
  %695 = vmatpush2.msra.mxu0 0.0
  %696 = vmatprep.subr.mxu0 0.0
  %697 = vmatpush2.msra.mxu0 0.0
  %698 = vmatprep.subr.mxu0 0.0
  %699 = vmatpush2.msra.mxu0 0.0
  %700 = vmatprep.subr.mxu0 0.0
  %701 = vmatpush2.msra.mxu0 0.0
  %702 = vmatprep.subr.mxu0 0.0
  %703 = vmatpush2.msra.mxu0 0.0
  %704 = vmatprep.subr.mxu0 0.0
  %705 = vmatpush2.msra.mxu0 0.0
  %706 = vmatprep.subr.mxu0 0.0
  %707 = vmatpush2.msra.mxu0 0.0
  %708 = vmatprep.mubr.f32.mxu0 0.0
  %709 = vmatmul.mubr.f32.gmra.mxu0 %v642
  %v710 = vpop.f32.mrf.mxu0
  %v711 = vadd.f32 0.0, %v710
  %v712 = vpop.f32.mrf.mxu0
  %713 = vdwg.mxu0
  %714 = vrot.lane.b32.xlu0 %v197, 112
  %v715 = vpop.permute.xlu0 %714
  %716 = vrot.lane.b32.xlu0 %v197, 80
  %v717 = vpop.permute.xlu0 %716
  %v718 = vsel %vm203, %v715, 0
  %v720 = vsel %vm203, %v717, 0
  %722 = vmatprep.subr.mxu0 0.0
  %723 = vmatpush1.xpose.msra.mxu0 0.0
  %724 = vmatprep.subr.mxu0 0.0
  %725 = vmatpush1.xpose.msra.mxu0 0.0
  %726 = vmatprep.subr.mxu0 0.0
  %727 = vmatpush1.xpose.msra.mxu0 0.0
  %728 = vmatprep.subr.mxu0 0.0
  %729 = vmatpush1.xpose.msra.mxu0 0.0
  %730 = vmatprep.subr.mxu0 0.0
  %731 = vmatpush1.xpose.msra.mxu0 0.0
  %732 = vmatprep.subr.mxu0 0.0
  %733 = vmatpush1.xpose.msra.mxu0 0.0
  %734 = vmatprep.subr.mxu0 0.0
  %735 = vmatpush1.xpose.msra.mxu0 0.0
  %736 = vmatprep.subr.mxu0 0.0
  %737 = vmatpush1.xpose.msra.mxu0 0.0
  %738 = vmatprep.subr.mxu0 0.0
  %739 = vmatpush1.xpose.msra.mxu0 0.0
  %740 = vmatprep.subr.mxu0 0.0
  %741 = vmatpush1.xpose.msra.mxu0 0.0
  %742 = vmatprep.subr.mxu0 0.0
  %743 = vmatpush1.xpose.msra.mxu0 0.0
  %744 = vmatprep.subr.mxu0 0.0
  %745 = vmatpush1.xpose.msra.mxu0 0.0
  %746 = vmatprep.subr.mxu0 0.0
  %747 = vmatpush1.xpose.msra.mxu0 0.0
  %748 = vmatprep.subr.mxu0 0.0
  %749 = vmatpush1.xpose.msra.mxu0 0.0
  %750 = vmatprep.subr.mxu0 0.0
  %751 = vmatpush1.xpose.msra.mxu0 0.0
  %752 = vmatprep.subr.mxu0 0.0
  %753 = vmatpush1.xpose.msra.mxu0 %v720
  %754 = vmatprep.subr.mxu0 0.0
  %755 = vmatpush2.xpose.msra.mxu0 0.0
  %756 = vmatprep.subr.mxu0 0.0
  %757 = vmatpush2.xpose.msra.mxu0 0.0
  %758 = vmatprep.subr.mxu0 0.0
  %759 = vmatpush2.xpose.msra.mxu0 0.0
  %760 = vmatprep.subr.mxu0 0.0
  %761 = vmatpush2.xpose.msra.mxu0 0.0
  %762 = vmatprep.subr.mxu0 0.0
  %763 = vmatpush2.xpose.msra.mxu0 0.0
  %764 = vmatprep.subr.mxu0 0.0
  %765 = vmatpush2.xpose.msra.mxu0 0.0
  %766 = vmatprep.subr.mxu0 0.0
  %767 = vmatpush2.xpose.msra.mxu0 0.0
  %768 = vmatprep.subr.mxu0 0.0
  %769 = vmatpush2.xpose.msra.mxu0 0.0
  %770 = vmatprep.subr.mxu0 0.0
  %771 = vmatpush2.xpose.msra.mxu0 0.0
  %772 = vmatprep.subr.mxu0 0.0
  %773 = vmatpush2.xpose.msra.mxu0 0.0
  %774 = vmatprep.subr.mxu0 0.0
  %775 = vmatpush2.xpose.msra.mxu0 0.0
  %776 = vmatprep.subr.mxu0 0.0
  %777 = vmatpush2.xpose.msra.mxu0 0.0
  %778 = vmatprep.subr.mxu0 0.0
  %779 = vmatpush2.xpose.msra.mxu0 0.0
  %780 = vmatprep.subr.mxu0 0.0
  %781 = vmatpush2.xpose.msra.mxu0 0.0
  %782 = vmatprep.subr.mxu0 0.0
  %783 = vmatpush2.xpose.msra.mxu0 0.0
  %784 = vmatprep.subr.mxu0 0.0
  %785 = vmatpush2.xpose.msra.mxu0 0.0
  %786 = vmatprep.mubr.f32.mxu0 0.0
  %787 = vmatmul.mubr.f32.gmra.mxu0 %v718
  %v788 = vpop.f32.mrf.mxu0
  %v789 = vadd.f32 0.0, %v788
  %v790 = vpop.f32.mrf.mxu0
  %791 = vdwg.mxu0
  %v792 = vmul.f32 %v789, 0.25
  %v793 = vadd.f32 %v792, %v625
  %v794 = vsel %vm284, %v793, -inf
  %795 = vmax.xlane.f32.xlu0 %v794
  %v796 = vpop.xlane.xlu0 %795
  %v797 = vsub.f32 %v793, %v796
  %v798 = vmul.f32 %v797, 1.442695
  %v799 = vpow.pop %v798
  %v800 = vsel %vm284, %v799, 0.0
  %801 = vadd.xlane.f32.xlu0 %v800
  %v802 = vpop.xlane.xlu0 %801
  %v803 = vrcp.pop %v802
  %v804 = vmul.f32 %v799, %v803
  %805 = vrot.lane.b32.xlu0 %v197, 48
  %v806 = vpop.permute.xlu0 %805
  %v809 = vsel %vm284, %v804, 0
  %811 = vmatprep.subr.mxu0 0.0
  %812 = vmatpush1.msra.mxu0 0.0
  %813 = vmatprep.subr.mxu0 0.0
  %814 = vmatpush1.msra.mxu0 0.0
  %815 = vmatprep.subr.mxu0 0.0
  %816 = vmatpush1.msra.mxu0 0.0
  %817 = vmatprep.subr.mxu0 0.0
  %818 = vmatpush1.msra.mxu0 0.0
  %819 = vmatprep.subr.mxu0 0.0
  %820 = vmatpush1.msra.mxu0 0.0
  %821 = vmatprep.subr.mxu0 0.0
  %822 = vmatpush1.msra.mxu0 0.0
  %823 = vmatprep.subr.mxu0 0.0
  %824 = vmatpush1.msra.mxu0 0.0
  %825 = vmatprep.subr.mxu0 0.0
  %826 = vmatpush1.msra.mxu0 0.0
  %827 = vmatprep.subr.mxu0 0.0
  %828 = vmatpush1.msra.mxu0 0.0
  %829 = vmatprep.subr.mxu0 0.0
  %830 = vmatpush1.msra.mxu0 0.0
  %831 = vmatprep.subr.mxu0 0.0
  %832 = vmatpush1.msra.mxu0 0.0
  %833 = vmatprep.subr.mxu0 0.0
  %834 = vmatpush1.msra.mxu0 0.0
  %835 = vmatprep.subr.mxu0 0.0
  %836 = vmatpush1.msra.mxu0 0.0
  %837 = vmatprep.subr.mxu0 0.0
  %838 = vmatpush1.msra.mxu0 0.0
  %839 = vmatprep.subr.mxu0 0.0
  %840 = vmatpush1.msra.mxu0 0.0
  %841 = vmatprep.subr.mxu0 0.0
  %842 = vmatpush1.msra.mxu0 %v806
  %843 = vmatprep.subr.mxu0 0.0
  %844 = vmatpush2.msra.mxu0 0.0
  %845 = vmatprep.subr.mxu0 0.0
  %846 = vmatpush2.msra.mxu0 0.0
  %847 = vmatprep.subr.mxu0 0.0
  %848 = vmatpush2.msra.mxu0 0.0
  %849 = vmatprep.subr.mxu0 0.0
  %850 = vmatpush2.msra.mxu0 0.0
  %851 = vmatprep.subr.mxu0 0.0
  %852 = vmatpush2.msra.mxu0 0.0
  %853 = vmatprep.subr.mxu0 0.0
  %854 = vmatpush2.msra.mxu0 0.0
  %855 = vmatprep.subr.mxu0 0.0
  %856 = vmatpush2.msra.mxu0 0.0
  %857 = vmatprep.subr.mxu0 0.0
  %858 = vmatpush2.msra.mxu0 0.0
  %859 = vmatprep.subr.mxu0 0.0
  %860 = vmatpush2.msra.mxu0 0.0
  %861 = vmatprep.subr.mxu0 0.0
  %862 = vmatpush2.msra.mxu0 0.0
  %863 = vmatprep.subr.mxu0 0.0
  %864 = vmatpush2.msra.mxu0 0.0
  %865 = vmatprep.subr.mxu0 0.0
  %866 = vmatpush2.msra.mxu0 0.0
  %867 = vmatprep.subr.mxu0 0.0
  %868 = vmatpush2.msra.mxu0 0.0
  %869 = vmatprep.subr.mxu0 0.0
  %870 = vmatpush2.msra.mxu0 0.0
  %871 = vmatprep.subr.mxu0 0.0
  %872 = vmatpush2.msra.mxu0 0.0
  %873 = vmatprep.subr.mxu0 0.0
  %874 = vmatpush2.msra.mxu0 0.0
  %875 = vmatprep.mubr.f32.mxu0 0.0
  %876 = vmatmul.mubr.f32.gmra.mxu0 %v809
  %v877 = vpop.f32.mrf.mxu0
  %v878 = vadd.f32 0.0, %v877
  %v879 = vpop.f32.mrf.mxu0
  %880 = vdwg.mxu0
  %882 = vrot.lane.b32.xlu0 %v878, 16
  %v883 = vpop.permute.xlu0 %882
  %v885 = vsel %vm203, %v711, %v883
  %v886 = vld [vmem:[%s6] sm:$0xff]
  %v887 = vld [vmem:[%s6 + $0x8] sm:$0xff]
  %v888 = vld [vmem:[%s6 + $0x10] sm:$0xff]
  %v889 = vld [vmem:[%s6 + $0x18] sm:$0xff]
  %v890 = vld [vmem:[%s7] sm:$0x1]
  %v892 = vlaneseq
  %v893 = vshrl.u32 %v892, 7
  %v894 = vsub.s32 0, %v893
  %v895 = vrot.slane %v890, %v894
  %v898 = vsel %vm63, %v543, 0
  %v901 = vsel %vm63, %v885, 0
  %903 = vmatprep.subr.mxu0 0.0
  %904 = vmatpush1.msra.mxu0 0.0
  %905 = vmatprep.subr.mxu0 0.0
  %906 = vmatpush1.msra.mxu0 0.0
  %907 = vmatprep.subr.mxu0 0.0
  %908 = vmatpush1.msra.mxu0 0.0
  %909 = vmatprep.subr.mxu0 0.0
  %910 = vmatpush1.msra.mxu0 0.0
  %911 = vmatprep.subr.mxu0 0.0
  %912 = vmatpush1.msra.mxu0 0.0
  %913 = vmatprep.subr.mxu0 0.0
  %914 = vmatpush1.msra.mxu0 0.0
  %915 = vmatprep.subr.mxu0 0.0
  %916 = vmatpush1.msra.mxu0 0.0
  %917 = vmatprep.subr.mxu0 0.0
  %918 = vmatpush1.msra.mxu0 0.0
  %919 = vmatprep.subr.mxu0 0.0
  %920 = vmatpush1.msra.mxu0 0.0
  %921 = vmatprep.subr.mxu0 0.0
  %922 = vmatpush1.msra.mxu0 0.0
  %923 = vmatprep.subr.mxu0 0.0
  %924 = vmatpush1.msra.mxu0 0.0
  %925 = vmatprep.subr.mxu0 0.0
  %926 = vmatpush1.msra.mxu0 0.0
  %927 = vmatprep.subr.mxu0 0.0
  %928 = vmatpush1.msra.mxu0 %v889
  %929 = vmatprep.subr.mxu0 0.0
  %930 = vmatpush1.msra.mxu0 %v888
  %931 = vmatprep.subr.mxu0 0.0
  %932 = vmatpush1.msra.mxu0 %v887
  %933 = vmatprep.subr.mxu0 0.0
  %934 = vmatpush1.msra.mxu0 %v886
  %935 = vmatprep.subr.mxu0 0.0
  %936 = vmatpush2.msra.mxu0 0.0
  %937 = vmatprep.subr.mxu0 0.0
  %938 = vmatpush2.msra.mxu0 0.0
  %939 = vmatprep.subr.mxu0 0.0
  %940 = vmatpush2.msra.mxu0 0.0
  %941 = vmatprep.subr.mxu0 0.0
  %942 = vmatpush2.msra.mxu0 0.0
  %943 = vmatprep.subr.mxu0 0.0
  %944 = vmatpush2.msra.mxu0 0.0
  %945 = vmatprep.subr.mxu0 0.0
  %946 = vmatpush2.msra.mxu0 0.0
  %947 = vmatprep.subr.mxu0 0.0
  %948 = vmatpush2.msra.mxu0 0.0
  %949 = vmatprep.subr.mxu0 0.0
  %950 = vmatpush2.msra.mxu0 0.0
  %951 = vmatprep.subr.mxu0 0.0
  %952 = vmatpush2.msra.mxu0 0.0
  %953 = vmatprep.subr.mxu0 0.0
  %954 = vmatpush2.msra.mxu0 0.0
  %955 = vmatprep.subr.mxu0 0.0
  %956 = vmatpush2.msra.mxu0 0.0
  %957 = vmatprep.subr.mxu0 0.0
  %958 = vmatpush2.msra.mxu0 0.0
  %959 = vmatprep.subr.mxu0 0.0
  %960 = vmatpush2.msra.mxu0 0.0
  %961 = vmatprep.subr.mxu0 0.0
  %962 = vmatpush2.msra.mxu0 0.0
  %963 = vmatprep.subr.mxu0 0.0
  %964 = vmatpush2.msra.mxu0 0.0
  %965 = vmatprep.subr.mxu0 0.0
  %966 = vmatpush2.msra.mxu0 0.0
  %967 = vmatprep.mubr.f32.mxu0 0.0
  %968 = vmatmul.mubr.f32.gmra.mxu0 %v898
  %v969 = vpop.f32.mrf.mxu0
  %v970 = vadd.f32 %v895, %v969
  %v971 = vpop.f32.mrf.mxu0
  %972 = vmatprep.mubr.f32.mxu0 0.0
  %973 = vmatmul.mubr.f32.gmra.mxu0 %v901
  %v974 = vpop.f32.mrf.mxu0
  %v975 = vadd.f32 %v895, %v974
  %v976 = vpop.f32.mrf.mxu0
  %977 = vdwg.mxu0
  %v978 = vadd.f32 %v970, %v105
  %v979 = vadd.f32 %v975, %v106
  %v980 = vld [vmem:[%s8] sm:$0x1]
  %v981 = vld [vmem:[%s9] sm:$0x1]
  %v982 = vsel %vm63, %v978, 0.0
  %983 = vadd.xlane.f32.xlu0 %v982
  %v984 = vpop.xlane.xlu0 %983
  %v985 = vsel %vm63, %v979, 0.0
  %986 = vadd.xlane.f32.xlu0 %v985
  %v987 = vpop.xlane.xlu0 %986
  %v988 = vmul.f32 %v984, %v70
  %v989 = vmul.f32 %v987, %v70
  %v990 = vsub.f32 %v978, %v988
  %v991 = vsub.f32 %v979, %v989
  %v992 = vmul.f32 %v990, %v990
  %v993 = vmul.f32 %v991, %v991
  %v994 = vsel %vm63, %v992, 0.0
  %995 = vadd.xlane.f32.xlu0 %v994
  %v996 = vpop.xlane.xlu0 %995
  %v997 = vsel %vm63, %v993, 0.0
  %998 = vadd.xlane.f32.xlu0 %v997
  %v999 = vpop.xlane.xlu0 %998
  %v1000 = vmul.f32 %v996, %v70
  %v1001 = vmul.f32 %v999, %v70
  %v1002 = vadd.f32 %v1000, 1e-05
  %v1003 = vadd.f32 %v1001, 1e-05
  %v1004 = vrsqrt.pop %v1002
  %v1005 = vrsqrt.pop %v1003
  %v1006 = vmul.f32 %v990, %v1004
  %v1007 = vmul.f32 %v991, %v1005
  %v1009 = vlaneseq
  %v1010 = vshrl.u32 %v1009, 7
  %v1011 = vsub.s32 0, %v1010
  %v1012 = vrot.slane %v980, %v1011
  %v1014 = vmul.f32 %v1006, %v1012
  %v1015 = vmul.f32 %v1007, %v1012
  %v1017 = vlaneseq
  %v1018 = vshrl.u32 %v1017, 7
  %v1019 = vsub.s32 0, %v1018
  %v1020 = vrot.slane %v981, %v1019
  %v1022 = vadd.f32 %v1014, %v1020
  %v1023 = vadd.f32 %v1015, %v1020
  %v1024 = vld [vmem:[%s10] sm:$0xff]
  %v1025 = vld [vmem:[%s10 + $0x8] sm:$0xff]
  %v1026 = vld [vmem:[%s10 + $0x10] sm:$0xff]
  %v1027 = vld [vmem:[%s10 + $0x18] sm:$0xff]
  %v1028 = vld [vmem:[%s11] sm:$0x1]
  %v1030 = vlaneseq
  %v1031 = vshrl.u32 %v1030, 7
  %v1032 = vsub.s32 0, %v1031
  %v1033 = vrot.slane %v1028, %v1032
  %v1036 = vsel %vm63, %v1022, 0
  %v1039 = vsel %vm63, %v1023, 0
  %1041 = vmatprep.subr.mxu0 0.0
  %1042 = vmatpush1.msra.mxu0 0.0
  %1043 = vmatprep.subr.mxu0 0.0
  %1044 = vmatpush1.msra.mxu0 0.0
  %1045 = vmatprep.subr.mxu0 0.0
  %1046 = vmatpush1.msra.mxu0 0.0
  %1047 = vmatprep.subr.mxu0 0.0
  %1048 = vmatpush1.msra.mxu0 0.0
  %1049 = vmatprep.subr.mxu0 0.0
  %1050 = vmatpush1.msra.mxu0 0.0
  %1051 = vmatprep.subr.mxu0 0.0
  %1052 = vmatpush1.msra.mxu0 0.0
  %1053 = vmatprep.subr.mxu0 0.0
  %1054 = vmatpush1.msra.mxu0 0.0
  %1055 = vmatprep.subr.mxu0 0.0
  %1056 = vmatpush1.msra.mxu0 0.0
  %1057 = vmatprep.subr.mxu0 0.0
  %1058 = vmatpush1.msra.mxu0 0.0
  %1059 = vmatprep.subr.mxu0 0.0
  %1060 = vmatpush1.msra.mxu0 0.0
  %1061 = vmatprep.subr.mxu0 0.0
  %1062 = vmatpush1.msra.mxu0 0.0
  %1063 = vmatprep.subr.mxu0 0.0
  %1064 = vmatpush1.msra.mxu0 0.0
  %1065 = vmatprep.subr.mxu0 0.0
  %1066 = vmatpush1.msra.mxu0 %v1027
  %1067 = vmatprep.subr.mxu0 0.0
  %1068 = vmatpush1.msra.mxu0 %v1026
  %1069 = vmatprep.subr.mxu0 0.0
  %1070 = vmatpush1.msra.mxu0 %v1025
  %1071 = vmatprep.subr.mxu0 0.0
  %1072 = vmatpush1.msra.mxu0 %v1024
  %1073 = vmatprep.subr.mxu0 0.0
  %1074 = vmatpush2.msra.mxu0 0.0
  %1075 = vmatprep.subr.mxu0 0.0
  %1076 = vmatpush2.msra.mxu0 0.0
  %1077 = vmatprep.subr.mxu0 0.0
  %1078 = vmatpush2.msra.mxu0 0.0
  %1079 = vmatprep.subr.mxu0 0.0
  %1080 = vmatpush2.msra.mxu0 0.0
  %1081 = vmatprep.subr.mxu0 0.0
  %1082 = vmatpush2.msra.mxu0 0.0
  %1083 = vmatprep.subr.mxu0 0.0
  %1084 = vmatpush2.msra.mxu0 0.0
  %1085 = vmatprep.subr.mxu0 0.0
  %1086 = vmatpush2.msra.mxu0 0.0
  %1087 = vmatprep.subr.mxu0 0.0
  %1088 = vmatpush2.msra.mxu0 0.0
  %1089 = vmatprep.subr.mxu0 0.0
  %1090 = vmatpush2.msra.mxu0 0.0
  %1091 = vmatprep.subr.mxu0 0.0
  %1092 = vmatpush2.msra.mxu0 0.0
  %1093 = vmatprep.subr.mxu0 0.0
  %1094 = vmatpush2.msra.mxu0 0.0
  %1095 = vmatprep.subr.mxu0 0.0
  %1096 = vmatpush2.msra.mxu0 0.0
  %1097 = vmatprep.subr.mxu0 0.0
  %1098 = vmatpush2.msra.mxu0 0.0
  %1099 = vmatprep.subr.mxu0 0.0
  %1100 = vmatpush2.msra.mxu0 0.0
  %1101 = vmatprep.subr.mxu0 0.0
  %1102 = vmatpush2.msra.mxu0 0.0
  %1103 = vmatprep.subr.mxu0 0.0
  %1104 = vmatpush2.msra.mxu0 0.0
  %1105 = vmatprep.mubr.f32.mxu0 0.0
  %1106 = vmatmul.mubr.f32.gmra.mxu0 %v1036
  %v1107 = vpop.f32.mrf.mxu0
  %v1108 = vadd.f32 %v1033, %v1107
  %v1109 = vpop.f32.mrf.mxu0
  %1110 = vmatprep.mubr.f32.mxu0 0.0
  %1111 = vmatmul.mubr.f32.gmra.mxu0 %v1039
  %v1112 = vpop.f32.mrf.mxu0
  %v1113 = vadd.f32 %v1033, %v1112
  %v1114 = vpop.f32.mrf.mxu0
  %1115 = vdwg.mxu0
  %v1116 = vmul.f32 %v1108, 0.5
  %v1117 = vmul.f32 %v1113, 0.5
  %v1118 = vmul.f32 %v1108, 0.044715
  %v1119 = vmul.f32 %v1113, 0.044715
  %v1120 = vmul.f32 %v1118, %v1108
  %v1121 = vmul.f32 %v1119, %v1113
  %v1122 = vmul.f32 %v1120, %v1108
  %v1123 = vmul.f32 %v1121, %v1113
  %v1124 = vadd.f32 %v1108, %v1122
  %v1125 = vadd.f32 %v1113, %v1123
  %v1126 = vmul.f32 %v1124, 0.7978846
  %v1127 = vmul.f32 %v1125, 0.7978846
  %v1128 = vtanh.pop %v1126
  %v1129 = vtanh.pop %v1127
  %v1130 = vadd.f32 %v1128, 1.0
  %v1131 = vadd.f32 %v1129, 1.0
  %v1132 = vmul.f32 %v1116, %v1130
  %v1133 = vmul.f32 %v1117, %v1131
  %v1134 = vld [vmem:[%s12] sm:$0xff]
  %v1135 = vld [vmem:[%s12 + $0x8] sm:$0xff]
  %v1136 = vld [vmem:[%s12 + $0x10] sm:$0xff]
  %v1137 = vld [vmem:[%s12 + $0x18] sm:$0xff]
  %v1138 = vld [vmem:[%s12 + $0x20] sm:$0xff]
  %v1139 = vld [vmem:[%s12 + $0x28] sm:$0xff]
  %v1140 = vld [vmem:[%s12 + $0x30] sm:$0xff]
  %v1141 = vld [vmem:[%s12 + $0x38] sm:$0xff]
  %v1142 = vld [vmem:[%s13] sm:$0x1]
  %v1144 = vlaneseq
  %v1145 = vshrl.u32 %v1144, 7
  %v1146 = vsub.s32 0, %v1145
  %v1147 = vrot.slane %v1142, %v1146
  %vm1149 = vcmask 523264
  %v1151 = vsel %vm1149, %v1132, 0
  %v1154 = vsel %vm1149, %v1133, 0
  %1156 = vmatprep.subr.mxu0 0.0
  %1157 = vmatpush1.msra.mxu0 0.0
  %1158 = vmatprep.subr.mxu0 0.0
  %1159 = vmatpush1.msra.mxu0 0.0
  %1160 = vmatprep.subr.mxu0 0.0
  %1161 = vmatpush1.msra.mxu0 0.0
  %1162 = vmatprep.subr.mxu0 0.0
  %1163 = vmatpush1.msra.mxu0 0.0
  %1164 = vmatprep.subr.mxu0 0.0
  %1165 = vmatpush1.msra.mxu0 0.0
  %1166 = vmatprep.subr.mxu0 0.0
  %1167 = vmatpush1.msra.mxu0 0.0
  %1168 = vmatprep.subr.mxu0 0.0
  %1169 = vmatpush1.msra.mxu0 0.0
  %1170 = vmatprep.subr.mxu0 0.0
  %1171 = vmatpush1.msra.mxu0 0.0
  %1172 = vmatprep.subr.mxu0 0.0
  %1173 = vmatpush1.msra.mxu0 %v1141
  %1174 = vmatprep.subr.mxu0 0.0
  %1175 = vmatpush1.msra.mxu0 %v1140
  %1176 = vmatprep.subr.mxu0 0.0
  %1177 = vmatpush1.msra.mxu0 %v1139
  %1178 = vmatprep.subr.mxu0 0.0
  %1179 = vmatpush1.msra.mxu0 %v1138
  %1180 = vmatprep.subr.mxu0 0.0
  %1181 = vmatpush1.msra.mxu0 %v1137
  %1182 = vmatprep.subr.mxu0 0.0
  %1183 = vmatpush1.msra.mxu0 %v1136
  %1184 = vmatprep.subr.mxu0 0.0
  %1185 = vmatpush1.msra.mxu0 %v1135
  %1186 = vmatprep.subr.mxu0 0.0
  %1187 = vmatpush1.msra.mxu0 %v1134
  %1188 = vmatprep.subr.mxu0 0.0
  %1189 = vmatpush2.msra.mxu0 0.0
  %1190 = vmatprep.subr.mxu0 0.0
  %1191 = vmatpush2.msra.mxu0 0.0
  %1192 = vmatprep.subr.mxu0 0.0
  %1193 = vmatpush2.msra.mxu0 0.0
  %1194 = vmatprep.subr.mxu0 0.0
  %1195 = vmatpush2.msra.mxu0 0.0
  %1196 = vmatprep.subr.mxu0 0.0
  %1197 = vmatpush2.msra.mxu0 0.0
  %1198 = vmatprep.subr.mxu0 0.0
  %1199 = vmatpush2.msra.mxu0 0.0
  %1200 = vmatprep.subr.mxu0 0.0
  %1201 = vmatpush2.msra.mxu0 0.0
  %1202 = vmatprep.subr.mxu0 0.0
  %1203 = vmatpush2.msra.mxu0 0.0
  %1204 = vmatprep.subr.mxu0 0.0
  %1205 = vmatpush2.msra.mxu0 0.0
  %1206 = vmatprep.subr.mxu0 0.0
  %1207 = vmatpush2.msra.mxu0 0.0
  %1208 = vmatprep.subr.mxu0 0.0
  %1209 = vmatpush2.msra.mxu0 0.0
  %1210 = vmatprep.subr.mxu0 0.0
  %1211 = vmatpush2.msra.mxu0 0.0
  %1212 = vmatprep.subr.mxu0 0.0
  %1213 = vmatpush2.msra.mxu0 0.0
  %1214 = vmatprep.subr.mxu0 0.0
  %1215 = vmatpush2.msra.mxu0 0.0
  %1216 = vmatprep.subr.mxu0 0.0
  %1217 = vmatpush2.msra.mxu0 0.0
  %1218 = vmatprep.subr.mxu0 0.0
  %1219 = vmatpush2.msra.mxu0 0.0
  %1220 = vmatprep.mubr.f32.mxu0 0.0
  %1221 = vmatmul.mubr.f32.gmra.mxu0 %v1151
  %v1222 = vpop.f32.mrf.mxu0
  %v1223 = vadd.f32 %v1147, %v1222
  %v1224 = vpop.f32.mrf.mxu0
  %1225 = vmatprep.mubr.f32.mxu0 0.0
  %1226 = vmatmul.mubr.f32.gmra.mxu0 %v1154
  %v1227 = vpop.f32.mrf.mxu0
  %v1228 = vadd.f32 %v1147, %v1227
  %v1229 = vpop.f32.mrf.mxu0
  %1230 = vdwg.mxu0
  %v1231 = vadd.f32 %v1223, %v1022
  %v1232 = vadd.f32 %v1228, %v1023
  %v1233 = vld [vmem:[%s14] sm:$0x1]
  %v1234 = vld [vmem:[%s15] sm:$0x1]
  %v1235 = vsel %vm63, %v1231, 0.0
  %1236 = vadd.xlane.f32.xlu0 %v1235
  %v1237 = vpop.xlane.xlu0 %1236
  %v1238 = vsel %vm63, %v1232, 0.0
  %1239 = vadd.xlane.f32.xlu0 %v1238
  %v1240 = vpop.xlane.xlu0 %1239
  %v1241 = vmul.f32 %v1237, %v70
  %v1242 = vmul.f32 %v1240, %v70
  %v1243 = vsub.f32 %v1231, %v1241
  %v1244 = vsub.f32 %v1232, %v1242
  %v1245 = vmul.f32 %v1243, %v1243
  %v1246 = vmul.f32 %v1244, %v1244
  %v1247 = vsel %vm63, %v1245, 0.0
  %1248 = vadd.xlane.f32.xlu0 %v1247
  %v1249 = vpop.xlane.xlu0 %1248
  %v1250 = vsel %vm63, %v1246, 0.0
  %1251 = vadd.xlane.f32.xlu0 %v1250
  %v1252 = vpop.xlane.xlu0 %1251
  %v1253 = vmul.f32 %v1249, %v70
  %v1254 = vmul.f32 %v1252, %v70
  %v1255 = vadd.f32 %v1253, 1e-05
  %v1256 = vadd.f32 %v1254, 1e-05
  %v1257 = vrsqrt.pop %v1255
  %v1258 = vrsqrt.pop %v1256
  %v1259 = vmul.f32 %v1243, %v1257
  %v1260 = vmul.f32 %v1244, %v1258
  %v1262 = vlaneseq
  %v1263 = vshrl.u32 %v1262, 7
  %v1264 = vsub.s32 0, %v1263
  %v1265 = vrot.slane %v1233, %v1264
  %v1267 = vmul.f32 %v1259, %v1265
  %v1268 = vmul.f32 %v1260, %v1265
  %v1270 = vlaneseq
  %v1271 = vshrl.u32 %v1270, 7
  %v1272 = vsub.s32 0, %v1271
  %v1273 = vrot.slane %v1234, %v1272
  %v1275 = vadd.f32 %v1267, %v1273
  %v1276 = vadd.f32 %v1268, %v1273
  %s1277 = scalar_lea.vmem %s4, 32
  %v1278 = vld [vmem:[%s1277] sm:$0xff]
  %v1279 = vld [vmem:[%s1277 + $0x8] sm:$0xff]
  %v1280 = vld [vmem:[%s1277 + $0x10] sm:$0xff]
  %v1281 = vld [vmem:[%s1277 + $0x18] sm:$0xff]
  %s1282 = scalar_lea.vmem %s5, 1
  %v1283 = vld [vmem:[%s1282] sm:$0x1]
  %v1285 = vlaneseq
  %v1286 = vshrl.u32 %v1285, 7
  %v1287 = vsub.s32 0, %v1286
  %v1288 = vrot.slane %v1283, %v1287
  %v1291 = vsel %vm63, %v1275, 0
  %v1294 = vsel %vm63, %v1276, 0
  %1296 = vmatprep.subr.mxu0 0.0
  %1297 = vmatpush1.msra.mxu0 0.0
  %1298 = vmatprep.subr.mxu0 0.0
  %1299 = vmatpush1.msra.mxu0 0.0
  %1300 = vmatprep.subr.mxu0 0.0
  %1301 = vmatpush1.msra.mxu0 0.0
  %1302 = vmatprep.subr.mxu0 0.0
  %1303 = vmatpush1.msra.mxu0 0.0
  %1304 = vmatprep.subr.mxu0 0.0
  %1305 = vmatpush1.msra.mxu0 0.0
  %1306 = vmatprep.subr.mxu0 0.0
  %1307 = vmatpush1.msra.mxu0 0.0
  %1308 = vmatprep.subr.mxu0 0.0
  %1309 = vmatpush1.msra.mxu0 0.0
  %1310 = vmatprep.subr.mxu0 0.0
  %1311 = vmatpush1.msra.mxu0 0.0
  %1312 = vmatprep.subr.mxu0 0.0
  %1313 = vmatpush1.msra.mxu0 0.0
  %1314 = vmatprep.subr.mxu0 0.0
  %1315 = vmatpush1.msra.mxu0 0.0
  %1316 = vmatprep.subr.mxu0 0.0
  %1317 = vmatpush1.msra.mxu0 0.0
  %1318 = vmatprep.subr.mxu0 0.0
  %1319 = vmatpush1.msra.mxu0 0.0
  %1320 = vmatprep.subr.mxu0 0.0
  %1321 = vmatpush1.msra.mxu0 %v1281
  %1322 = vmatprep.subr.mxu0 0.0
  %1323 = vmatpush1.msra.mxu0 %v1280
  %1324 = vmatprep.subr.mxu0 0.0
  %1325 = vmatpush1.msra.mxu0 %v1279
  %1326 = vmatprep.subr.mxu0 0.0
  %1327 = vmatpush1.msra.mxu0 %v1278
  %1328 = vmatprep.subr.mxu0 0.0
  %1329 = vmatpush2.msra.mxu0 0.0
  %1330 = vmatprep.subr.mxu0 0.0
  %1331 = vmatpush2.msra.mxu0 0.0
  %1332 = vmatprep.subr.mxu0 0.0
  %1333 = vmatpush2.msra.mxu0 0.0
  %1334 = vmatprep.subr.mxu0 0.0
  %1335 = vmatpush2.msra.mxu0 0.0
  %1336 = vmatprep.subr.mxu0 0.0
  %1337 = vmatpush2.msra.mxu0 0.0
  %1338 = vmatprep.subr.mxu0 0.0
  %1339 = vmatpush2.msra.mxu0 0.0
  %1340 = vmatprep.subr.mxu0 0.0
  %1341 = vmatpush2.msra.mxu0 0.0
  %1342 = vmatprep.subr.mxu0 0.0
  %1343 = vmatpush2.msra.mxu0 0.0
  %1344 = vmatprep.subr.mxu0 0.0
  %1345 = vmatpush2.msra.mxu0 0.0
  %1346 = vmatprep.subr.mxu0 0.0
  %1347 = vmatpush2.msra.mxu0 0.0
  %1348 = vmatprep.subr.mxu0 0.0
  %1349 = vmatpush2.msra.mxu0 0.0
  %1350 = vmatprep.subr.mxu0 0.0
  %1351 = vmatpush2.msra.mxu0 0.0
  %1352 = vmatprep.subr.mxu0 0.0
  %1353 = vmatpush2.msra.mxu0 0.0
  %1354 = vmatprep.subr.mxu0 0.0
  %1355 = vmatpush2.msra.mxu0 0.0
  %1356 = vmatprep.subr.mxu0 0.0
  %1357 = vmatpush2.msra.mxu0 0.0
  %1358 = vmatprep.subr.mxu0 0.0
  %1359 = vmatpush2.msra.mxu0 0.0
  %1360 = vmatprep.mubr.f32.mxu0 0.0
  %1361 = vmatmul.mubr.f32.gmra.mxu0 %v1291
  %v1362 = vpop.f32.mrf.mxu0
  %v1363 = vadd.f32 %v1288, %v1362
  %v1364 = vpop.f32.mrf.mxu0
  %1365 = vmatprep.mubr.f32.mxu0 0.0
  %1366 = vmatmul.mubr.f32.gmra.mxu0 %v1294
  %v1367 = vpop.f32.mrf.mxu0
  %v1368 = vadd.f32 %v1288, %v1367
  %v1369 = vpop.f32.mrf.mxu0
  %1370 = vdwg.mxu0
  %1372 = vrot.lane.b32.xlu0 %v1363, 96
  %v1373 = vpop.permute.xlu0 %1372
  %v1374 = vsel %vm203, %v1363, 0
  %v1376 = vsel %vm203, %v1373, 0
  %1378 = vmatprep.subr.mxu0 0.0
  %1379 = vmatpush1.xpose.msra.mxu0 0.0
  %1380 = vmatprep.subr.mxu0 0.0
  %1381 = vmatpush1.xpose.msra.mxu0 0.0
  %1382 = vmatprep.subr.mxu0 0.0
  %1383 = vmatpush1.xpose.msra.mxu0 0.0
  %1384 = vmatprep.subr.mxu0 0.0
  %1385 = vmatpush1.xpose.msra.mxu0 0.0
  %1386 = vmatprep.subr.mxu0 0.0
  %1387 = vmatpush1.xpose.msra.mxu0 0.0
  %1388 = vmatprep.subr.mxu0 0.0
  %1389 = vmatpush1.xpose.msra.mxu0 0.0
  %1390 = vmatprep.subr.mxu0 0.0
  %1391 = vmatpush1.xpose.msra.mxu0 0.0
  %1392 = vmatprep.subr.mxu0 0.0
  %1393 = vmatpush1.xpose.msra.mxu0 0.0
  %1394 = vmatprep.subr.mxu0 0.0
  %1395 = vmatpush1.xpose.msra.mxu0 0.0
  %1396 = vmatprep.subr.mxu0 0.0
  %1397 = vmatpush1.xpose.msra.mxu0 0.0
  %1398 = vmatprep.subr.mxu0 0.0
  %1399 = vmatpush1.xpose.msra.mxu0 0.0
  %1400 = vmatprep.subr.mxu0 0.0
  %1401 = vmatpush1.xpose.msra.mxu0 0.0
  %1402 = vmatprep.subr.mxu0 0.0
  %1403 = vmatpush1.xpose.msra.mxu0 0.0
  %1404 = vmatprep.subr.mxu0 0.0
  %1405 = vmatpush1.xpose.msra.mxu0 0.0
  %1406 = vmatprep.subr.mxu0 0.0
  %1407 = vmatpush1.xpose.msra.mxu0 0.0
  %1408 = vmatprep.subr.mxu0 0.0
  %1409 = vmatpush1.xpose.msra.mxu0 %v1376
  %1410 = vmatprep.subr.mxu0 0.0
  %1411 = vmatpush2.xpose.msra.mxu0 0.0
  %1412 = vmatprep.subr.mxu0 0.0
  %1413 = vmatpush2.xpose.msra.mxu0 0.0
  %1414 = vmatprep.subr.mxu0 0.0
  %1415 = vmatpush2.xpose.msra.mxu0 0.0
  %1416 = vmatprep.subr.mxu0 0.0
  %1417 = vmatpush2.xpose.msra.mxu0 0.0
  %1418 = vmatprep.subr.mxu0 0.0
  %1419 = vmatpush2.xpose.msra.mxu0 0.0
  %1420 = vmatprep.subr.mxu0 0.0
  %1421 = vmatpush2.xpose.msra.mxu0 0.0
  %1422 = vmatprep.subr.mxu0 0.0
  %1423 = vmatpush2.xpose.msra.mxu0 0.0
  %1424 = vmatprep.subr.mxu0 0.0
  %1425 = vmatpush2.xpose.msra.mxu0 0.0
  %1426 = vmatprep.subr.mxu0 0.0
  %1427 = vmatpush2.xpose.msra.mxu0 0.0
  %1428 = vmatprep.subr.mxu0 0.0
  %1429 = vmatpush2.xpose.msra.mxu0 0.0
  %1430 = vmatprep.subr.mxu0 0.0
  %1431 = vmatpush2.xpose.msra.mxu0 0.0
  %1432 = vmatprep.subr.mxu0 0.0
  %1433 = vmatpush2.xpose.msra.mxu0 0.0
  %1434 = vmatprep.subr.mxu0 0.0
  %1435 = vmatpush2.xpose.msra.mxu0 0.0
  %1436 = vmatprep.subr.mxu0 0.0
  %1437 = vmatpush2.xpose.msra.mxu0 0.0
  %1438 = vmatprep.subr.mxu0 0.0
  %1439 = vmatpush2.xpose.msra.mxu0 0.0
  %1440 = vmatprep.subr.mxu0 0.0
  %1441 = vmatpush2.xpose.msra.mxu0 0.0
  %1442 = vmatprep.mubr.f32.mxu0 0.0
  %1443 = vmatmul.mubr.f32.gmra.mxu0 %v1374
  %v1444 = vpop.f32.mrf.mxu0
  %v1445 = vadd.f32 0.0, %v1444
  %v1446 = vpop.f32.mrf.mxu0
  %1447 = vdwg.mxu0
  %v1448 = vmul.f32 %v1445, 0.25
  %v1449 = vadd.f32 %v1448, %v282
  %v1450 = vsel %vm284, %v1449, -inf
  %1451 = vmax.xlane.f32.xlu0 %v1450
  %v1452 = vpop.xlane.xlu0 %1451
  %v1453 = vsub.f32 %v1449, %v1452
  %v1454 = vmul.f32 %v1453, 1.442695
  %v1455 = vpow.pop %v1454
  %v1456 = vsel %vm284, %v1455, 0.0
  %1457 = vadd.xlane.f32.xlu0 %v1456
  %v1458 = vpop.xlane.xlu0 %1457
  %v1459 = vrcp.pop %v1458
  %v1460 = vmul.f32 %v1455, %v1459
  %1461 = vrot.lane.b32.xlu0 %v1363, 64
  %v1462 = vpop.permute.xlu0 %1461
  %v1465 = vsel %vm284, %v1460, 0
  %1467 = vmatprep.subr.mxu0 0.0
  %1468 = vmatpush1.msra.mxu0 0.0
  %1469 = vmatprep.subr.mxu0 0.0
  %1470 = vmatpush1.msra.mxu0 0.0
  %1471 = vmatprep.subr.mxu0 0.0
  %1472 = vmatpush1.msra.mxu0 0.0
  %1473 = vmatprep.subr.mxu0 0.0
  %1474 = vmatpush1.msra.mxu0 0.0
  %1475 = vmatprep.subr.mxu0 0.0
  %1476 = vmatpush1.msra.mxu0 0.0
  %1477 = vmatprep.subr.mxu0 0.0
  %1478 = vmatpush1.msra.mxu0 0.0
  %1479 = vmatprep.subr.mxu0 0.0
  %1480 = vmatpush1.msra.mxu0 0.0
  %1481 = vmatprep.subr.mxu0 0.0
  %1482 = vmatpush1.msra.mxu0 0.0
  %1483 = vmatprep.subr.mxu0 0.0
  %1484 = vmatpush1.msra.mxu0 0.0
  %1485 = vmatprep.subr.mxu0 0.0
  %1486 = vmatpush1.msra.mxu0 0.0
  %1487 = vmatprep.subr.mxu0 0.0
  %1488 = vmatpush1.msra.mxu0 0.0
  %1489 = vmatprep.subr.mxu0 0.0
  %1490 = vmatpush1.msra.mxu0 0.0
  %1491 = vmatprep.subr.mxu0 0.0
  %1492 = vmatpush1.msra.mxu0 0.0
  %1493 = vmatprep.subr.mxu0 0.0
  %1494 = vmatpush1.msra.mxu0 0.0
  %1495 = vmatprep.subr.mxu0 0.0
  %1496 = vmatpush1.msra.mxu0 0.0
  %1497 = vmatprep.subr.mxu0 0.0
  %1498 = vmatpush1.msra.mxu0 %v1462
  %1499 = vmatprep.subr.mxu0 0.0
  %1500 = vmatpush2.msra.mxu0 0.0
  %1501 = vmatprep.subr.mxu0 0.0
  %1502 = vmatpush2.msra.mxu0 0.0
  %1503 = vmatprep.subr.mxu0 0.0
  %1504 = vmatpush2.msra.mxu0 0.0
  %1505 = vmatprep.subr.mxu0 0.0
  %1506 = vmatpush2.msra.mxu0 0.0
  %1507 = vmatprep.subr.mxu0 0.0
  %1508 = vmatpush2.msra.mxu0 0.0
  %1509 = vmatprep.subr.mxu0 0.0
  %1510 = vmatpush2.msra.mxu0 0.0
  %1511 = vmatprep.subr.mxu0 0.0
  %1512 = vmatpush2.msra.mxu0 0.0
  %1513 = vmatprep.subr.mxu0 0.0
  %1514 = vmatpush2.msra.mxu0 0.0
  %1515 = vmatprep.subr.mxu0 0.0
  %1516 = vmatpush2.msra.mxu0 0.0
  %1517 = vmatprep.subr.mxu0 0.0
  %1518 = vmatpush2.msra.mxu0 0.0
  %1519 = vmatprep.subr.mxu0 0.0
  %1520 = vmatpush2.msra.mxu0 0.0
  %1521 = vmatprep.subr.mxu0 0.0
  %1522 = vmatpush2.msra.mxu0 0.0
  %1523 = vmatprep.subr.mxu0 0.0
  %1524 = vmatpush2.msra.mxu0 0.0
  %1525 = vmatprep.subr.mxu0 0.0
  %1526 = vmatpush2.msra.mxu0 0.0
  %1527 = vmatprep.subr.mxu0 0.0
  %1528 = vmatpush2.msra.mxu0 0.0
  %1529 = vmatprep.subr.mxu0 0.0
  %1530 = vmatpush2.msra.mxu0 0.0
  %1531 = vmatprep.mubr.f32.mxu0 0.0
  %1532 = vmatmul.mubr.f32.gmra.mxu0 %v1465
  %v1533 = vpop.f32.mrf.mxu0
  %v1534 = vadd.f32 0.0, %v1533
  %v1535 = vpop.f32.mrf.mxu0
  %1536 = vdwg.mxu0
  %1537 = vrot.lane.b32.xlu0 %v1363, 112
  %v1538 = vpop.permute.xlu0 %1537
  %1539 = vrot.lane.b32.xlu0 %v1363, 80
  %v1540 = vpop.permute.xlu0 %1539
  %v1541 = vsel %vm203, %v1538, 0
  %v1543 = vsel %vm203, %v1540, 0
  %1545 = vmatprep.subr.mxu0 0.0
  %1546 = vmatpush1.xpose.msra.mxu0 0.0
  %1547 = vmatprep.subr.mxu0 0.0
  %1548 = vmatpush1.xpose.msra.mxu0 0.0
  %1549 = vmatprep.subr.mxu0 0.0
  %1550 = vmatpush1.xpose.msra.mxu0 0.0
  %1551 = vmatprep.subr.mxu0 0.0
  %1552 = vmatpush1.xpose.msra.mxu0 0.0
  %1553 = vmatprep.subr.mxu0 0.0
  %1554 = vmatpush1.xpose.msra.mxu0 0.0
  %1555 = vmatprep.subr.mxu0 0.0
  %1556 = vmatpush1.xpose.msra.mxu0 0.0
  %1557 = vmatprep.subr.mxu0 0.0
  %1558 = vmatpush1.xpose.msra.mxu0 0.0
  %1559 = vmatprep.subr.mxu0 0.0
  %1560 = vmatpush1.xpose.msra.mxu0 0.0
  %1561 = vmatprep.subr.mxu0 0.0
  %1562 = vmatpush1.xpose.msra.mxu0 0.0
  %1563 = vmatprep.subr.mxu0 0.0
  %1564 = vmatpush1.xpose.msra.mxu0 0.0
  %1565 = vmatprep.subr.mxu0 0.0
  %1566 = vmatpush1.xpose.msra.mxu0 0.0
  %1567 = vmatprep.subr.mxu0 0.0
  %1568 = vmatpush1.xpose.msra.mxu0 0.0
  %1569 = vmatprep.subr.mxu0 0.0
  %1570 = vmatpush1.xpose.msra.mxu0 0.0
  %1571 = vmatprep.subr.mxu0 0.0
  %1572 = vmatpush1.xpose.msra.mxu0 0.0
  %1573 = vmatprep.subr.mxu0 0.0
  %1574 = vmatpush1.xpose.msra.mxu0 0.0
  %1575 = vmatprep.subr.mxu0 0.0
  %1576 = vmatpush1.xpose.msra.mxu0 %v1543
  %1577 = vmatprep.subr.mxu0 0.0
  %1578 = vmatpush2.xpose.msra.mxu0 0.0
  %1579 = vmatprep.subr.mxu0 0.0
  %1580 = vmatpush2.xpose.msra.mxu0 0.0
  %1581 = vmatprep.subr.mxu0 0.0
  %1582 = vmatpush2.xpose.msra.mxu0 0.0
  %1583 = vmatprep.subr.mxu0 0.0
  %1584 = vmatpush2.xpose.msra.mxu0 0.0
  %1585 = vmatprep.subr.mxu0 0.0
  %1586 = vmatpush2.xpose.msra.mxu0 0.0
  %1587 = vmatprep.subr.mxu0 0.0
  %1588 = vmatpush2.xpose.msra.mxu0 0.0
  %1589 = vmatprep.subr.mxu0 0.0
  %1590 = vmatpush2.xpose.msra.mxu0 0.0
  %1591 = vmatprep.subr.mxu0 0.0
  %1592 = vmatpush2.xpose.msra.mxu0 0.0
  %1593 = vmatprep.subr.mxu0 0.0
  %1594 = vmatpush2.xpose.msra.mxu0 0.0
  %1595 = vmatprep.subr.mxu0 0.0
  %1596 = vmatpush2.xpose.msra.mxu0 0.0
  %1597 = vmatprep.subr.mxu0 0.0
  %1598 = vmatpush2.xpose.msra.mxu0 0.0
  %1599 = vmatprep.subr.mxu0 0.0
  %1600 = vmatpush2.xpose.msra.mxu0 0.0
  %1601 = vmatprep.subr.mxu0 0.0
  %1602 = vmatpush2.xpose.msra.mxu0 0.0
  %1603 = vmatprep.subr.mxu0 0.0
  %1604 = vmatpush2.xpose.msra.mxu0 0.0
  %1605 = vmatprep.subr.mxu0 0.0
  %1606 = vmatpush2.xpose.msra.mxu0 0.0
  %1607 = vmatprep.subr.mxu0 0.0
  %1608 = vmatpush2.xpose.msra.mxu0 0.0
  %1609 = vmatprep.mubr.f32.mxu0 0.0
  %1610 = vmatmul.mubr.f32.gmra.mxu0 %v1541
  %v1611 = vpop.f32.mrf.mxu0
  %v1612 = vadd.f32 0.0, %v1611
  %v1613 = vpop.f32.mrf.mxu0
  %1614 = vdwg.mxu0
  %v1615 = vmul.f32 %v1612, 0.25
  %v1616 = vadd.f32 %v1615, %v282
  %v1617 = vsel %vm284, %v1616, -inf
  %1618 = vmax.xlane.f32.xlu0 %v1617
  %v1619 = vpop.xlane.xlu0 %1618
  %v1620 = vsub.f32 %v1616, %v1619
  %v1621 = vmul.f32 %v1620, 1.442695
  %v1622 = vpow.pop %v1621
  %v1623 = vsel %vm284, %v1622, 0.0
  %1624 = vadd.xlane.f32.xlu0 %v1623
  %v1625 = vpop.xlane.xlu0 %1624
  %v1626 = vrcp.pop %v1625
  %v1627 = vmul.f32 %v1622, %v1626
  %1628 = vrot.lane.b32.xlu0 %v1363, 48
  %v1629 = vpop.permute.xlu0 %1628
  %v1632 = vsel %vm284, %v1627, 0
  %1634 = vmatprep.subr.mxu0 0.0
  %1635 = vmatpush1.msra.mxu0 0.0
  %1636 = vmatprep.subr.mxu0 0.0
  %1637 = vmatpush1.msra.mxu0 0.0
  %1638 = vmatprep.subr.mxu0 0.0
  %1639 = vmatpush1.msra.mxu0 0.0
  %1640 = vmatprep.subr.mxu0 0.0
  %1641 = vmatpush1.msra.mxu0 0.0
  %1642 = vmatprep.subr.mxu0 0.0
  %1643 = vmatpush1.msra.mxu0 0.0
  %1644 = vmatprep.subr.mxu0 0.0
  %1645 = vmatpush1.msra.mxu0 0.0
  %1646 = vmatprep.subr.mxu0 0.0
  %1647 = vmatpush1.msra.mxu0 0.0
  %1648 = vmatprep.subr.mxu0 0.0
  %1649 = vmatpush1.msra.mxu0 0.0
  %1650 = vmatprep.subr.mxu0 0.0
  %1651 = vmatpush1.msra.mxu0 0.0
  %1652 = vmatprep.subr.mxu0 0.0
  %1653 = vmatpush1.msra.mxu0 0.0
  %1654 = vmatprep.subr.mxu0 0.0
  %1655 = vmatpush1.msra.mxu0 0.0
  %1656 = vmatprep.subr.mxu0 0.0
  %1657 = vmatpush1.msra.mxu0 0.0
  %1658 = vmatprep.subr.mxu0 0.0
  %1659 = vmatpush1.msra.mxu0 0.0
  %1660 = vmatprep.subr.mxu0 0.0
  %1661 = vmatpush1.msra.mxu0 0.0
  %1662 = vmatprep.subr.mxu0 0.0
  %1663 = vmatpush1.msra.mxu0 0.0
  %1664 = vmatprep.subr.mxu0 0.0
  %1665 = vmatpush1.msra.mxu0 %v1629
  %1666 = vmatprep.subr.mxu0 0.0
  %1667 = vmatpush2.msra.mxu0 0.0
  %1668 = vmatprep.subr.mxu0 0.0
  %1669 = vmatpush2.msra.mxu0 0.0
  %1670 = vmatprep.subr.mxu0 0.0
  %1671 = vmatpush2.msra.mxu0 0.0
  %1672 = vmatprep.subr.mxu0 0.0
  %1673 = vmatpush2.msra.mxu0 0.0
  %1674 = vmatprep.subr.mxu0 0.0
  %1675 = vmatpush2.msra.mxu0 0.0
  %1676 = vmatprep.subr.mxu0 0.0
  %1677 = vmatpush2.msra.mxu0 0.0
  %1678 = vmatprep.subr.mxu0 0.0
  %1679 = vmatpush2.msra.mxu0 0.0
  %1680 = vmatprep.subr.mxu0 0.0
  %1681 = vmatpush2.msra.mxu0 0.0
  %1682 = vmatprep.subr.mxu0 0.0
  %1683 = vmatpush2.msra.mxu0 0.0
  %1684 = vmatprep.subr.mxu0 0.0
  %1685 = vmatpush2.msra.mxu0 0.0
  %1686 = vmatprep.subr.mxu0 0.0
  %1687 = vmatpush2.msra.mxu0 0.0
  %1688 = vmatprep.subr.mxu0 0.0
  %1689 = vmatpush2.msra.mxu0 0.0
  %1690 = vmatprep.subr.mxu0 0.0
  %1691 = vmatpush2.msra.mxu0 0.0
  %1692 = vmatprep.subr.mxu0 0.0
  %1693 = vmatpush2.msra.mxu0 0.0
  %1694 = vmatprep.subr.mxu0 0.0
  %1695 = vmatpush2.msra.mxu0 0.0
  %1696 = vmatprep.subr.mxu0 0.0
  %1697 = vmatpush2.msra.mxu0 0.0
  %1698 = vmatprep.mubr.f32.mxu0 0.0
  %1699 = vmatmul.mubr.f32.gmra.mxu0 %v1632
  %v1700 = vpop.f32.mrf.mxu0
  %v1701 = vadd.f32 0.0, %v1700
  %v1702 = vpop.f32.mrf.mxu0
  %1703 = vdwg.mxu0
  %1705 = vrot.lane.b32.xlu0 %v1701, 16
  %v1706 = vpop.permute.xlu0 %1705
  %v1708 = vsel %vm203, %v1534, %v1706
  %1710 = vrot.lane.b32.xlu0 %v1368, 96
  %v1711 = vpop.permute.xlu0 %1710
  %v1712 = vsel %vm203, %v1368, 0
  %v1714 = vsel %vm203, %v1711, 0
  %1716 = vmatprep.subr.mxu0 0.0
  %1717 = vmatpush1.xpose.msra.mxu0 0.0
  %1718 = vmatprep.subr.mxu0 0.0
  %1719 = vmatpush1.xpose.msra.mxu0 0.0
  %1720 = vmatprep.subr.mxu0 0.0
  %1721 = vmatpush1.xpose.msra.mxu0 0.0
  %1722 = vmatprep.subr.mxu0 0.0
  %1723 = vmatpush1.xpose.msra.mxu0 0.0
  %1724 = vmatprep.subr.mxu0 0.0
  %1725 = vmatpush1.xpose.msra.mxu0 0.0
  %1726 = vmatprep.subr.mxu0 0.0
  %1727 = vmatpush1.xpose.msra.mxu0 0.0
  %1728 = vmatprep.subr.mxu0 0.0
  %1729 = vmatpush1.xpose.msra.mxu0 0.0
  %1730 = vmatprep.subr.mxu0 0.0
  %1731 = vmatpush1.xpose.msra.mxu0 0.0
  %1732 = vmatprep.subr.mxu0 0.0
  %1733 = vmatpush1.xpose.msra.mxu0 0.0
  %1734 = vmatprep.subr.mxu0 0.0
  %1735 = vmatpush1.xpose.msra.mxu0 0.0
  %1736 = vmatprep.subr.mxu0 0.0
  %1737 = vmatpush1.xpose.msra.mxu0 0.0
  %1738 = vmatprep.subr.mxu0 0.0
  %1739 = vmatpush1.xpose.msra.mxu0 0.0
  %1740 = vmatprep.subr.mxu0 0.0
  %1741 = vmatpush1.xpose.msra.mxu0 0.0
  %1742 = vmatprep.subr.mxu0 0.0
  %1743 = vmatpush1.xpose.msra.mxu0 0.0
  %1744 = vmatprep.subr.mxu0 0.0
  %1745 = vmatpush1.xpose.msra.mxu0 0.0
  %1746 = vmatprep.subr.mxu0 0.0
  %1747 = vmatpush1.xpose.msra.mxu0 %v1714
  %1748 = vmatprep.subr.mxu0 0.0
  %1749 = vmatpush2.xpose.msra.mxu0 0.0
  %1750 = vmatprep.subr.mxu0 0.0
  %1751 = vmatpush2.xpose.msra.mxu0 0.0
  %1752 = vmatprep.subr.mxu0 0.0
  %1753 = vmatpush2.xpose.msra.mxu0 0.0
  %1754 = vmatprep.subr.mxu0 0.0
  %1755 = vmatpush2.xpose.msra.mxu0 0.0
  %1756 = vmatprep.subr.mxu0 0.0
  %1757 = vmatpush2.xpose.msra.mxu0 0.0
  %1758 = vmatprep.subr.mxu0 0.0
  %1759 = vmatpush2.xpose.msra.mxu0 0.0
  %1760 = vmatprep.subr.mxu0 0.0
  %1761 = vmatpush2.xpose.msra.mxu0 0.0
  %1762 = vmatprep.subr.mxu0 0.0
  %1763 = vmatpush2.xpose.msra.mxu0 0.0
  %1764 = vmatprep.subr.mxu0 0.0
  %1765 = vmatpush2.xpose.msra.mxu0 0.0
  %1766 = vmatprep.subr.mxu0 0.0
  %1767 = vmatpush2.xpose.msra.mxu0 0.0
  %1768 = vmatprep.subr.mxu0 0.0
  %1769 = vmatpush2.xpose.msra.mxu0 0.0
  %1770 = vmatprep.subr.mxu0 0.0
  %1771 = vmatpush2.xpose.msra.mxu0 0.0
  %1772 = vmatprep.subr.mxu0 0.0
  %1773 = vmatpush2.xpose.msra.mxu0 0.0
  %1774 = vmatprep.subr.mxu0 0.0
  %1775 = vmatpush2.xpose.msra.mxu0 0.0
  %1776 = vmatprep.subr.mxu0 0.0
  %1777 = vmatpush2.xpose.msra.mxu0 0.0
  %1778 = vmatprep.subr.mxu0 0.0
  %1779 = vmatpush2.xpose.msra.mxu0 0.0
  %1780 = vmatprep.mubr.f32.mxu0 0.0
  %1781 = vmatmul.mubr.f32.gmra.mxu0 %v1712
  %v1782 = vpop.f32.mrf.mxu0
  %v1783 = vadd.f32 0.0, %v1782
  %v1784 = vpop.f32.mrf.mxu0
  %1785 = vdwg.mxu0
  %v1786 = vmul.f32 %v1783, 0.25
  %v1787 = vadd.f32 %v1786, %v625
  %v1788 = vsel %vm284, %v1787, -inf
  %1789 = vmax.xlane.f32.xlu0 %v1788
  %v1790 = vpop.xlane.xlu0 %1789
  %v1791 = vsub.f32 %v1787, %v1790
  %v1792 = vmul.f32 %v1791, 1.442695
  %v1793 = vpow.pop %v1792
  %v1794 = vsel %vm284, %v1793, 0.0
  %1795 = vadd.xlane.f32.xlu0 %v1794
  %v1796 = vpop.xlane.xlu0 %1795
  %v1797 = vrcp.pop %v1796
  %v1798 = vmul.f32 %v1793, %v1797
  %1799 = vrot.lane.b32.xlu0 %v1368, 64
  %v1800 = vpop.permute.xlu0 %1799
  %v1803 = vsel %vm284, %v1798, 0
  %1805 = vmatprep.subr.mxu0 0.0
  %1806 = vmatpush1.msra.mxu0 0.0
  %1807 = vmatprep.subr.mxu0 0.0
  %1808 = vmatpush1.msra.mxu0 0.0
  %1809 = vmatprep.subr.mxu0 0.0
  %1810 = vmatpush1.msra.mxu0 0.0
  %1811 = vmatprep.subr.mxu0 0.0
  %1812 = vmatpush1.msra.mxu0 0.0
  %1813 = vmatprep.subr.mxu0 0.0
  %1814 = vmatpush1.msra.mxu0 0.0
  %1815 = vmatprep.subr.mxu0 0.0
  %1816 = vmatpush1.msra.mxu0 0.0
  %1817 = vmatprep.subr.mxu0 0.0
  %1818 = vmatpush1.msra.mxu0 0.0
  %1819 = vmatprep.subr.mxu0 0.0
  %1820 = vmatpush1.msra.mxu0 0.0
  %1821 = vmatprep.subr.mxu0 0.0
  %1822 = vmatpush1.msra.mxu0 0.0
  %1823 = vmatprep.subr.mxu0 0.0
  %1824 = vmatpush1.msra.mxu0 0.0
  %1825 = vmatprep.subr.mxu0 0.0
  %1826 = vmatpush1.msra.mxu0 0.0
  %1827 = vmatprep.subr.mxu0 0.0
  %1828 = vmatpush1.msra.mxu0 0.0
  %1829 = vmatprep.subr.mxu0 0.0
  %1830 = vmatpush1.msra.mxu0 0.0
  %1831 = vmatprep.subr.mxu0 0.0
  %1832 = vmatpush1.msra.mxu0 0.0
  %1833 = vmatprep.subr.mxu0 0.0
  %1834 = vmatpush1.msra.mxu0 0.0
  %1835 = vmatprep.subr.mxu0 0.0
  %1836 = vmatpush1.msra.mxu0 %v1800
  %1837 = vmatprep.subr.mxu0 0.0
  %1838 = vmatpush2.msra.mxu0 0.0
  %1839 = vmatprep.subr.mxu0 0.0
  %1840 = vmatpush2.msra.mxu0 0.0
  %1841 = vmatprep.subr.mxu0 0.0
  %1842 = vmatpush2.msra.mxu0 0.0
  %1843 = vmatprep.subr.mxu0 0.0
  %1844 = vmatpush2.msra.mxu0 0.0
  %1845 = vmatprep.subr.mxu0 0.0
  %1846 = vmatpush2.msra.mxu0 0.0
  %1847 = vmatprep.subr.mxu0 0.0
  %1848 = vmatpush2.msra.mxu0 0.0
  %1849 = vmatprep.subr.mxu0 0.0
  %1850 = vmatpush2.msra.mxu0 0.0
  %1851 = vmatprep.subr.mxu0 0.0
  %1852 = vmatpush2.msra.mxu0 0.0
  %1853 = vmatprep.subr.mxu0 0.0
  %1854 = vmatpush2.msra.mxu0 0.0
  %1855 = vmatprep.subr.mxu0 0.0
  %1856 = vmatpush2.msra.mxu0 0.0
  %1857 = vmatprep.subr.mxu0 0.0
  %1858 = vmatpush2.msra.mxu0 0.0
  %1859 = vmatprep.subr.mxu0 0.0
  %1860 = vmatpush2.msra.mxu0 0.0
  %1861 = vmatprep.subr.mxu0 0.0
  %1862 = vmatpush2.msra.mxu0 0.0
  %1863 = vmatprep.subr.mxu0 0.0
  %1864 = vmatpush2.msra.mxu0 0.0
  %1865 = vmatprep.subr.mxu0 0.0
  %1866 = vmatpush2.msra.mxu0 0.0
  %1867 = vmatprep.subr.mxu0 0.0
  %1868 = vmatpush2.msra.mxu0 0.0
  %1869 = vmatprep.mubr.f32.mxu0 0.0
  %1870 = vmatmul.mubr.f32.gmra.mxu0 %v1803
  %v1871 = vpop.f32.mrf.mxu0
  %v1872 = vadd.f32 0.0, %v1871
  %v1873 = vpop.f32.mrf.mxu0
  %1874 = vdwg.mxu0
  %1875 = vrot.lane.b32.xlu0 %v1368, 112
  %v1876 = vpop.permute.xlu0 %1875
  %1877 = vrot.lane.b32.xlu0 %v1368, 80
  %v1878 = vpop.permute.xlu0 %1877
  %v1879 = vsel %vm203, %v1876, 0
  %v1881 = vsel %vm203, %v1878, 0
  %1883 = vmatprep.subr.mxu0 0.0
  %1884 = vmatpush1.xpose.msra.mxu0 0.0
  %1885 = vmatprep.subr.mxu0 0.0
  %1886 = vmatpush1.xpose.msra.mxu0 0.0
  %1887 = vmatprep.subr.mxu0 0.0
  %1888 = vmatpush1.xpose.msra.mxu0 0.0
  %1889 = vmatprep.subr.mxu0 0.0
  %1890 = vmatpush1.xpose.msra.mxu0 0.0
  %1891 = vmatprep.subr.mxu0 0.0
  %1892 = vmatpush1.xpose.msra.mxu0 0.0
  %1893 = vmatprep.subr.mxu0 0.0
  %1894 = vmatpush1.xpose.msra.mxu0 0.0
  %1895 = vmatprep.subr.mxu0 0.0
  %1896 = vmatpush1.xpose.msra.mxu0 0.0
  %1897 = vmatprep.subr.mxu0 0.0
  %1898 = vmatpush1.xpose.msra.mxu0 0.0
  %1899 = vmatprep.subr.mxu0 0.0
  %1900 = vmatpush1.xpose.msra.mxu0 0.0
  %1901 = vmatprep.subr.mxu0 0.0
  %1902 = vmatpush1.xpose.msra.mxu0 0.0
  %1903 = vmatprep.subr.mxu0 0.0
  %1904 = vmatpush1.xpose.msra.mxu0 0.0
  %1905 = vmatprep.subr.mxu0 0.0
  %1906 = vmatpush1.xpose.msra.mxu0 0.0
  %1907 = vmatprep.subr.mxu0 0.0
  %1908 = vmatpush1.xpose.msra.mxu0 0.0
  %1909 = vmatprep.subr.mxu0 0.0
  %1910 = vmatpush1.xpose.msra.mxu0 0.0
  %1911 = vmatprep.subr.mxu0 0.0
  %1912 = vmatpush1.xpose.msra.mxu0 0.0
  %1913 = vmatprep.subr.mxu0 0.0
  %1914 = vmatpush1.xpose.msra.mxu0 %v1881
  %1915 = vmatprep.subr.mxu0 0.0
  %1916 = vmatpush2.xpose.msra.mxu0 0.0
  %1917 = vmatprep.subr.mxu0 0.0
  %1918 = vmatpush2.xpose.msra.mxu0 0.0
  %1919 = vmatprep.subr.mxu0 0.0
  %1920 = vmatpush2.xpose.msra.mxu0 0.0
  %1921 = vmatprep.subr.mxu0 0.0
  %1922 = vmatpush2.xpose.msra.mxu0 0.0
  %1923 = vmatprep.subr.mxu0 0.0
  %1924 = vmatpush2.xpose.msra.mxu0 0.0
  %1925 = vmatprep.subr.mxu0 0.0
  %1926 = vmatpush2.xpose.msra.mxu0 0.0
  %1927 = vmatprep.subr.mxu0 0.0
  %1928 = vmatpush2.xpose.msra.mxu0 0.0
  %1929 = vmatprep.subr.mxu0 0.0
  %1930 = vmatpush2.xpose.msra.mxu0 0.0
  %1931 = vmatprep.subr.mxu0 0.0
  %1932 = vmatpush2.xpose.msra.mxu0 0.0
  %1933 = vmatprep.subr.mxu0 0.0
  %1934 = vmatpush2.xpose.msra.mxu0 0.0
  %1935 = vmatprep.subr.mxu0 0.0
  %1936 = vmatpush2.xpose.msra.mxu0 0.0
  %1937 = vmatprep.subr.mxu0 0.0
  %1938 = vmatpush2.xpose.msra.mxu0 0.0
  %1939 = vmatprep.subr.mxu0 0.0
  %1940 = vmatpush2.xpose.msra.mxu0 0.0
  %1941 = vmatprep.subr.mxu0 0.0
  %1942 = vmatpush2.xpose.msra.mxu0 0.0
  %1943 = vmatprep.subr.mxu0 0.0
  %1944 = vmatpush2.xpose.msra.mxu0 0.0
  %1945 = vmatprep.subr.mxu0 0.0
  %1946 = vmatpush2.xpose.msra.mxu0 0.0
  %1947 = vmatprep.mubr.f32.mxu0 0.0
  %1948 = vmatmul.mubr.f32.gmra.mxu0 %v1879
  %v1949 = vpop.f32.mrf.mxu0
  %v1950 = vadd.f32 0.0, %v1949
  %v1951 = vpop.f32.mrf.mxu0
  %1952 = vdwg.mxu0
  %v1953 = vmul.f32 %v1950, 0.25
  %v1954 = vadd.f32 %v1953, %v625
  %v1955 = vsel %vm284, %v1954, -inf
  %1956 = vmax.xlane.f32.xlu0 %v1955
  %v1957 = vpop.xlane.xlu0 %1956
  %v1958 = vsub.f32 %v1954, %v1957
  %v1959 = vmul.f32 %v1958, 1.442695
  %v1960 = vpow.pop %v1959
  %v1961 = vsel %vm284, %v1960, 0.0
  %1962 = vadd.xlane.f32.xlu0 %v1961
  %v1963 = vpop.xlane.xlu0 %1962
  %v1964 = vrcp.pop %v1963
  %v1965 = vmul.f32 %v1960, %v1964
  %1966 = vrot.lane.b32.xlu0 %v1368, 48
  %v1967 = vpop.permute.xlu0 %1966
  %v1970 = vsel %vm284, %v1965, 0
  %1972 = vmatprep.subr.mxu0 0.0
  %1973 = vmatpush1.msra.mxu0 0.0
  %1974 = vmatprep.subr.mxu0 0.0
  %1975 = vmatpush1.msra.mxu0 0.0
  %1976 = vmatprep.subr.mxu0 0.0
  %1977 = vmatpush1.msra.mxu0 0.0
  %1978 = vmatprep.subr.mxu0 0.0
  %1979 = vmatpush1.msra.mxu0 0.0
  %1980 = vmatprep.subr.mxu0 0.0
  %1981 = vmatpush1.msra.mxu0 0.0
  %1982 = vmatprep.subr.mxu0 0.0
  %1983 = vmatpush1.msra.mxu0 0.0
  %1984 = vmatprep.subr.mxu0 0.0
  %1985 = vmatpush1.msra.mxu0 0.0
  %1986 = vmatprep.subr.mxu0 0.0
  %1987 = vmatpush1.msra.mxu0 0.0
  %1988 = vmatprep.subr.mxu0 0.0
  %1989 = vmatpush1.msra.mxu0 0.0
  %1990 = vmatprep.subr.mxu0 0.0
  %1991 = vmatpush1.msra.mxu0 0.0
  %1992 = vmatprep.subr.mxu0 0.0
  %1993 = vmatpush1.msra.mxu0 0.0
  %1994 = vmatprep.subr.mxu0 0.0
  %1995 = vmatpush1.msra.mxu0 0.0
  %1996 = vmatprep.subr.mxu0 0.0
  %1997 = vmatpush1.msra.mxu0 0.0
  %1998 = vmatprep.subr.mxu0 0.0
  %1999 = vmatpush1.msra.mxu0 0.0
  %2000 = vmatprep.subr.mxu0 0.0
  %2001 = vmatpush1.msra.mxu0 0.0
  %2002 = vmatprep.subr.mxu0 0.0
  %2003 = vmatpush1.msra.mxu0 %v1967
  %2004 = vmatprep.subr.mxu0 0.0
  %2005 = vmatpush2.msra.mxu0 0.0
  %2006 = vmatprep.subr.mxu0 0.0
  %2007 = vmatpush2.msra.mxu0 0.0
  %2008 = vmatprep.subr.mxu0 0.0
  %2009 = vmatpush2.msra.mxu0 0.0
  %2010 = vmatprep.subr.mxu0 0.0
  %2011 = vmatpush2.msra.mxu0 0.0
  %2012 = vmatprep.subr.mxu0 0.0
  %2013 = vmatpush2.msra.mxu0 0.0
  %2014 = vmatprep.subr.mxu0 0.0
  %2015 = vmatpush2.msra.mxu0 0.0
  %2016 = vmatprep.subr.mxu0 0.0
  %2017 = vmatpush2.msra.mxu0 0.0
  %2018 = vmatprep.subr.mxu0 0.0
  %2019 = vmatpush2.msra.mxu0 0.0
  %2020 = vmatprep.subr.mxu0 0.0
  %2021 = vmatpush2.msra.mxu0 0.0
  %2022 = vmatprep.subr.mxu0 0.0
  %2023 = vmatpush2.msra.mxu0 0.0
  %2024 = vmatprep.subr.mxu0 0.0
  %2025 = vmatpush2.msra.mxu0 0.0
  %2026 = vmatprep.subr.mxu0 0.0
  %2027 = vmatpush2.msra.mxu0 0.0
  %2028 = vmatprep.subr.mxu0 0.0
  %2029 = vmatpush2.msra.mxu0 0.0
  %2030 = vmatprep.subr.mxu0 0.0
  %2031 = vmatpush2.msra.mxu0 0.0
  %2032 = vmatprep.subr.mxu0 0.0
  %2033 = vmatpush2.msra.mxu0 0.0
  %2034 = vmatprep.subr.mxu0 0.0
  %2035 = vmatpush2.msra.mxu0 0.0
  %2036 = vmatprep.mubr.f32.mxu0 0.0
  %2037 = vmatmul.mubr.f32.gmra.mxu0 %v1970
  %v2038 = vpop.f32.mrf.mxu0
  %v2039 = vadd.f32 0.0, %v2038
  %v2040 = vpop.f32.mrf.mxu0
  %2041 = vdwg.mxu0
  %2043 = vrot.lane.b32.xlu0 %v2039, 16
  %v2044 = vpop.permute.xlu0 %2043
  %v2046 = vsel %vm203, %v1872, %v2044
  %s2047 = scalar_lea.vmem %s6, 32
  %v2048 = vld [vmem:[%s2047] sm:$0xff]
  %v2049 = vld [vmem:[%s2047 + $0x8] sm:$0xff]
  %v2050 = vld [vmem:[%s2047 + $0x10] sm:$0xff]
  %v2051 = vld [vmem:[%s2047 + $0x18] sm:$0xff]
  %s2052 = scalar_lea.vmem %s7, 1
  %v2053 = vld [vmem:[%s2052] sm:$0x1]
  %v2055 = vlaneseq
  %v2056 = vshrl.u32 %v2055, 7
  %v2057 = vsub.s32 0, %v2056
  %v2058 = vrot.slane %v2053, %v2057
  %v2061 = vsel %vm63, %v1708, 0
  %v2064 = vsel %vm63, %v2046, 0
  %2066 = vmatprep.subr.mxu0 0.0
  %2067 = vmatpush1.msra.mxu0 0.0
  %2068 = vmatprep.subr.mxu0 0.0
  %2069 = vmatpush1.msra.mxu0 0.0
  %2070 = vmatprep.subr.mxu0 0.0
  %2071 = vmatpush1.msra.mxu0 0.0
  %2072 = vmatprep.subr.mxu0 0.0
  %2073 = vmatpush1.msra.mxu0 0.0
  %2074 = vmatprep.subr.mxu0 0.0
  %2075 = vmatpush1.msra.mxu0 0.0
  %2076 = vmatprep.subr.mxu0 0.0
  %2077 = vmatpush1.msra.mxu0 0.0
  %2078 = vmatprep.subr.mxu0 0.0
  %2079 = vmatpush1.msra.mxu0 0.0
  %2080 = vmatprep.subr.mxu0 0.0
  %2081 = vmatpush1.msra.mxu0 0.0
  %2082 = vmatprep.subr.mxu0 0.0
  %2083 = vmatpush1.msra.mxu0 0.0
  %2084 = vmatprep.subr.mxu0 0.0
  %2085 = vmatpush1.msra.mxu0 0.0
  %2086 = vmatprep.subr.mxu0 0.0
  %2087 = vmatpush1.msra.mxu0 0.0
  %2088 = vmatprep.subr.mxu0 0.0
  %2089 = vmatpush1.msra.mxu0 0.0
  %2090 = vmatprep.subr.mxu0 0.0
  %2091 = vmatpush1.msra.mxu0 %v2051
  %2092 = vmatprep.subr.mxu0 0.0
  %2093 = vmatpush1.msra.mxu0 %v2050
  %2094 = vmatprep.subr.mxu0 0.0
  %2095 = vmatpush1.msra.mxu0 %v2049
  %2096 = vmatprep.subr.mxu0 0.0
  %2097 = vmatpush1.msra.mxu0 %v2048
  %2098 = vmatprep.subr.mxu0 0.0
  %2099 = vmatpush2.msra.mxu0 0.0
  %2100 = vmatprep.subr.mxu0 0.0
  %2101 = vmatpush2.msra.mxu0 0.0
  %2102 = vmatprep.subr.mxu0 0.0
  %2103 = vmatpush2.msra.mxu0 0.0
  %2104 = vmatprep.subr.mxu0 0.0
  %2105 = vmatpush2.msra.mxu0 0.0
  %2106 = vmatprep.subr.mxu0 0.0
  %2107 = vmatpush2.msra.mxu0 0.0
  %2108 = vmatprep.subr.mxu0 0.0
  %2109 = vmatpush2.msra.mxu0 0.0
  %2110 = vmatprep.subr.mxu0 0.0
  %2111 = vmatpush2.msra.mxu0 0.0
  %2112 = vmatprep.subr.mxu0 0.0
  %2113 = vmatpush2.msra.mxu0 0.0
  %2114 = vmatprep.subr.mxu0 0.0
  %2115 = vmatpush2.msra.mxu0 0.0
  %2116 = vmatprep.subr.mxu0 0.0
  %2117 = vmatpush2.msra.mxu0 0.0
  %2118 = vmatprep.subr.mxu0 0.0
  %2119 = vmatpush2.msra.mxu0 0.0
  %2120 = vmatprep.subr.mxu0 0.0
  %2121 = vmatpush2.msra.mxu0 0.0
  %2122 = vmatprep.subr.mxu0 0.0
  %2123 = vmatpush2.msra.mxu0 0.0
  %2124 = vmatprep.subr.mxu0 0.0
  %2125 = vmatpush2.msra.mxu0 0.0
  %2126 = vmatprep.subr.mxu0 0.0
  %2127 = vmatpush2.msra.mxu0 0.0
  %2128 = vmatprep.subr.mxu0 0.0
  %2129 = vmatpush2.msra.mxu0 0.0
  %2130 = vmatprep.mubr.f32.mxu0 0.0
  %2131 = vmatmul.mubr.f32.gmra.mxu0 %v2061
  %v2132 = vpop.f32.mrf.mxu0
  %v2133 = vadd.f32 %v2058, %v2132
  %v2134 = vpop.f32.mrf.mxu0
  %2135 = vmatprep.mubr.f32.mxu0 0.0
  %2136 = vmatmul.mubr.f32.gmra.mxu0 %v2064
  %v2137 = vpop.f32.mrf.mxu0
  %v2138 = vadd.f32 %v2058, %v2137
  %v2139 = vpop.f32.mrf.mxu0
  %2140 = vdwg.mxu0
  %v2141 = vadd.f32 %v2133, %v1275
  %v2142 = vadd.f32 %v2138, %v1276
  %s2143 = scalar_lea.vmem %s8, 1
  %v2144 = vld [vmem:[%s2143] sm:$0x1]
  %s2145 = scalar_lea.vmem %s9, 1
  %v2146 = vld [vmem:[%s2145] sm:$0x1]
  %v2147 = vsel %vm63, %v2141, 0.0
  %2148 = vadd.xlane.f32.xlu0 %v2147
  %v2149 = vpop.xlane.xlu0 %2148
  %v2150 = vsel %vm63, %v2142, 0.0
  %2151 = vadd.xlane.f32.xlu0 %v2150
  %v2152 = vpop.xlane.xlu0 %2151
  %v2153 = vmul.f32 %v2149, %v70
  %v2154 = vmul.f32 %v2152, %v70
  %v2155 = vsub.f32 %v2141, %v2153
  %v2156 = vsub.f32 %v2142, %v2154
  %v2157 = vmul.f32 %v2155, %v2155
  %v2158 = vmul.f32 %v2156, %v2156
  %v2159 = vsel %vm63, %v2157, 0.0
  %2160 = vadd.xlane.f32.xlu0 %v2159
  %v2161 = vpop.xlane.xlu0 %2160
  %v2162 = vsel %vm63, %v2158, 0.0
  %2163 = vadd.xlane.f32.xlu0 %v2162
  %v2164 = vpop.xlane.xlu0 %2163
  %v2165 = vmul.f32 %v2161, %v70
  %v2166 = vmul.f32 %v2164, %v70
  %v2167 = vadd.f32 %v2165, 1e-05
  %v2168 = vadd.f32 %v2166, 1e-05
  %v2169 = vrsqrt.pop %v2167
  %v2170 = vrsqrt.pop %v2168
  %v2171 = vmul.f32 %v2155, %v2169
  %v2172 = vmul.f32 %v2156, %v2170
  %v2174 = vlaneseq
  %v2175 = vshrl.u32 %v2174, 7
  %v2176 = vsub.s32 0, %v2175
  %v2177 = vrot.slane %v2144, %v2176
  %v2179 = vmul.f32 %v2171, %v2177
  %v2180 = vmul.f32 %v2172, %v2177
  %v2182 = vlaneseq
  %v2183 = vshrl.u32 %v2182, 7
  %v2184 = vsub.s32 0, %v2183
  %v2185 = vrot.slane %v2146, %v2184
  %v2187 = vadd.f32 %v2179, %v2185
  %v2188 = vadd.f32 %v2180, %v2185
  %s2189 = scalar_lea.vmem %s10, 32
  %v2190 = vld [vmem:[%s2189] sm:$0xff]
  %v2191 = vld [vmem:[%s2189 + $0x8] sm:$0xff]
  %v2192 = vld [vmem:[%s2189 + $0x10] sm:$0xff]
  %v2193 = vld [vmem:[%s2189 + $0x18] sm:$0xff]
  %s2194 = scalar_lea.vmem %s11, 1
  %v2195 = vld [vmem:[%s2194] sm:$0x1]
  %v2197 = vlaneseq
  %v2198 = vshrl.u32 %v2197, 7
  %v2199 = vsub.s32 0, %v2198
  %v2200 = vrot.slane %v2195, %v2199
  %v2203 = vsel %vm63, %v2187, 0
  %v2206 = vsel %vm63, %v2188, 0
  %2208 = vmatprep.subr.mxu0 0.0
  %2209 = vmatpush1.msra.mxu0 0.0
  %2210 = vmatprep.subr.mxu0 0.0
  %2211 = vmatpush1.msra.mxu0 0.0
  %2212 = vmatprep.subr.mxu0 0.0
  %2213 = vmatpush1.msra.mxu0 0.0
  %2214 = vmatprep.subr.mxu0 0.0
  %2215 = vmatpush1.msra.mxu0 0.0
  %2216 = vmatprep.subr.mxu0 0.0
  %2217 = vmatpush1.msra.mxu0 0.0
  %2218 = vmatprep.subr.mxu0 0.0
  %2219 = vmatpush1.msra.mxu0 0.0
  %2220 = vmatprep.subr.mxu0 0.0
  %2221 = vmatpush1.msra.mxu0 0.0
  %2222 = vmatprep.subr.mxu0 0.0
  %2223 = vmatpush1.msra.mxu0 0.0
  %2224 = vmatprep.subr.mxu0 0.0
  %2225 = vmatpush1.msra.mxu0 0.0
  %2226 = vmatprep.subr.mxu0 0.0
  %2227 = vmatpush1.msra.mxu0 0.0
  %2228 = vmatprep.subr.mxu0 0.0
  %2229 = vmatpush1.msra.mxu0 0.0
  %2230 = vmatprep.subr.mxu0 0.0
  %2231 = vmatpush1.msra.mxu0 0.0
  %2232 = vmatprep.subr.mxu0 0.0
  %2233 = vmatpush1.msra.mxu0 %v2193
  %2234 = vmatprep.subr.mxu0 0.0
  %2235 = vmatpush1.msra.mxu0 %v2192
  %2236 = vmatprep.subr.mxu0 0.0
  %2237 = vmatpush1.msra.mxu0 %v2191
  %2238 = vmatprep.subr.mxu0 0.0
  %2239 = vmatpush1.msra.mxu0 %v2190
  %2240 = vmatprep.subr.mxu0 0.0
  %2241 = vmatpush2.msra.mxu0 0.0
  %2242 = vmatprep.subr.mxu0 0.0
  %2243 = vmatpush2.msra.mxu0 0.0
  %2244 = vmatprep.subr.mxu0 0.0
  %2245 = vmatpush2.msra.mxu0 0.0
  %2246 = vmatprep.subr.mxu0 0.0
  %2247 = vmatpush2.msra.mxu0 0.0
  %2248 = vmatprep.subr.mxu0 0.0
  %2249 = vmatpush2.msra.mxu0 0.0
  %2250 = vmatprep.subr.mxu0 0.0
  %2251 = vmatpush2.msra.mxu0 0.0
  %2252 = vmatprep.subr.mxu0 0.0
  %2253 = vmatpush2.msra.mxu0 0.0
  %2254 = vmatprep.subr.mxu0 0.0
  %2255 = vmatpush2.msra.mxu0 0.0
  %2256 = vmatprep.subr.mxu0 0.0
  %2257 = vmatpush2.msra.mxu0 0.0
  %2258 = vmatprep.subr.mxu0 0.0
  %2259 = vmatpush2.msra.mxu0 0.0
  %2260 = vmatprep.subr.mxu0 0.0
  %2261 = vmatpush2.msra.mxu0 0.0
  %2262 = vmatprep.subr.mxu0 0.0
  %2263 = vmatpush2.msra.mxu0 0.0
  %2264 = vmatprep.subr.mxu0 0.0
  %2265 = vmatpush2.msra.mxu0 0.0
  %2266 = vmatprep.subr.mxu0 0.0
  %2267 = vmatpush2.msra.mxu0 0.0
  %2268 = vmatprep.subr.mxu0 0.0
  %2269 = vmatpush2.msra.mxu0 0.0
  %2270 = vmatprep.subr.mxu0 0.0
  %2271 = vmatpush2.msra.mxu0 0.0
  %2272 = vmatprep.mubr.f32.mxu0 0.0
  %2273 = vmatmul.mubr.f32.gmra.mxu0 %v2203
  %v2274 = vpop.f32.mrf.mxu0
  %v2275 = vadd.f32 %v2200, %v2274
  %v2276 = vpop.f32.mrf.mxu0
  %2277 = vmatprep.mubr.f32.mxu0 0.0
  %2278 = vmatmul.mubr.f32.gmra.mxu0 %v2206
  %v2279 = vpop.f32.mrf.mxu0
  %v2280 = vadd.f32 %v2200, %v2279
  %v2281 = vpop.f32.mrf.mxu0
  %2282 = vdwg.mxu0
  %v2283 = vmul.f32 %v2275, 0.5
  %v2284 = vmul.f32 %v2280, 0.5
  %v2285 = vmul.f32 %v2275, 0.044715
  %v2286 = vmul.f32 %v2280, 0.044715
  %v2287 = vmul.f32 %v2285, %v2275
  %v2288 = vmul.f32 %v2286, %v2280
  %v2289 = vmul.f32 %v2287, %v2275
  %v2290 = vmul.f32 %v2288, %v2280
  %v2291 = vadd.f32 %v2275, %v2289
  %v2292 = vadd.f32 %v2280, %v2290
  %v2293 = vmul.f32 %v2291, 0.7978846
  %v2294 = vmul.f32 %v2292, 0.7978846
  %v2295 = vtanh.pop %v2293
  %v2296 = vtanh.pop %v2294
  %v2297 = vadd.f32 %v2295, 1.0
  %v2298 = vadd.f32 %v2296, 1.0
  %v2299 = vmul.f32 %v2283, %v2297
  %v2300 = vmul.f32 %v2284, %v2298
  %s2301 = scalar_lea.vmem %s12, 64
  %v2302 = vld [vmem:[%s2301] sm:$0xff]
  %v2303 = vld [vmem:[%s2301 + $0x8] sm:$0xff]
  %v2304 = vld [vmem:[%s2301 + $0x10] sm:$0xff]
  %v2305 = vld [vmem:[%s2301 + $0x18] sm:$0xff]
  %v2306 = vld [vmem:[%s2301 + $0x20] sm:$0xff]
  %v2307 = vld [vmem:[%s2301 + $0x28] sm:$0xff]
  %v2308 = vld [vmem:[%s2301 + $0x30] sm:$0xff]
  %v2309 = vld [vmem:[%s2301 + $0x38] sm:$0xff]
  %s2310 = scalar_lea.vmem %s13, 1
  %v2311 = vld [vmem:[%s2310] sm:$0x1]
  %v2313 = vlaneseq
  %v2314 = vshrl.u32 %v2313, 7
  %v2315 = vsub.s32 0, %v2314
  %v2316 = vrot.slane %v2311, %v2315
  %v2319 = vsel %vm1149, %v2299, 0
  %v2322 = vsel %vm1149, %v2300, 0
  %2324 = vmatprep.subr.mxu0 0.0
  %2325 = vmatpush1.msra.mxu0 0.0
  %2326 = vmatprep.subr.mxu0 0.0
  %2327 = vmatpush1.msra.mxu0 0.0
  %2328 = vmatprep.subr.mxu0 0.0
  %2329 = vmatpush1.msra.mxu0 0.0
  %2330 = vmatprep.subr.mxu0 0.0
  %2331 = vmatpush1.msra.mxu0 0.0
  %2332 = vmatprep.subr.mxu0 0.0
  %2333 = vmatpush1.msra.mxu0 0.0
  %2334 = vmatprep.subr.mxu0 0.0
  %2335 = vmatpush1.msra.mxu0 0.0
  %2336 = vmatprep.subr.mxu0 0.0
  %2337 = vmatpush1.msra.mxu0 0.0
  %2338 = vmatprep.subr.mxu0 0.0
  %2339 = vmatpush1.msra.mxu0 0.0
  %2340 = vmatprep.subr.mxu0 0.0
  %2341 = vmatpush1.msra.mxu0 %v2309
  %2342 = vmatprep.subr.mxu0 0.0
  %2343 = vmatpush1.msra.mxu0 %v2308
  %2344 = vmatprep.subr.mxu0 0.0
  %2345 = vmatpush1.msra.mxu0 %v2307
  %2346 = vmatprep.subr.mxu0 0.0
  %2347 = vmatpush1.msra.mxu0 %v2306
  %2348 = vmatprep.subr.mxu0 0.0
  %2349 = vmatpush1.msra.mxu0 %v2305
  %2350 = vmatprep.subr.mxu0 0.0
  %2351 = vmatpush1.msra.mxu0 %v2304
  %2352 = vmatprep.subr.mxu0 0.0
  %2353 = vmatpush1.msra.mxu0 %v2303
  %2354 = vmatprep.subr.mxu0 0.0
  %2355 = vmatpush1.msra.mxu0 %v2302
  %2356 = vmatprep.subr.mxu0 0.0
  %2357 = vmatpush2.msra.mxu0 0.0
  %2358 = vmatprep.subr.mxu0 0.0
  %2359 = vmatpush2.msra.mxu0 0.0
  %2360 = vmatprep.subr.mxu0 0.0
  %2361 = vmatpush2.msra.mxu0 0.0
  %2362 = vmatprep.subr.mxu0 0.0
  %2363 = vmatpush2.msra.mxu0 0.0
  %2364 = vmatprep.subr.mxu0 0.0
  %2365 = vmatpush2.msra.mxu0 0.0
  %2366 = vmatprep.subr.mxu0 0.0
  %2367 = vmatpush2.msra.mxu0 0.0
  %2368 = vmatprep.subr.mxu0 0.0
  %2369 = vmatpush2.msra.mxu0 0.0
  %2370 = vmatprep.subr.mxu0 0.0
  %2371 = vmatpush2.msra.mxu0 0.0
  %2372 = vmatprep.subr.mxu0 0.0
  %2373 = vmatpush2.msra.mxu0 0.0
  %2374 = vmatprep.subr.mxu0 0.0
  %2375 = vmatpush2.msra.mxu0 0.0
  %2376 = vmatprep.subr.mxu0 0.0
  %2377 = vmatpush2.msra.mxu0 0.0
  %2378 = vmatprep.subr.mxu0 0.0
  %2379 = vmatpush2.msra.mxu0 0.0
  %2380 = vmatprep.subr.mxu0 0.0
  %2381 = vmatpush2.msra.mxu0 0.0
  %2382 = vmatprep.subr.mxu0 0.0
  %2383 = vmatpush2.msra.mxu0 0.0
  %2384 = vmatprep.subr.mxu0 0.0
  %2385 = vmatpush2.msra.mxu0 0.0
  %2386 = vmatprep.subr.mxu0 0.0
  %2387 = vmatpush2.msra.mxu0 0.0
  %2388 = vmatprep.mubr.f32.mxu0 0.0
  %2389 = vmatmul.mubr.f32.gmra.mxu0 %v2319
  %v2390 = vpop.f32.mrf.mxu0
  %v2391 = vadd.f32 %v2316, %v2390
  %v2392 = vpop.f32.mrf.mxu0
  %2393 = vmatprep.mubr.f32.mxu0 0.0
  %2394 = vmatmul.mubr.f32.gmra.mxu0 %v2322
  %v2395 = vpop.f32.mrf.mxu0
  %v2396 = vadd.f32 %v2316, %v2395
  %v2397 = vpop.f32.mrf.mxu0
  %2398 = vdwg.mxu0
  %v2399 = vadd.f32 %v2391, %v2187
  %v2400 = vadd.f32 %v2396, %v2188
  %s2401 = scalar_lea.vmem %s14, 1
  %v2402 = vld [vmem:[%s2401] sm:$0x1]
  %s2403 = scalar_lea.vmem %s15, 1
  %v2404 = vld [vmem:[%s2403] sm:$0x1]
  %v2405 = vsel %vm63, %v2399, 0.0
  %2406 = vadd.xlane.f32.xlu0 %v2405
  %v2407 = vpop.xlane.xlu0 %2406
  %v2408 = vsel %vm63, %v2400, 0.0
  %2409 = vadd.xlane.f32.xlu0 %v2408
  %v2410 = vpop.xlane.xlu0 %2409
  %v2411 = vmul.f32 %v2407, %v70
  %v2412 = vmul.f32 %v2410, %v70
  %v2413 = vsub.f32 %v2399, %v2411
  %v2414 = vsub.f32 %v2400, %v2412
  %v2415 = vmul.f32 %v2413, %v2413
  %v2416 = vmul.f32 %v2414, %v2414
  %v2417 = vsel %vm63, %v2415, 0.0
  %2418 = vadd.xlane.f32.xlu0 %v2417
  %v2419 = vpop.xlane.xlu0 %2418
  %v2420 = vsel %vm63, %v2416, 0.0
  %2421 = vadd.xlane.f32.xlu0 %v2420
  %v2422 = vpop.xlane.xlu0 %2421
  %v2423 = vmul.f32 %v2419, %v70
  %v2424 = vmul.f32 %v2422, %v70
  %v2425 = vadd.f32 %v2423, 1e-05
  %v2426 = vadd.f32 %v2424, 1e-05
  %v2427 = vrsqrt.pop %v2425
  %v2428 = vrsqrt.pop %v2426
  %v2429 = vmul.f32 %v2413, %v2427
  %v2430 = vmul.f32 %v2414, %v2428
  %v2432 = vlaneseq
  %v2433 = vshrl.u32 %v2432, 7
  %v2434 = vsub.s32 0, %v2433
  %v2435 = vrot.slane %v2402, %v2434
  %v2437 = vmul.f32 %v2429, %v2435
  %v2438 = vmul.f32 %v2430, %v2435
  %v2440 = vlaneseq
  %v2441 = vshrl.u32 %v2440, 7
  %v2442 = vsub.s32 0, %v2441
  %v2443 = vrot.slane %v2404, %v2442
  %v2445 = vadd.f32 %v2437, %v2443
  %v2446 = vadd.f32 %v2438, %v2443
  %v2447 = vld [vmem:[%s16] sm:$0xff]
  %v2448 = vld [vmem:[%s16 + $0x8] sm:$0xff]
  %v2449 = vld [vmem:[%s16 + $0x10] sm:$0xff]
  %v2450 = vld [vmem:[%s16 + $0x18] sm:$0xff]
  %v2451 = vld [vmem:[%s17] sm:$0x1]
  %v2453 = vlaneseq
  %v2454 = vshrl.u32 %v2453, 7
  %v2455 = vsub.s32 0, %v2454
  %v2456 = vrot.slane %v2451, %v2455
  %v2459 = vsel %vm63, %v2445, 0
  %v2462 = vsel %vm63, %v2446, 0
  %2464 = vmatprep.subr.mxu0 0.0
  %2465 = vmatpush1.msra.mxu0 0.0
  %2466 = vmatprep.subr.mxu0 0.0
  %2467 = vmatpush1.msra.mxu0 0.0
  %2468 = vmatprep.subr.mxu0 0.0
  %2469 = vmatpush1.msra.mxu0 0.0
  %2470 = vmatprep.subr.mxu0 0.0
  %2471 = vmatpush1.msra.mxu0 0.0
  %2472 = vmatprep.subr.mxu0 0.0
  %2473 = vmatpush1.msra.mxu0 0.0
  %2474 = vmatprep.subr.mxu0 0.0
  %2475 = vmatpush1.msra.mxu0 0.0
  %2476 = vmatprep.subr.mxu0 0.0
  %2477 = vmatpush1.msra.mxu0 0.0
  %2478 = vmatprep.subr.mxu0 0.0
  %2479 = vmatpush1.msra.mxu0 0.0
  %2480 = vmatprep.subr.mxu0 0.0
  %2481 = vmatpush1.msra.mxu0 0.0
  %2482 = vmatprep.subr.mxu0 0.0
  %2483 = vmatpush1.msra.mxu0 0.0
  %2484 = vmatprep.subr.mxu0 0.0
  %2485 = vmatpush1.msra.mxu0 0.0
  %2486 = vmatprep.subr.mxu0 0.0
  %2487 = vmatpush1.msra.mxu0 0.0
  %2488 = vmatprep.subr.mxu0 0.0
  %2489 = vmatpush1.msra.mxu0 %v2450
  %2490 = vmatprep.subr.mxu0 0.0
  %2491 = vmatpush1.msra.mxu0 %v2449
  %2492 = vmatprep.subr.mxu0 0.0
  %2493 = vmatpush1.msra.mxu0 %v2448
  %2494 = vmatprep.subr.mxu0 0.0
  %2495 = vmatpush1.msra.mxu0 %v2447
  %2496 = vmatprep.subr.mxu0 0.0
  %2497 = vmatpush2.msra.mxu0 0.0
  %2498 = vmatprep.subr.mxu0 0.0
  %2499 = vmatpush2.msra.mxu0 0.0
  %2500 = vmatprep.subr.mxu0 0.0
  %2501 = vmatpush2.msra.mxu0 0.0
  %2502 = vmatprep.subr.mxu0 0.0
  %2503 = vmatpush2.msra.mxu0 0.0
  %2504 = vmatprep.subr.mxu0 0.0
  %2505 = vmatpush2.msra.mxu0 0.0
  %2506 = vmatprep.subr.mxu0 0.0
  %2507 = vmatpush2.msra.mxu0 0.0
  %2508 = vmatprep.subr.mxu0 0.0
  %2509 = vmatpush2.msra.mxu0 0.0
  %2510 = vmatprep.subr.mxu0 0.0
  %2511 = vmatpush2.msra.mxu0 0.0
  %2512 = vmatprep.subr.mxu0 0.0
  %2513 = vmatpush2.msra.mxu0 0.0
  %2514 = vmatprep.subr.mxu0 0.0
  %2515 = vmatpush2.msra.mxu0 0.0
  %2516 = vmatprep.subr.mxu0 0.0
  %2517 = vmatpush2.msra.mxu0 0.0
  %2518 = vmatprep.subr.mxu0 0.0
  %2519 = vmatpush2.msra.mxu0 0.0
  %2520 = vmatprep.subr.mxu0 0.0
  %2521 = vmatpush2.msra.mxu0 0.0
  %2522 = vmatprep.subr.mxu0 0.0
  %2523 = vmatpush2.msra.mxu0 0.0
  %2524 = vmatprep.subr.mxu0 0.0
  %2525 = vmatpush2.msra.mxu0 0.0
  %2526 = vmatprep.subr.mxu0 0.0
  %2527 = vmatpush2.msra.mxu0 0.0
  %2528 = vmatprep.mubr.f32.mxu0 0.0
  %2529 = vmatmul.mubr.f32.gmra.mxu0 %v2459
  %v2530 = vpop.f32.mrf.mxu0
  %v2531 = vadd.f32 %v2456, %v2530
  %v2532 = vpop.f32.mrf.mxu0
  %2533 = vmatprep.mubr.f32.mxu0 0.0
  %2534 = vmatmul.mubr.f32.gmra.mxu0 %v2462
  %v2535 = vpop.f32.mrf.mxu0
  %v2536 = vadd.f32 %v2456, %v2535
  %v2537 = vpop.f32.mrf.mxu0
  %2538 = vdwg.mxu0
  %2539 = vst [vmem:[%s18] sm:$0xff] %v2531
  %2540 = vst [vmem:[%s18 + $0x8] sm:$0xff] %v2536
  // Predicated region
  $region74: #{x_disaster_ie_forward.1} parent=0 // pred_check
    _
  $region75: #{x_disaster_ie_forward.1} parent=0 // pred_check_branch
    %2542 = sbr.rel (0) target = $region77
  $region76: #{x_disaster_ie_forward.1} parent=0 // pred_region
    _
  $region77: #{x_disaster_ie_forward.1} parent=0 // pred_fallthru
    _
  // Predicated region
  $region78: #{x_disaster_ie_forward.1} parent=0 // pred_check
    _
  $region79: #{x_disaster_ie_forward.1} parent=0 // pred_check_branch
    %2544 = sbr.rel (0) target = $region81
  $region80: #{x_disaster_ie_forward.1} parent=0 // pred_region
    _
  $region81: #{x_disaster_ie_forward.1} parent=0 // pred_fallthru
    _

</llo_original>
